<compile_context>
chip_gen: v7x
topology: tpu7x:2x2x1
jax: 0.10.0
libtpu: 0.0.40
codegen_flags: <defaults>
</compile_context>

<pallas_src>
import math

import jax
import jax.numpy as jnp
from jax import lax
from jax.experimental import pallas as pl
from jax.experimental.pallas import tpu as pltpu

MXU_DTYPE = jnp.bfloat16        # MXU-native operand dtype; accumulation is f32
CIN_PAD = 128                   # conv halo scratch channel padding (lane-dense)
_VMEM_LIMIT = 32 * 1024 * 1024


# ----------------------------------------------------------------------------
# In-kernel helpers
# ----------------------------------------------------------------------------
def _conv3x3_im2col(pad_ref, w_ref, b_ref, H, W, relu):
    """3x3 stride-1 conv as ONE big-K im2col matmul.

    pad_ref : (H+2, W+2, CIN_PAD) zero-padded input (channels >= real Cin are 0)
    w_ref   : (9*CIN_PAD, Cout) weight, row order (dy, dx, cin)
    b_ref   : (1, Cout)
    Returns (H*W, Cout) float32.
    """
    CP = pad_ref.shape[2]
    pieces = [None] * 9
    for dx in range(3):
        # flatten rows so the 3 dy taps are sublane-aligned row windows
        xf = pad_ref[:, dx:dx + W, :].reshape((H + 2) * W, CP).astype(MXU_DTYPE)
        for dy in range(3):
            pieces[dy * 3 + dx] = xf[dy * W:dy * W + H * W, :]
    patch = jnp.concatenate(pieces, axis=-1)                     # (HW, 9*CP)
    acc = jnp.dot(patch, w_ref[...].astype(MXU_DTYPE),
                  preferred_element_type=jnp.float32)
    acc = acc + b_ref[...]
    if relu:
        acc = jnp.maximum(acc, 0.0)
    return acc


# ----------------------------------------------------------------------------
# Pallas kernels
# ----------------------------------------------------------------------------
def _conv_block_kernel(x_ref, w1_ref, b1_ref, w2_ref, b2_ref, o_ref, pad_ref):
    # x_ref/o_ref: (1, H, W, C)   w*: (9*CIN_PAD, C) bf16   b*: (1, C) f32
    # pad_ref    : (H+2, W+2, CIN_PAD) f32 — single halo scratch reused by both convs
    H, W, C = o_ref.shape[1], o_ref.shape[2], o_ref.shape[3]

    # One zero-fill per grid step: keeps borders and padded channels zero
    # (uninitialized VMEM could hold NaNs; 0-weight rows would not kill them),
    # and is safe under megacore "parallel" grid splitting.
    pad_ref[...] = jnp.zeros_like(pad_ref)

    pad_ref[1:H + 1, 1:W + 1, 0:C] = x_ref[0]
    h1 = _conv3x3_im2col(pad_ref, w1_ref, b1_ref, H, W, relu=True)
    pad_ref[1:H + 1, 1:W + 1, 0:C] = h1.reshape(H, W, C)
    h2 = _conv3x3_im2col(pad_ref, w2_ref, b2_ref, H, W, relu=True)
    o_ref[0] = h2.reshape(H, W, C)


def _spade_kernel(segp_ref, x_ref, dup_ref, wsh_ref, bsh_ref, wgb_ref, bgb_ref,
                  o_ref, pad_ref):
    # segp_ref: (1, H+2, W+2, 1) int32 (border = large negative sentinel)
    # x_ref   : (1, H, W, C)             dup_ref: (C, P*C) channel-duplication matrix
    # wsh_ref : (9*n_class, P*nh) bf16   bsh_ref: (1, P*nh)
    # wgb_ref : (9*CIN_PAD, 2*P*C) bf16  bgb_ref: (1, 2*P*C)   [gammas | betas]
    # o_ref   : (1, H, W, P*C)           pad_ref: (H+2, W+2, CIN_PAD) f32 scratch
    H, W, C = x_ref.shape[1], x_ref.shape[2], x_ref.shape[3]
    PC = o_ref.shape[3]
    PNH = wsh_ref.shape[1]
    n_class = wsh_ref.shape[0] // 9
    HW = H * W

    pad_ref[...] = jnp.zeros_like(pad_ref)

    # --- shared 3x3 conv on the one-hot segmap; one-hot + im2col fused on the
    #     VPU: patch[h, w, t*nc + c] = 1 iff seg at tap t equals class c.
    segp = segp_ref[0]                                            # (H+2, W+2, 1)
    col = lax.broadcasted_iota(jnp.int32, (H, W, 9 * n_class), 2)
    patch = jnp.zeros((H, W, 9 * n_class), jnp.float32)
    for dy in range(3):
        for dx in range(3):
            t = dy * 3 + dx
            tap = segp[dy:dy + H, dx:dx + W, :]                   # (H, W, 1)
            patch = patch + (col == tap + t * n_class).astype(jnp.float32)
    patch = patch.reshape(HW, 9 * n_class)
    actv = jnp.dot(patch.astype(MXU_DTYPE), wsh_ref[...].astype(MXU_DTYPE),
                   preferred_element_type=jnp.float32) + bsh_ref[...]
    actv = jnp.maximum(actv, 0.0)                                 # (HW, P*nh)

    # --- gamma/beta heads of all fused SPADEs in ONE lane-dense conv
    pad_ref[1:H + 1, 1:W + 1, 0:PNH] = actv.reshape(H, W, PNH)
    gb = _conv3x3_im2col(pad_ref, wgb_ref, bgb_ref, H, W, relu=False)
    gamma = gb[:, :PC]
    beta = gb[:, PC:]

    # --- InstanceNorm2d(affine=False, eps=1e-5) in f32 + modulation epilogue
    x = x_ref[0].reshape(HW, C).astype(jnp.float32)
    if PC != C:
        # duplicate channels per head (tiny exact f32 matmul, keeps stores dense)
        x = jnp.dot(x, dup_ref[...], preferred_element_type=jnp.float32)
    mean = jnp.mean(x, axis=0, keepdims=True)
    xc = x - mean
    var = jnp.mean(xc * xc, axis=0, keepdims=True)
    normed = xc * lax.rsqrt(var + 1e-5)
    o_ref[0] = (normed * (1.0 + gamma) + beta).reshape(H, W, PC)


def _memory_kernel(content_ref, segp1_ref, colcls_ref, member_ref, key_ref,
                   val_ref, out_ref):
    # content_ref: (1, T, C)        segp1_ref: (1, T, 1) int32 (= seg + 1)
    # colcls_ref : (1, NNP) int32   member_ref: (NNP, NNP) block indicator
    # key_ref    : (C, NNP) bf16    val_ref:    (NNP, C) bf16   out_ref: (1, T, C)
    content = content_ref[0].astype(jnp.float32)                  # (T, C)
    nrm = jnp.sqrt(jnp.sum(content * content, axis=-1, keepdims=True))
    normalized = content / jnp.maximum(nrm, 1e-12)                # F.normalize

    # all-class logits in ONE matmul; per-pixel class mask via VPU compare
    logits = jnp.dot(normalized.astype(MXU_DTYPE), key_ref[...],
                     preferred_element_type=jnp.float32)          # (T, NNP)
    mask = (segp1_ref[0] == colcls_ref[...]).astype(jnp.float32)  # (T, NNP)
    masked = logits * mask

    # per-class (block of n cols) softmax: a per-row global shift cancels per block
    m = jnp.max(masked, axis=-1, keepdims=True)
    e = jnp.exp(masked - m)
    denom = jnp.dot(e, member_ref[...], preferred_element_type=jnp.float32)
    p = e * pl.reciprocal(denom, approx=True)

    # value read-out; the reference's sum over classes is folded into this matmul
    # (non-matching classes read the uniform mean of their value rows — exactly
    #  the PyTorch behaviour; padded columns hit zero value rows).
    out_ref[0] = jnp.dot(p.astype(MXU_DTYPE), val_ref[...],
                         preferred_element_type=jnp.float32)


# ----------------------------------------------------------------------------
# Pallas wrappers
# ----------------------------------------------------------------------------
def conv_block(x_nhwc, params):
    # self.Conv = [SN(Conv3x3), ReLU, SN(Conv3x3), ReLU] fused in one kernel.
    B, H, W, C = x_nhwc.shape
    assert C <= CIN_PAD
    return pl.pallas_call(
        _conv_block_kernel,
        out_shape=jax.ShapeDtypeStruct((B, H, W, C), jnp.float32),
        grid=(B,),
        in_specs=[
            pl.BlockSpec((1, H, W, C), lambda b: (b, 0, 0, 0)),
            pl.BlockSpec((9 * CIN_PAD, C), lambda b: (0, 0)),
            pl.BlockSpec((1, C), lambda b: (0, 0)),
            pl.BlockSpec((9 * CIN_PAD, C), lambda b: (0, 0)),
            pl.BlockSpec((1, C), lambda b: (0, 0)),
        ],
        out_specs=pl.BlockSpec((1, H, W, C), lambda b: (b, 0, 0, 0)),
        scratch_shapes=[pltpu.VMEM((H + 2, W + 2, CIN_PAD), jnp.float32)],
        compiler_params=pltpu.CompilerParams(
            dimension_semantics=("parallel",),
            vmem_limit_bytes=_VMEM_LIMIT),
    )(x_nhwc, params["conv1_w2d"], params["conv1_b"],
      params["conv2_w2d"], params["conv2_b"])


def nearest_resize(seg, H, W):
    # PyTorch F.interpolate(mode='nearest') index rule: floor(i * in / out).
    B, Hs, Ws = seg.shape
    if (Hs, Ws) == (H, W):
        return seg
    ri = (jnp.arange(H) * Hs // H).astype(jnp.int32)
    ci = (jnp.arange(W) * Ws // W).astype(jnp.int32)
    return seg[:, ri[:, None], ci[None, :]]


def spade_apply_multi(x_nhwc, seg, sp_list):
    """P fused SPADE heads sharing one content x and one seg map.

    Returns (B, H, W, P*C); head p's modulated output is channels [p*C:(p+1)*C].
    """
    B, H, W, C = x_nhwc.shape
    P = len(sp_list)
    n_class = sp_list[0]["n_class"]
    nh = sp_list[0]["w_shared"].shape[-1]
    PNH, PC = P * nh, P * C
    assert PNH <= CIN_PAD and C <= CIN_PAD

    # fused, lane-dense weights (tiny host-side prep)
    wsh2d = jnp.concatenate([sp["w_shared"] for sp in sp_list],
                            axis=-1).reshape(9 * n_class, PNH).astype(MXU_DTYPE)
    bsh = jnp.concatenate([sp["b_shared"] for sp in sp_list],
                          axis=-1).reshape(1, PNH).astype(jnp.float32)
    wgb = jnp.zeros((3, 3, CIN_PAD, 2 * PC), jnp.float32)
    for i, sp in enumerate(sp_list):   # block-diagonal: head i hidden -> head i gamma/beta
        wgb = wgb.at[:, :, i * nh:(i + 1) * nh, i * C:(i + 1) * C].set(sp["w_gamma"])
        wgb = wgb.at[:, :, i * nh:(i + 1) * nh,
                     PC + i * C:PC + (i + 1) * C].set(sp["w_beta"])
    wgb2d = wgb.reshape(9 * CIN_PAD, 2 * PC).astype(MXU_DTYPE)
    bgb = jnp.concatenate([sp["b_gamma"] for sp in sp_list]
                          + [sp["b_beta"] for sp in sp_list],
                          axis=-1).reshape(1, 2 * PC).astype(jnp.float32)
    dup = jnp.tile(jnp.eye(C, dtype=jnp.float32), (1, P))          # (C, P*C)

    seg_r = nearest_resize(seg, H, W).astype(jnp.int32)
    segp = jnp.pad(seg_r, ((0, 0), (1, 1), (1, 1)),
                   constant_values=-(2 ** 20))[..., None]           # sentinel border

    return pl.pallas_call(
        _spade_kernel,
        out_shape=jax.ShapeDtypeStruct((B, H, W, PC), jnp.float32),
        grid=(B,),
        in_specs=[
            pl.BlockSpec((1, H + 2, W + 2, 1), lambda b: (b, 0, 0, 0)),
            pl.BlockSpec((1, H, W, C), lambda b: (b, 0, 0, 0)),
            pl.BlockSpec((C, PC), lambda b: (0, 0)),
            pl.BlockSpec((9 * n_class, PNH), lambda b: (0, 0)),
            pl.BlockSpec((1, PNH), lambda b: (0, 0)),
            pl.BlockSpec((9 * CIN_PAD, 2 * PC), lambda b: (0, 0)),
            pl.BlockSpec((1, 2 * PC), lambda b: (0, 0)),
        ],
        out_specs=pl.BlockSpec((1, H, W, PC), lambda b: (b, 0, 0, 0)),
        scratch_shapes=[pltpu.VMEM((H + 2, W + 2, CIN_PAD), jnp.float32)],
        compiler_params=pltpu.CompilerParams(
            dimension_semantics=("parallel",),
            vmem_limit_bytes=_VMEM_LIMIT),
    )(segp, x_nhwc, dup, wsh2d, bsh, wgb2d, bgb)


def _pick_strip(hw, batch):
    limit = min(hw, 2048)
    best = None
    for d in range(limit, 7, -1):
        if hw % d == 0 and d % 8 == 0:
            if best is None:
                best = d
            if batch * (hw // d) >= 2:     # keep both v7x TensorCores busy
                return d
    return best if best is not None else hw


def memory_forward(content_nhwc, seg, mem_key, mem_value, n_class):
    B, H, W, C = content_nhwc.shape
    nc1 = n_class + 1
    n = mem_key.shape[-1]
    hw = H * W
    nn_real = nc1 * n
    NNP = max(128, ((nn_real + 127) // 128) * 128)    # lane-dense padding

    seg_r = nearest_resize(seg, H, W)
    segp1 = (seg_r.reshape(B, hw, 1) + 1).astype(jnp.int32)
    cflat = content_nhwc.reshape(B, hw, C)

    # F.normalize(key, p=2, dim=1) over channels; classes stacked along lanes
    knorm = jnp.sqrt(jnp.sum(mem_key * mem_key, axis=1, keepdims=True))
    key_n = mem_key / jnp.maximum(knorm, 1e-12)                    # (nc1, C, n)
    key_st = jnp.transpose(key_n, (1, 0, 2)).reshape(C, nn_real)
    key_st = jnp.pad(key_st, ((0, 0), (0, NNP - nn_real))).astype(MXU_DTYPE)
    val_st = jnp.pad(mem_value.reshape(nn_real, C),
                     ((0, NNP - nn_real), (0, 0))).astype(MXU_DTYPE)

    cols = jnp.arange(NNP)
    col_cls = jnp.where(cols < nn_real, cols // n, -1).astype(jnp.int32)
    colcls2d = col_cls.reshape(1, NNP)
    member = (col_cls[:, None] == col_cls[None, :]).astype(jnp.float32)

    th = _pick_strip(hw, B)
    grid = (B, hw // th)
    out = pl.pallas_call(
        _memory_kernel,
        out_shape=jax.ShapeDtypeStruct((B, hw, C), jnp.float32),
        grid=grid,
        in_specs=[
            pl.BlockSpec((1, th, C), lambda b, s: (b, s, 0)),
            pl.BlockSpec((1, th, 1), lambda b, s: (b, s, 0)),
            pl.BlockSpec((1, NNP), lambda b, s: (0, 0)),
            pl.BlockSpec((NNP, NNP), lambda b, s: (0, 0)),
            pl.BlockSpec((C, NNP), lambda b, s: (0, 0)),
            pl.BlockSpec((NNP, C), lambda b, s: (0, 0)),
        ],
        out_specs=pl.BlockSpec((1, th, C), lambda b, s: (b, s, 0)),
        compiler_params=pltpu.CompilerParams(
            dimension_semantics=("parallel", "parallel"),
            vmem_limit_bytes=_VMEM_LIMIT),
    )(cflat, segp1, colcls2d, member, key_st, val_st)
    return out.reshape(B, H, W, C)


def nchw_to_nhwc(x):
    return jnp.transpose(x, (0, 2, 3, 1))


def nhwc_to_nchw(x):
    return jnp.transpose(x, (0, 3, 1, 2))


# ----------------------------------------------------------------------------
# Class_wise_Separator.forward
# ----------------------------------------------------------------------------
def class_wise_separator_forward(features, seg, params, converts=None):
    contents, styles = {}, {}
    keys = list(features.keys())
    ch = params["ch"]

    # Every feature map goes through the same shared Conv block: run them all
    # in ONE pallas_call by stacking on the batch axis (amortizes launch cost).
    xs = {k: nchw_to_nhwc(features[k]).astype(jnp.float32) for k in keys}
    B0 = xs[keys[0]].shape[0]
    conv_all = conv_block(jnp.concatenate([xs[k] for k in keys], axis=0), params)
    conv_map = {k: conv_all[i * B0:(i + 1) * B0] for i, k in enumerate(keys)}

    source = None
    for key in keys:
        x = xs[key]
        c = conv_map[key]
        contents[key] = c
        if "2" in key:
            source, target = key.split("2")
            # both SPADEs share content c and seg -> single fused dual-head kernel
            both = spade_apply_multi(c, seg[source],
                                     [params["spade"][target],
                                      params["spade"][source]])
            styles[key] = x - both[..., :ch]           # wc[target](c, seg)
            contents[source] = both[..., ch:]          # wc[source](c, seg)
            styles[source] = memory_forward(c, seg[source], params["mem_key"],
                                            params["mem"][target],
                                            params["n_class"])
        else:
            styles[key] = x - spade_apply_multi(c, seg[key],
                                                [params["spade"][key]])
    if converts is not None:
        for cv in converts:
            source, target = cv.split("2")
            styles[cv] = memory_forward(contents[source], seg[source],
                                        params["mem_key"], params["mem"][source],
                                        params["n_class"])
            contents[cv] = spade_apply_multi(contents[source], seg[source],
                                             [params["spade"][target]])
        for key in keys:
            contents[key] = spade_apply_multi(contents[key], seg[source],
                                              [params["spade"][source]])
    contents = {k: nhwc_to_nchw(v) for k, v in contents.items()}
    styles = {k: nhwc_to_nchw(v) for k, v in styles.items()}
    return contents, styles


# ----------------------------------------------------------------------------
# Deterministic parameter initialization (synthetic; no checkpoint loading)
# ----------------------------------------------------------------------------
def _spectral_normalize(w_hwio):
    O = w_hwio.shape[-1]
    w2d = jnp.transpose(w_hwio, (3, 2, 0, 1)).reshape(O, -1)
    sigma = jnp.linalg.norm(w2d, ord=2)
    return w_hwio / sigma


def _prep_conv_w2d(w_hwio):
    # (3,3,Cin,Cout) -> zero-pad Cin to CIN_PAD -> (9*CIN_PAD, Cout), bf16
    kh, kw, cin, cout = w_hwio.shape
    wp = jnp.zeros((kh, kw, CIN_PAD, cout), w_hwio.dtype)
    wp = wp.at[:, :, :cin, :].set(w_hwio)
    return wp.reshape(kh * kw * CIN_PAD, cout).astype(MXU_DTYPE)


def _conv_init(key, cin, cout):
    kw_, kb = jax.random.split(key)
    fan_in = cin * 9
    bound = 1.0 / math.sqrt(fan_in)
    w = jax.random.uniform(kw_, (3, 3, cin, cout), jnp.float32, -bound, bound)
    b = jax.random.uniform(kb, (cout,), jnp.float32, -bound, bound)
    return w, b


def _xavier_normal(key, shape):
    fan_in = shape[1] * int(math.prod(shape[2:]))
    fan_out = shape[0] * int(math.prod(shape[2:]))
    std = math.sqrt(2.0 / (fan_in + fan_out))
    return std * jax.random.normal(key, shape, jnp.float32)


def init_params(rng, source, target, n_class, ch=64, n=20, nhidden=64):
    keys = jax.random.split(rng, 8)
    conv1_w, conv1_b = _conv_init(keys[0], ch, ch)
    conv2_w, conv2_b = _conv_init(keys[1], ch, ch)
    params = {
        "n_class": n_class, "ch": ch,
        "conv1_w2d": _prep_conv_w2d(_spectral_normalize(conv1_w)),
        "conv1_b": conv1_b.reshape(1, ch),
        "conv2_w2d": _prep_conv_w2d(_spectral_normalize(conv2_w)),
        "conv2_b": conv2_b.reshape(1, ch),
        "mem_key": _xavier_normal(keys[2], (n_class + 1, ch, n)),
        "mem": {
            source: _xavier_normal(keys[3], (n_class + 1, n, ch)),
            target: _xavier_normal(keys[4], (n_class + 1, n, ch)),
        },
        "spade": {},
    }
    for i, dset in enumerate([source, target]):
        ks, kg, kb = jax.random.split(keys[5 + i], 3)
        ws, bs = _conv_init(ks, n_class, nhidden)
        wg, bg = _conv_init(kg, nhidden, ch)
        wb, bb = _conv_init(kb, nhidden, ch)
        params["spade"][dset] = {
            "n_class": n_class,
            "w_shared": ws, "b_shared": bs,
            "w_gamma": wg, "b_gamma": bg,
            "w_beta": wb, "b_beta": bb,
        }
    return params


# ----------------------------------------------------------------------------
if __name__ == "__main__":
    n_class, ch, B, H, W = 4, 64, 2, 16, 16
    source_name, target_name = "S", "T"

    root = jax.random.PRNGKey(0)
    k_par, k_x, k_x2, k_seg = jax.random.split(root, 4)
    params = init_params(k_par, source_name, target_name, n_class, ch=ch)

    x = jax.random.normal(k_x, (B, ch, H, W), jnp.float32)
    x_plain = jax.random.normal(k_x2, (B, ch, H, W), jnp.float32)
    seg = jax.random.randint(k_seg, (B, H, W), 0, n_class, dtype=jnp.int32)

    # "S" exercises the single-SPADE path; "S2T" exercises the fused dual-SPADE
    # and the memory-network kernels (all share one batched Conv pallas_call).
    features = {"S": x_plain, "S2T": x}
    segs = {"S": seg}

    contents, styles = class_wise_separator_forward(features, segs, params,
                                                    converts=None)
    jax.block_until_ready((contents, styles))

    for d in (contents, styles):
        for k, v in d.items():
            assert v.shape == (B, ch, H, W), (k, v.shape)
            assert bool(jnp.all(jnp.isfinite(v))), k
    print("KERNEL_OK")
</pallas_src>

<mosaic_0001>
module attributes {stable_mosaic.version = 11 : i64} {
  func.func @_conv_block_kernel(%arg0: i32, %arg1: memref<1x16x16x64xf32, #tpu.memory_space<vmem>>, %arg2: memref<1152x64xbf16, #tpu.memory_space<vmem>>, %arg3: memref<1x64xf32, #tpu.memory_space<vmem>>, %arg4: memref<1152x64xbf16, #tpu.memory_space<vmem>>, %arg5: memref<1x64xf32, #tpu.memory_space<vmem>>, %arg6: memref<1x16x16x64xf32, #tpu.memory_space<vmem>>, %arg7: memref<18x18x128xf32, #tpu.memory_space<vmem>>) attributes {dimension_semantics = [#tpu.dimension_semantics<parallel>], iteration_bounds = array<i64: 4>, scalar_prefetch = 0 : i64, scratch_operands = 1 : i64, tpu.core_type = #tpu.core_type<tc>, window_params = [{transform_indices = @transform_0, window_bounds = array<i64: 1, 16, 16, 64>}, {pipeline_mode = #tpu.pipeline_mode<synchronous>, transform_indices = @transform_1, window_bounds = array<i64: 1152, 64>}, {pipeline_mode = #tpu.pipeline_mode<synchronous>, transform_indices = @transform_2, window_bounds = array<i64: 1, 64>}, {pipeline_mode = #tpu.pipeline_mode<synchronous>, transform_indices = @transform_3, window_bounds = array<i64: 1152, 64>}, {pipeline_mode = #tpu.pipeline_mode<synchronous>, transform_indices = @transform_4, window_bounds = array<i64: 1, 64>}, {transform_indices = @transform_5, window_bounds = array<i64: 1, 16, 16, 64>}]} {
    %cst = arith.constant 0.000000e+00 : f32
    %0 = vector.broadcast %cst : f32 to vector<18x18x128xf32>
    %c0 = arith.constant 0 : index
    %c0_0 = arith.constant 0 : index
    %c0_1 = arith.constant 0 : index
    %1 = vector.load %arg7[%c0, %c0_0, %c0_1] : memref<18x18x128xf32, #tpu.memory_space<vmem>>, vector<18x18x128xf32>
    tpu.vector_store %arg7[%c0, %c0_0, %c0_1], %0 {strides = array<i32>} : memref<18x18x128xf32, #tpu.memory_space<vmem>>, vector<18x18x128xf32>,
    %c0_2 = arith.constant 0 : index
    %c0_3 = arith.constant 0 : index
    %c0_4 = arith.constant 0 : index
    %c0_5 = arith.constant 0 : index
    %2 = vector.load %arg1[%c0_2, %c0_3, %c0_4, %c0_5] : memref<1x16x16x64xf32, #tpu.memory_space<vmem>>, vector<1x16x16x64xf32>
    %3 = vector.shape_cast %2 : vector<1x16x16x64xf32> to vector<16x16x64xf32>
    %c1 = arith.constant 1 : index
    %c1_6 = arith.constant 1 : index
    %c0_7 = arith.constant 0 : index
    %4 = vector.load %arg7[%c1, %c1_6, %c0_7] : memref<18x18x128xf32, #tpu.memory_space<vmem>>, vector<16x16x64xf32>
    tpu.vector_store %arg7[%c1, %c1_6, %c0_7], %3 {strides = array<i32>} : memref<18x18x128xf32, #tpu.memory_space<vmem>>, vector<16x16x64xf32>,
    %c0_8 = arith.constant 0 : index
    %c0_9 = arith.constant 0 : index
    %c0_10 = arith.constant 0 : index
    %5 = vector.load %arg7[%c0_8, %c0_9, %c0_10] : memref<18x18x128xf32, #tpu.memory_space<vmem>>, vector<18x16x128xf32>
    %6 = vector.shape_cast %5 : vector<18x16x128xf32> to vector<288x128xf32>
    %7 = arith.truncf %6 : vector<288x128xf32> to vector<288x128xbf16>
    %8 = vector.extract_strided_slice %7 {offsets = [0, 0], sizes = [256, 128], strides = [1, 1]} : vector<288x128xbf16> to vector<256x128xbf16>
    %9 = vector.extract_strided_slice %7 {offsets = [16, 0], sizes = [256, 128], strides = [1, 1]} : vector<288x128xbf16> to vector<256x128xbf16>
    %10 = vector.extract_strided_slice %7 {offsets = [32, 0], sizes = [256, 128], strides = [1, 1]} : vector<288x128xbf16> to vector<256x128xbf16>
    %c0_11 = arith.constant 0 : index
    %c1_12 = arith.constant 1 : index
    %c0_13 = arith.constant 0 : index
    %11 = vector.load %arg7[%c0_11, %c1_12, %c0_13] : memref<18x18x128xf32, #tpu.memory_space<vmem>>, vector<18x16x128xf32>
    %12 = vector.shape_cast %11 : vector<18x16x128xf32> to vector<288x128xf32>
    %13 = arith.truncf %12 : vector<288x128xf32> to vector<288x128xbf16>
    %14 = vector.extract_strided_slice %13 {offsets = [0, 0], sizes = [256, 128], strides = [1, 1]} : vector<288x128xbf16> to vector<256x128xbf16>
    %15 = vector.extract_strided_slice %13 {offsets = [16, 0], sizes = [256, 128], strides = [1, 1]} : vector<288x128xbf16> to vector<256x128xbf16>
    %16 = vector.extract_strided_slice %13 {offsets = [32, 0], sizes = [256, 128], strides = [1, 1]} : vector<288x128xbf16> to vector<256x128xbf16>
    %c0_14 = arith.constant 0 : index
    %c2 = arith.constant 2 : index
    %c0_15 = arith.constant 0 : index
    %17 = vector.load %arg7[%c0_14, %c2, %c0_15] : memref<18x18x128xf32, #tpu.memory_space<vmem>>, vector<18x16x128xf32>
    %18 = vector.shape_cast %17 : vector<18x16x128xf32> to vector<288x128xf32>
    %19 = arith.truncf %18 : vector<288x128xf32> to vector<288x128xbf16>
    %20 = vector.extract_strided_slice %19 {offsets = [0, 0], sizes = [256, 128], strides = [1, 1]} : vector<288x128xbf16> to vector<256x128xbf16>
    %21 = vector.extract_strided_slice %19 {offsets = [16, 0], sizes = [256, 128], strides = [1, 1]} : vector<288x128xbf16> to vector<256x128xbf16>
    %22 = vector.extract_strided_slice %19 {offsets = [32, 0], sizes = [256, 128], strides = [1, 1]} : vector<288x128xbf16> to vector<256x128xbf16>
    %23 = tpu.concatenate %8, %14, %20, %9, %15, %21, %10, %16, %22 in 1 : vector<256x128xbf16>, vector<256x128xbf16>, vector<256x128xbf16>, vector<256x128xbf16>, vector<256x128xbf16>, vector<256x128xbf16>, vector<256x128xbf16>, vector<256x128xbf16>, vector<256x128xbf16> -> vector<256x1152xbf16>
    %c0_16 = arith.constant 0 : index
    %c0_17 = arith.constant 0 : index
    %24 = vector.load %arg2[%c0_16, %c0_17] : memref<1152x64xbf16, #tpu.memory_space<vmem>>, vector<1152x64xbf16>
    %cst_18 = arith.constant dense<0.000000e+00> : vector<256x64xf32>
    %25 = tpu.matmul %23, %24, %cst_18 {dimension_numbers = #tpu.dot_dimension_numbers<[1], [0], [0], [1], [0, 0, 1, 1], [], []>} : vector<256x1152xbf16>, vector<1152x64xbf16>, vector<256x64xf32> -> vector<256x64xf32>
    %c0_19 = arith.constant 0 : index
    %c0_20 = arith.constant 0 : index
    %26 = vector.load %arg3[%c0_19, %c0_20] : memref<1x64xf32, #tpu.memory_space<vmem>>, vector<1x64xf32>
    %27 = vector.broadcast %26 : vector<1x64xf32> to vector<256x64xf32>
    %28 = arith.addf %25, %27 : vector<256x64xf32>
    %cst_21 = arith.constant 0.000000e+00 : f32
    %29 = vector.broadcast %cst_21 : f32 to vector<256x64xf32>
    %30 = arith.maximumf %28, %29 : vector<256x64xf32>
    %31 = vector.shape_cast %30 : vector<256x64xf32> to vector<16x16x64xf32>
    %c1_22 = arith.constant 1 : index
    %c1_23 = arith.constant 1 : index
    %c0_24 = arith.constant 0 : index
    %32 = vector.load %arg7[%c1_22, %c1_23, %c0_24] : memref<18x18x128xf32, #tpu.memory_space<vmem>>, vector<16x16x64xf32>
    tpu.vector_store %arg7[%c1_22, %c1_23, %c0_24], %31 {strides = array<i32>} : memref<18x18x128xf32, #tpu.memory_space<vmem>>, vector<16x16x64xf32>,
    %c0_25 = arith.constant 0 : index
    %c0_26 = arith.constant 0 : index
    %c0_27 = arith.constant 0 : index
    %33 = vector.load %arg7[%c0_25, %c0_26, %c0_27] : memref<18x18x128xf32, #tpu.memory_space<vmem>>, vector<18x16x128xf32>
    %34 = vector.shape_cast %33 : vector<18x16x128xf32> to vector<288x128xf32>
    %35 = arith.truncf %34 : vector<288x128xf32> to vector<288x128xbf16>
    %36 = vector.extract_strided_slice %35 {offsets = [0, 0], sizes = [256, 128], strides = [1, 1]} : vector<288x128xbf16> to vector<256x128xbf16>
    %37 = vector.extract_strided_slice %35 {offsets = [16, 0], sizes = [256, 128], strides = [1, 1]} : vector<288x128xbf16> to vector<256x128xbf16>
    %38 = vector.extract_strided_slice %35 {offsets = [32, 0], sizes = [256, 128], strides = [1, 1]} : vector<288x128xbf16> to vector<256x128xbf16>
    %c0_28 = arith.constant 0 : index
    %c1_29 = arith.constant 1 : index
    %c0_30 = arith.constant 0 : index
    %39 = vector.load %arg7[%c0_28, %c1_29, %c0_30] : memref<18x18x128xf32, #tpu.memory_space<vmem>>, vector<18x16x128xf32>
    %40 = vector.shape_cast %39 : vector<18x16x128xf32> to vector<288x128xf32>
    %41 = arith.truncf %40 : vector<288x128xf32> to vector<288x128xbf16>
    %42 = vector.extract_strided_slice %41 {offsets = [0, 0], sizes = [256, 128], strides = [1, 1]} : vector<288x128xbf16> to vector<256x128xbf16>
    %43 = vector.extract_strided_slice %41 {offsets = [16, 0], sizes = [256, 128], strides = [1, 1]} : vector<288x128xbf16> to vector<256x128xbf16>
    %44 = vector.extract_strided_slice %41 {offsets = [32, 0], sizes = [256, 128], strides = [1, 1]} : vector<288x128xbf16> to vector<256x128xbf16>
    %c0_31 = arith.constant 0 : index
    %c2_32 = arith.constant 2 : index
    %c0_33 = arith.constant 0 : index
    %45 = vector.load %arg7[%c0_31, %c2_32, %c0_33] : memref<18x18x128xf32, #tpu.memory_space<vmem>>, vector<18x16x128xf32>
    %46 = vector.shape_cast %45 : vector<18x16x128xf32> to vector<288x128xf32>
    %47 = arith.truncf %46 : vector<288x128xf32> to vector<288x128xbf16>
    %48 = vector.extract_strided_slice %47 {offsets = [0, 0], sizes = [256, 128], strides = [1, 1]} : vector<288x128xbf16> to vector<256x128xbf16>
    %49 = vector.extract_strided_slice %47 {offsets = [16, 0], sizes = [256, 128], strides = [1, 1]} : vector<288x128xbf16> to vector<256x128xbf16>
    %50 = vector.extract_strided_slice %47 {offsets = [32, 0], sizes = [256, 128], strides = [1, 1]} : vector<288x128xbf16> to vector<256x128xbf16>
    %51 = tpu.concatenate %36, %42, %48, %37, %43, %49, %38, %44, %50 in 1 : vector<256x128xbf16>, vector<256x128xbf16>, vector<256x128xbf16>, vector<256x128xbf16>, vector<256x128xbf16>, vector<256x128xbf16>, vector<256x128xbf16>, vector<256x128xbf16>, vector<256x128xbf16> -> vector<256x1152xbf16>
    %c0_34 = arith.constant 0 : index
    %c0_35 = arith.constant 0 : index
    %52 = vector.load %arg4[%c0_34, %c0_35] : memref<1152x64xbf16, #tpu.memory_space<vmem>>, vector<1152x64xbf16>
    %cst_36 = arith.constant dense<0.000000e+00> : vector<256x64xf32>
    %53 = tpu.matmul %51, %52, %cst_36 {dimension_numbers = #tpu.dot_dimension_numbers<[1], [0], [0], [1], [0, 0, 1, 1], [], []>} : vector<256x1152xbf16>, vector<1152x64xbf16>, vector<256x64xf32> -> vector<256x64xf32>
    %c0_37 = arith.constant 0 : index
    %c0_38 = arith.constant 0 : index
    %54 = vector.load %arg5[%c0_37, %c0_38] : memref<1x64xf32, #tpu.memory_space<vmem>>, vector<1x64xf32>
    %55 = vector.broadcast %54 : vector<1x64xf32> to vector<256x64xf32>
    %56 = arith.addf %53, %55 : vector<256x64xf32>
    %cst_39 = arith.constant 0.000000e+00 : f32
    %57 = vector.broadcast %cst_39 : f32 to vector<256x64xf32>
    %58 = arith.maximumf %56, %57 : vector<256x64xf32>
    %59 = vector.shape_cast %58 : vector<256x64xf32> to vector<16x16x64xf32>
    %c0_40 = arith.constant 0 : index
    %c0_41 = arith.constant 0 : index
    %c0_42 = arith.constant 0 : index
    %c0_43 = arith.constant 0 : index
    %60 = vector.load %arg6[%c0_40, %c0_41, %c0_42, %c0_43] : memref<1x16x16x64xf32, #tpu.memory_space<vmem>>, vector<1x16x16x64xf32>
    %61 = vector.shape_cast %60 : vector<1x16x16x64xf32> to vector<16x16x64xf32>
    %62 = vector.shape_cast %59 : vector<16x16x64xf32> to vector<1x16x16x64xf32>
    tpu.vector_store %arg6[%c0_40, %c0_41, %c0_42, %c0_43], %62 {strides = array<i32>} : memref<1x16x16x64xf32, #tpu.memory_space<vmem>>, vector<1x16x16x64xf32>,
    return
  }
  func.func @transform_0(%arg0: i32) -> (i32, i32, i32, i32) {
    %c0_i32 = arith.constant 0 : i32
    %c0_i32_0 = arith.constant 0 : i32
    %c0_i32_1 = arith.constant 0 : i32
    %c0_i32_2 = arith.constant 0 : i32
    return %arg0, %c0_i32, %c0_i32_0, %c0_i32_1 : i32, i32, i32, i32
  }
  func.func @transform_1(%arg0: i32) -> (i32, i32) {
    %c0_i32 = arith.constant 0 : i32
    %c0_i32_0 = arith.constant 0 : i32
    %c0_i32_1 = arith.constant 0 : i32
    return %c0_i32, %c0_i32_0 : i32, i32
  }
  func.func @transform_2(%arg0: i32) -> (i32, i32) {
    %c0_i32 = arith.constant 0 : i32
    %c0_i32_0 = arith.constant 0 : i32
    %c0_i32_1 = arith.constant 0 : i32
    return %c0_i32, %c0_i32_0 : i32, i32
  }
  func.func @transform_3(%arg0: i32) -> (i32, i32) {
    %c0_i32 = arith.constant 0 : i32
    %c0_i32_0 = arith.constant 0 : i32
    %c0_i32_1 = arith.constant 0 : i32
    return %c0_i32, %c0_i32_0 : i32, i32
  }
  func.func @transform_4(%arg0: i32) -> (i32, i32) {
    %c0_i32 = arith.constant 0 : i32
    %c0_i32_0 = arith.constant 0 : i32
    %c0_i32_1 = arith.constant 0 : i32
    return %c0_i32, %c0_i32_0 : i32, i32
  }
  func.func @transform_5(%arg0: i32) -> (i32, i32, i32, i32) {
    %c0_i32 = arith.constant 0 : i32
    %c0_i32_0 = arith.constant 0 : i32
    %c0_i32_1 = arith.constant 0 : i32
    %c0_i32_2 = arith.constant 0 : i32
    return %arg0, %c0_i32, %c0_i32_0, %c0_i32_1 : i32, i32, i32, i32
  }
}

</mosaic_0001>

<llo_original>
// kernel: tpu_custom_call.1
$region0: #{tpu_custom_call.1}
  #allocation0 [shape = 'u32[]', space=smem, size = 0x4, offset = 0x4, fixed_abs, tag = 'smem constant byte address 0x4 - core index']
  #allocation1 [shape = 'u32[144,128]{1,0:T(1,128)}', space=vmem, size = 0x12000, scoped, tag = 'internal scratch']
  #allocation2 [shape = 'f32[18,18,128]{2,1,0:T(8,128)}', space=vmem, size = 0x36000, scoped, tag = 'scratch operand']
  %s0 = inlined_call_operand.vmem [shape: f32[4,16,16,64], index: 0, kind: input, shape index: {}]
  %s1 = inlined_call_operand.vmem [shape: bf16[1152,64], index: 1, kind: input, shape index: {}]
  %s2 = inlined_call_operand.vmem [shape: f32[1,64], index: 2, kind: input, shape index: {}]
  %s3 = inlined_call_operand.vmem [shape: bf16[1152,64], index: 3, kind: input, shape index: {}]
  %s4 = inlined_call_operand.vmem [shape: f32[1,64], index: 4, kind: input, shape index: {}]
  %s5 = inlined_call_operand.hbm [shape: f32[4,16,16,64], index: 5, kind: output, shape index: {}]
  %s6 = sld [smem:[#allocation0]]
  $region53: #{tpu_custom_call.1} parent=0
    _
  %s8 = ssub.s32 1, %s6
  %s9 = scalar_select 0, %s8, %s6
  $region1: #{tpu_custom_call.1} parent=0
    #allocation3 [shape = 'u8[262144]{0}', space=vmem, size = 0x40000, scoped, tag = 'output window, operand 0']
    #allocation4 [shape = 's32[2]{0}', space=sflag, size = 0x8, scoped, tag = 'scoped memory for tpu_custom_call.1']
    %10 = vsyncpa [#allocation4], 0
    %s11 = scalar_lea.sflag [#allocation4], 1
    %12 = vsyncpa %s11, 0
    loop: start=0, step=1, limit=6
    $region2: #{tpu_custom_call.1} parent=1 // loop_pre_header
      _
    $region3: #{tpu_custom_call.1} parent=1 // loop_header
      %s14 = sphi 0, %s18
      %p15 = scmp.ge.s32.totalorder %s14, 6
      %s24 = sphi 0, %s26
      %s27 = sphi 0, %s24
      %s28 = sphi 0, %s27
      %s44 = sphi 0, %s28
      %s48 = sphi 0, %s48
      %s50 = sphi 0, %s48
      %s51 = sphi 0, %s50
      %s65 = sphi 0, %s51
      %s69 = sphi 0, %s69
      %s71 = sphi 0, %s69
      %s72 = sphi 0, %s71
      %s86 = sphi 0, %s72
      %s90 = sphi 0, %s90
      %s92 = sphi 0, %s90
      %s93 = sphi 0, %s92
      %s107 = sphi 0, %s93
      %s111 = sphi 0, %s111
      %s113 = sphi 0, %s111
      %s114 = sphi 0, %s113
      %s128 = sphi 0, %s114
      %s134 = sphi 0, %s136
      %s137 = sphi 0, %s134
      %s138 = sphi 0, %s137
      %s154 = sphi 0, %s138
    $region4: #{tpu_custom_call.1} parent=1 // loop_header_branch
      %17 = sbr.rel (%p15) target = $region8
    $region5: #{tpu_custom_call.1} parent=1 // loop_body
      %s19 = ssub.s32 %s14, 1
      %s20 = ssub.s32 %s14, 2
      %s21 = sadd.s32 %s14, 1
      %s22 = ssub.s32 %s14, %s21
      %p23 = scmp.eq.s32.totalorder %s22, 0
      %s25 = sadd.s32 %s24, 1
      %s26 = scalar_select %p23, %s24, %s25
      %p29 = pneg %p23
      %p30 = scmp.eq.s32.totalorder %s14, 3
      %p31 = por %p29, %p30
      %p32 = scmp.ne.s32.totalorder %s24, %s27
      %p33 = scmp.eq.s32.totalorder %s14, 0
      %p34 = por %p32, %p33
      %p35 = scmp.ne.s32.totalorder %s24, %s27
      %p36 = scmp.eq.s32.totalorder %s19, 3
      %p37 = por %p35, %p36
      %p38 = scmp.ne.s32.totalorder %s27, %s28
      %p39 = scmp.eq.s32.totalorder %s19, 0
      %p40 = por %p38, %p39
      %p41 = scmp.ne.s32.totalorder %s27, %s28
      %p42 = scmp.eq.s32.totalorder %s20, 3
      %p43 = por %p41, %p42
      %p45 = scmp.ne.s32.totalorder %s28, %s44
      %p46 = scmp.eq.s32.totalorder %s20, 0
      %p47 = por %p45, %p46
      %s49 = sadd.s32 %s48, 1
      %p52 = scmp.eq.s32.totalorder %s14, 3
      %p53 = scmp.ne.s32.totalorder %s48, %s50
      %p54 = scmp.eq.s32.totalorder %s14, 0
      %p55 = por %p53, %p54
      %p56 = scmp.ne.s32.totalorder %s48, %s50
      %p57 = scmp.eq.s32.totalorder %s19, 3
      %p58 = por %p56, %p57
      %p59 = scmp.ne.s32.totalorder %s50, %s51
      %p60 = scmp.eq.s32.totalorder %s19, 0
      %p61 = por %p59, %p60
      %p62 = scmp.ne.s32.totalorder %s50, %s51
      %p63 = scmp.eq.s32.totalorder %s20, 3
      %p64 = por %p62, %p63
      %p66 = scmp.ne.s32.totalorder %s51, %s65
      %p67 = scmp.eq.s32.totalorder %s20, 0
      %p68 = por %p66, %p67
      %s70 = sadd.s32 %s69, 1
      %p73 = scmp.eq.s32.totalorder %s14, 3
      %p74 = scmp.ne.s32.totalorder %s69, %s71
      %p75 = scmp.eq.s32.totalorder %s14, 0
      %p76 = por %p74, %p75
      %p77 = scmp.ne.s32.totalorder %s69, %s71
      %p78 = scmp.eq.s32.totalorder %s19, 3
      %p79 = por %p77, %p78
      %p80 = scmp.ne.s32.totalorder %s71, %s72
      %p81 = scmp.eq.s32.totalorder %s19, 0
      %p82 = por %p80, %p81
      %p83 = scmp.ne.s32.totalorder %s71, %s72
      %p84 = scmp.eq.s32.totalorder %s20, 3
      %p85 = por %p83, %p84
      %p87 = scmp.ne.s32.totalorder %s72, %s86
      %p88 = scmp.eq.s32.totalorder %s20, 0
      %p89 = por %p87, %p88
      %s91 = sadd.s32 %s90, 1
      %p94 = scmp.eq.s32.totalorder %s14, 3
      %p95 = scmp.ne.s32.totalorder %s90, %s92
      %p96 = scmp.eq.s32.totalorder %s14, 0
      %p97 = por %p95, %p96
      %p98 = scmp.ne.s32.totalorder %s90, %s92
      %p99 = scmp.eq.s32.totalorder %s19, 3
      %p100 = por %p98, %p99
      %p101 = scmp.ne.s32.totalorder %s92, %s93
      %p102 = scmp.eq.s32.totalorder %s19, 0
      %p103 = por %p101, %p102
      %p104 = scmp.ne.s32.totalorder %s92, %s93
      %p105 = scmp.eq.s32.totalorder %s20, 3
      %p106 = por %p104, %p105
      %p108 = scmp.ne.s32.totalorder %s93, %s107
      %p109 = scmp.eq.s32.totalorder %s20, 0
      %p110 = por %p108, %p109
      %s112 = sadd.s32 %s111, 1
      %p115 = scmp.eq.s32.totalorder %s14, 3
      %p116 = scmp.ne.s32.totalorder %s111, %s113
      %p117 = scmp.eq.s32.totalorder %s14, 0
      %p118 = por %p116, %p117
      %p119 = scmp.ne.s32.totalorder %s111, %s113
      %p120 = scmp.eq.s32.totalorder %s19, 3
      %p121 = por %p119, %p120
      %p122 = scmp.ne.s32.totalorder %s113, %s114
      %p123 = scmp.eq.s32.totalorder %s19, 0
      %p124 = por %p122, %p123
      %p125 = scmp.ne.s32.totalorder %s113, %s114
      %p126 = scmp.eq.s32.totalorder %s20, 3
      %p127 = por %p125, %p126
      %p129 = scmp.ne.s32.totalorder %s114, %s128
      %p130 = scmp.eq.s32.totalorder %s20, 0
      %p131 = por %p129, %p130
      %s132 = ssub.s32 %s14, %s21
      %p133 = scmp.eq.s32.totalorder %s132, 0
      %s135 = sadd.s32 %s134, 1
      %s136 = scalar_select %p133, %s134, %s135
      %p139 = pneg %p133
      %p140 = scmp.eq.s32.totalorder %s14, 3
      %p141 = por %p139, %p140
      %p142 = scmp.ne.s32.totalorder %s134, %s137
      %p143 = scmp.eq.s32.totalorder %s14, 0
      %p144 = por %p142, %p143
      %p145 = scmp.ne.s32.totalorder %s134, %s137
      %p146 = scmp.eq.s32.totalorder %s19, 3
      %p147 = por %p145, %p146
      %p148 = scmp.ne.s32.totalorder %s137, %s138
      %p149 = scmp.eq.s32.totalorder %s19, 0
      %p150 = por %p148, %p149
      %p151 = scmp.ne.s32.totalorder %s137, %s138
      %p152 = scmp.eq.s32.totalorder %s20, 3
      %p153 = por %p151, %p152
      %p155 = scmp.ne.s32.totalorder %s138, %s154
      %p156 = scmp.eq.s32.totalorder %s20, 0
      %p157 = por %p155, %p156
      %p158 = scmp.le.s32.totalorder 1, %s14
      %p159 = scmp.lt.s32.totalorder %s14, 5
      %p160 = pnand %p158, %p159
      %p161 = pneg %p160
      // Predicated region
      $region9: #{tpu_custom_call.1} parent=5 // pred_check
        _
      $region10: #{tpu_custom_call.1} parent=5 // pred_check_branch
        %163 = sbr.rel (%p160) target = $region12
      $region11: #{tpu_custom_call.1} parent=5 // pred_region
        %s164 = ssub.s32 %s14, 1
        // Predicated region
        $region13: #{tpu_custom_call.1} parent=11 // pred_check
          %p165 = pneg %p61
        $region14: #{tpu_custom_call.1} parent=11 // pred_check_branch
          %167 = sbr.rel (%p165) target = $region16
        $region15: #{tpu_custom_call.1} parent=11 // pred_region
          _
        $region16: #{tpu_custom_call.1} parent=11 // pred_fallthru
          _
        // Predicated region
        $region17: #{tpu_custom_call.1} parent=11 // pred_check
          %p168 = pneg %p82
        $region18: #{tpu_custom_call.1} parent=11 // pred_check_branch
          %170 = sbr.rel (%p168) target = $region20
        $region19: #{tpu_custom_call.1} parent=11 // pred_region
          _
        $region20: #{tpu_custom_call.1} parent=11 // pred_fallthru
          _
        // Predicated region
        $region21: #{tpu_custom_call.1} parent=11 // pred_check
          %p171 = pneg %p103
        $region22: #{tpu_custom_call.1} parent=11 // pred_check_branch
          %173 = sbr.rel (%p171) target = $region24
        $region23: #{tpu_custom_call.1} parent=11 // pred_region
          _
        $region24: #{tpu_custom_call.1} parent=11 // pred_fallthru
          _
        // Predicated region
        $region25: #{tpu_custom_call.1} parent=11 // pred_check
          %p174 = pneg %p124
        $region26: #{tpu_custom_call.1} parent=11 // pred_check_branch
          %176 = sbr.rel (%p174) target = $region28
        $region27: #{tpu_custom_call.1} parent=11 // pred_region
          _
        $region28: #{tpu_custom_call.1} parent=11 // pred_fallthru
          _
      $region12: #{tpu_custom_call.1} parent=5 // pred_fallthru
        _
      %p177 = scmp.lt.s32.totalorder %s14, 4
      // Predicated region
      $region29: #{tpu_custom_call.1} parent=5 // pred_check
        %p178 = pneg %p177
      $region30: #{tpu_custom_call.1} parent=5 // pred_check_branch
        %180 = sbr.rel (%p178) target = $region32
      $region31: #{tpu_custom_call.1} parent=5 // pred_region
        // Predicated region
        $region33: #{tpu_custom_call.1} parent=31 // pred_check
          %p181 = pneg %p34
        $region34: #{tpu_custom_call.1} parent=31 // pred_check_branch
          %183 = sbr.rel (%p181) target = $region36
        $region35: #{tpu_custom_call.1} parent=31 // pred_region
          %p184 = scmp.lt.s32.totalorder %s14, 3
          %s185 = scalar_select %p184, %s14, 3
          %s186 = smul.addr %s185, 32
          %s187 = smul.addr %s186, 8
          %s188 = scalar_lea.vmem %s0, %s187
        $region36: #{tpu_custom_call.1} parent=31 // pred_fallthru
          _
      $region32: #{tpu_custom_call.1} parent=5 // pred_fallthru
        _
      %p189 = scmp.le.s32.totalorder 1, %s14
      %p190 = scmp.lt.s32.totalorder %s14, 5
      %p191 = pnand %p189, %p190
      %p192 = pneg %p191
      // Predicated region
      $region37: #{tpu_custom_call.1} parent=5 // pred_check
        _
      $region38: #{tpu_custom_call.1} parent=5 // pred_check_branch
        %194 = sbr.rel (%p191) target = $region40
      $region39: #{tpu_custom_call.1} parent=5 // pred_region
        %s195 = ssub.s32 %s14, 1
        %p196 = scmp.lt.s32.totalorder %s19, 3
        %s197 = scalar_select %p196, %s19, 3
        %s198 = smul.addr %s197, 32
        %s199 = smul.addr %s198, 8
        %s200 = scalar_lea.vmem %s0, %s199
        %p201 = pneg %p40
        %p202 = pneg %p37
        %p203 = pneg %p61
        %p204 = pneg %p58
        %p205 = pneg %p82
        %p206 = pneg %p79
        %p207 = pneg %p103
        %p208 = pneg %p100
        %p209 = pneg %p124
        %p210 = pneg %p121
        %p211 = pneg %p150
        %p212 = pneg %p147
        %s213 = sand.u32 %s137, 1
        %s214 = scalar_lea.sflag [#allocation4], %s213
        %s215 = sand.u32 %s137, 1
        %s216 = smul.addr %s215, 256
        %s217 = scalar_lea.vmem [#allocation3], %s216
        %p218 = scmp.lt.s32.totalorder %s19, 3
        %s219 = scalar_select %p218, %s19, 3
        %s220 = smul.addr %s219, 32
        %s221 = smul.addr %s220, 8
        %s222 = scalar_lea.vmem %s0, %s221
        %224 = vst [vmem:[#allocation2] sm:$0xff] 0.0
        %225 = vst [vmem:[#allocation2 + $0x8] sm:$0xff] 0.0
        %226 = vst [vmem:[#allocation2 + $0x10] sm:$0x3] 0.0
        %227 = vst [vmem:[#allocation2 + $0x18] sm:$0xff] 0.0
        %228 = vst [vmem:[#allocation2 + $0x20] sm:$0xff] 0.0
        %229 = vst [vmem:[#allocation2 + $0x28] sm:$0x3] 0.0
        %230 = vst [vmem:[#allocation2 + $0x30] sm:$0xff] 0.0
        %231 = vst [vmem:[#allocation2 + $0x38] sm:$0xff] 0.0
        %232 = vst [vmem:[#allocation2 + $0x40] sm:$0x3] 0.0
        %233 = vst [vmem:[#allocation2 + $0x48] sm:$0xff] 0.0
        %234 = vst [vmem:[#allocation2 + $0x50] sm:$0xff] 0.0
        %235 = vst [vmem:[#allocation2 + $0x58] sm:$0x3] 0.0
        %236 = vst [vmem:[#allocation2 + $0x60] sm:$0xff] 0.0
        %237 = vst [vmem:[#allocation2 + $0x68] sm:$0xff] 0.0
        %238 = vst [vmem:[#allocation2 + $0x70] sm:$0x3] 0.0
        %239 = vst [vmem:[#allocation2 + $0x78] sm:$0xff] 0.0
        %240 = vst [vmem:[#allocation2 + $0x80] sm:$0xff] 0.0
        %241 = vst [vmem:[#allocation2 + $0x88] sm:$0x3] 0.0
        %242 = vst [vmem:[#allocation2 + $0x90] sm:$0xff] 0.0
        %243 = vst [vmem:[#allocation2 + $0x98] sm:$0xff] 0.0
        %244 = vst [vmem:[#allocation2 + $0xa0] sm:$0x3] 0.0
        %245 = vst [vmem:[#allocation2 + $0xa8] sm:$0xff] 0.0
        %246 = vst [vmem:[#allocation2 + $0xb0] sm:$0xff] 0.0
        %247 = vst [vmem:[#allocation2 + $0xb8] sm:$0x3] 0.0
        %248 = vst [vmem:[#allocation2 + $0xc0] sm:$0xff] 0.0
        %249 = vst [vmem:[#allocation2 + $0xc8] sm:$0xff] 0.0
        %250 = vst [vmem:[#allocation2 + $0xd0] sm:$0x3] 0.0
        %251 = vst [vmem:[#allocation2 + $0xd8] sm:$0xff] 0.0
        %252 = vst [vmem:[#allocation2 + $0xe0] sm:$0xff] 0.0
        %253 = vst [vmem:[#allocation2 + $0xe8] sm:$0x3] 0.0
        %254 = vst [vmem:[#allocation2 + $0xf0] sm:$0xff] 0.0
        %255 = vst [vmem:[#allocation2 + $0xf8] sm:$0xff] 0.0
        %256 = vst [vmem:[#allocation2 + $0x100] sm:$0x3] 0.0
        %257 = vst [vmem:[#allocation2 + $0x108] sm:$0xff] 0.0
        %258 = vst [vmem:[#allocation2 + $0x110] sm:$0xff] 0.0
        %259 = vst [vmem:[#allocation2 + $0x118] sm:$0x3] 0.0
        %260 = vst [vmem:[#allocation2 + $0x120] sm:$0xff] 0.0
        %261 = vst [vmem:[#allocation2 + $0x128] sm:$0xff] 0.0
        %262 = vst [vmem:[#allocation2 + $0x130] sm:$0x3] 0.0
        %263 = vst [vmem:[#allocation2 + $0x138] sm:$0xff] 0.0
        %264 = vst [vmem:[#allocation2 + $0x140] sm:$0xff] 0.0
        %265 = vst [vmem:[#allocation2 + $0x148] sm:$0x3] 0.0
        %266 = vst [vmem:[#allocation2 + $0x150] sm:$0xff] 0.0
        %267 = vst [vmem:[#allocation2 + $0x158] sm:$0xff] 0.0
        %268 = vst [vmem:[#allocation2 + $0x160] sm:$0x3] 0.0
        %269 = vst [vmem:[#allocation2 + $0x168] sm:$0xff] 0.0
        %270 = vst [vmem:[#allocation2 + $0x170] sm:$0xff] 0.0
        %271 = vst [vmem:[#allocation2 + $0x178] sm:$0x3] 0.0
        %272 = vst [vmem:[#allocation2 + $0x180] sm:$0xff] 0.0
        %273 = vst [vmem:[#allocation2 + $0x188] sm:$0xff] 0.0
        %274 = vst [vmem:[#allocation2 + $0x190] sm:$0x3] 0.0
        %275 = vst [vmem:[#allocation2 + $0x198] sm:$0xff] 0.0
        %276 = vst [vmem:[#allocation2 + $0x1a0] sm:$0xff] 0.0
        %277 = vst [vmem:[#allocation2 + $0x1a8] sm:$0x3] 0.0
        %v278 = vld [vmem:[%s222] sm:$0xff]
        %v279 = vld [vmem:[%s222 + $0x8] sm:$0xff]
        %v280 = vld [vmem:[%s222 + $0x10] sm:$0xff]
        %v281 = vld [vmem:[%s222 + $0x18] sm:$0xff]
        %v282 = vld [vmem:[%s222 + $0x20] sm:$0xff]
        %v283 = vld [vmem:[%s222 + $0x28] sm:$0xff]
        %v284 = vld [vmem:[%s222 + $0x30] sm:$0xff]
        %v285 = vld [vmem:[%s222 + $0x38] sm:$0xff]
        %v286 = vld [vmem:[%s222 + $0x40] sm:$0xff]
        %v287 = vld [vmem:[%s222 + $0x48] sm:$0xff]
        %v288 = vld [vmem:[%s222 + $0x50] sm:$0xff]
        %v289 = vld [vmem:[%s222 + $0x58] sm:$0xff]
        %v290 = vld [vmem:[%s222 + $0x60] sm:$0xff]
        %v291 = vld [vmem:[%s222 + $0x68] sm:$0xff]
        %v292 = vld [vmem:[%s222 + $0x70] sm:$0xff]
        %v293 = vld [vmem:[%s222 + $0x78] sm:$0xff]
        %v294 = vld [vmem:[%s222 + $0x80] sm:$0xff]
        %v295 = vld [vmem:[%s222 + $0x88] sm:$0xff]
        %v296 = vld [vmem:[%s222 + $0x90] sm:$0xff]
        %v297 = vld [vmem:[%s222 + $0x98] sm:$0xff]
        %v298 = vld [vmem:[%s222 + $0xa0] sm:$0xff]
        %v299 = vld [vmem:[%s222 + $0xa8] sm:$0xff]
        %v300 = vld [vmem:[%s222 + $0xb0] sm:$0xff]
        %v301 = vld [vmem:[%s222 + $0xb8] sm:$0xff]
        %v302 = vld [vmem:[%s222 + $0xc0] sm:$0xff]
        %v303 = vld [vmem:[%s222 + $0xc8] sm:$0xff]
        %v304 = vld [vmem:[%s222 + $0xd0] sm:$0xff]
        %v305 = vld [vmem:[%s222 + $0xd8] sm:$0xff]
        %v306 = vld [vmem:[%s222 + $0xe0] sm:$0xff]
        %v307 = vld [vmem:[%s222 + $0xe8] sm:$0xff]
        %v308 = vld [vmem:[%s222 + $0xf0] sm:$0xff]
        %v309 = vld [vmem:[%s222 + $0xf8] sm:$0xff]
        %s310 = scalar_lea.vmem [#allocation2], 24
        %vm311 = vcmask 523264
        %312 = vst.msk [vmem:[%s310 + $0x1] sm:$0xff] %vm311, %v278
        %313 = vst.msk [vmem:[%s310 + $0x9] sm:$0xff] %vm311, %v279
        %314 = vst.msk [vmem:[%s310 + $0x19] sm:$0xff] %vm311, %v280
        %315 = vst.msk [vmem:[%s310 + $0x21] sm:$0xff] %vm311, %v281
        %316 = vst.msk [vmem:[%s310 + $0x31] sm:$0xff] %vm311, %v282
        %317 = vst.msk [vmem:[%s310 + $0x39] sm:$0xff] %vm311, %v283
        %318 = vst.msk [vmem:[%s310 + $0x49] sm:$0xff] %vm311, %v284
        %319 = vst.msk [vmem:[%s310 + $0x51] sm:$0xff] %vm311, %v285
        %320 = vst.msk [vmem:[%s310 + $0x61] sm:$0xff] %vm311, %v286
        %321 = vst.msk [vmem:[%s310 + $0x69] sm:$0xff] %vm311, %v287
        %322 = vst.msk [vmem:[%s310 + $0x79] sm:$0xff] %vm311, %v288
        %323 = vst.msk [vmem:[%s310 + $0x81] sm:$0xff] %vm311, %v289
        %324 = vst.msk [vmem:[%s310 + $0x91] sm:$0xff] %vm311, %v290
        %325 = vst.msk [vmem:[%s310 + $0x99] sm:$0xff] %vm311, %v291
        %326 = vst.msk [vmem:[%s310 + $0xa9] sm:$0xff] %vm311, %v292
        %327 = vst.msk [vmem:[%s310 + $0xb1] sm:$0xff] %vm311, %v293
        %328 = vst.msk [vmem:[%s310 + $0xc1] sm:$0xff] %vm311, %v294
        %329 = vst.msk [vmem:[%s310 + $0xc9] sm:$0xff] %vm311, %v295
        %330 = vst.msk [vmem:[%s310 + $0xd9] sm:$0xff] %vm311, %v296
        %331 = vst.msk [vmem:[%s310 + $0xe1] sm:$0xff] %vm311, %v297
        %332 = vst.msk [vmem:[%s310 + $0xf1] sm:$0xff] %vm311, %v298
        %333 = vst.msk [vmem:[%s310 + $0xf9] sm:$0xff] %vm311, %v299
        %334 = vst.msk [vmem:[%s310 + $0x109] sm:$0xff] %vm311, %v300
        %335 = vst.msk [vmem:[%s310 + $0x111] sm:$0xff] %vm311, %v301
        %336 = vst.msk [vmem:[%s310 + $0x121] sm:$0xff] %vm311, %v302
        %337 = vst.msk [vmem:[%s310 + $0x129] sm:$0xff] %vm311, %v303
        %338 = vst.msk [vmem:[%s310 + $0x139] sm:$0xff] %vm311, %v304
        %339 = vst.msk [vmem:[%s310 + $0x141] sm:$0xff] %vm311, %v305
        %340 = vst.msk [vmem:[%s310 + $0x151] sm:$0xff] %vm311, %v306
        %341 = vst.msk [vmem:[%s310 + $0x159] sm:$0xff] %vm311, %v307
        %342 = vst.msk [vmem:[%s310 + $0x169] sm:$0xff] %vm311, %v308
        %343 = vst.msk [vmem:[%s310 + $0x171] sm:$0xff] %vm311, %v309
        %v344 = vld [vmem:[#allocation2] sm:$0xff]
        %v345 = vld [vmem:[#allocation2 + $0x8] sm:$0xff]
        %v346 = vld [vmem:[#allocation2 + $0x18] sm:$0xff]
        %v347 = vld [vmem:[#allocation2 + $0x20] sm:$0xff]
        %v348 = vld [vmem:[#allocation2 + $0x30] sm:$0xff]
        %v349 = vld [vmem:[#allocation2 + $0x38] sm:$0xff]
        %v350 = vld [vmem:[#allocation2 + $0x48] sm:$0xff]
        %v351 = vld [vmem:[#allocation2 + $0x50] sm:$0xff]
        %v352 = vld [vmem:[#allocation2 + $0x60] sm:$0xff]
        %v353 = vld [vmem:[#allocation2 + $0x68] sm:$0xff]
        %v354 = vld [vmem:[#allocation2 + $0x78] sm:$0xff]
        %v355 = vld [vmem:[#allocation2 + $0x80] sm:$0xff]
        %v356 = vld [vmem:[#allocation2 + $0x90] sm:$0xff]
        %v357 = vld [vmem:[#allocation2 + $0x98] sm:$0xff]
        %v358 = vld [vmem:[#allocation2 + $0xa8] sm:$0xff]
        %v359 = vld [vmem:[#allocation2 + $0xb0] sm:$0xff]
        %v360 = vld [vmem:[#allocation2 + $0xc0] sm:$0xff]
        %v361 = vld [vmem:[#allocation2 + $0xc8] sm:$0xff]
        %v362 = vld [vmem:[#allocation2 + $0xd8] sm:$0xff]
        %v363 = vld [vmem:[#allocation2 + $0xe0] sm:$0xff]
        %v364 = vld [vmem:[#allocation2 + $0xf0] sm:$0xff]
        %v365 = vld [vmem:[#allocation2 + $0xf8] sm:$0xff]
        %v366 = vld [vmem:[#allocation2 + $0x108] sm:$0xff]
        %v367 = vld [vmem:[#allocation2 + $0x110] sm:$0xff]
        %v368 = vld [vmem:[#allocation2 + $0x120] sm:$0xff]
        %v369 = vld [vmem:[#allocation2 + $0x128] sm:$0xff]
        %v370 = vld [vmem:[#allocation2 + $0x138] sm:$0xff]
        %v371 = vld [vmem:[#allocation2 + $0x140] sm:$0xff]
        %v372 = vld [vmem:[#allocation2 + $0x150] sm:$0xff]
        %v373 = vld [vmem:[#allocation2 + $0x158] sm:$0xff]
        %v374 = vld [vmem:[#allocation2 + $0x168] sm:$0xff]
        %v375 = vld [vmem:[#allocation2 + $0x170] sm:$0xff]
        %v376 = vld [vmem:[#allocation2 + $0x180] sm:$0xff]
        %v377 = vld [vmem:[#allocation2 + $0x188] sm:$0xff]
        %v378 = vld [vmem:[#allocation2 + $0x198] sm:$0xff]
        %v379 = vld [vmem:[#allocation2 + $0x1a0] sm:$0xff]
        %v380 = vpack.c.bf16 %v345, %v344
        %v381 = vpack.c.bf16 %v347, %v346
        %v382 = vpack.c.bf16 %v349, %v348
        %v383 = vpack.c.bf16 %v351, %v350
        %v384 = vpack.c.bf16 %v353, %v352
        %v385 = vpack.c.bf16 %v355, %v354
        %v386 = vpack.c.bf16 %v357, %v356
        %v387 = vpack.c.bf16 %v359, %v358
        %v388 = vpack.c.bf16 %v361, %v360
        %v389 = vpack.c.bf16 %v363, %v362
        %v390 = vpack.c.bf16 %v365, %v364
        %v391 = vpack.c.bf16 %v367, %v366
        %v392 = vpack.c.bf16 %v369, %v368
        %v393 = vpack.c.bf16 %v371, %v370
        %v394 = vpack.c.bf16 %v373, %v372
        %v395 = vpack.c.bf16 %v375, %v374
        %v396 = vpack.c.bf16 %v377, %v376
        %v397 = vpack.c.bf16 %v379, %v378
        %v398 = vld [vmem:[#allocation2 + $0x1] sm:$0xff]
        %v399 = vld [vmem:[#allocation2 + $0x9] sm:$0xff]
        %v400 = vld [vmem:[#allocation2 + $0x19] sm:$0xff]
        %v401 = vld [vmem:[#allocation2 + $0x21] sm:$0xff]
        %v402 = vld [vmem:[#allocation2 + $0x31] sm:$0xff]
        %v403 = vld [vmem:[#allocation2 + $0x39] sm:$0xff]
        %v404 = vld [vmem:[#allocation2 + $0x49] sm:$0xff]
        %v405 = vld [vmem:[#allocation2 + $0x51] sm:$0xff]
        %v406 = vld [vmem:[#allocation2 + $0x61] sm:$0xff]
        %v407 = vld [vmem:[#allocation2 + $0x69] sm:$0xff]
        %v408 = vld [vmem:[#allocation2 + $0x79] sm:$0xff]
        %v409 = vld [vmem:[#allocation2 + $0x81] sm:$0xff]
        %v410 = vld [vmem:[#allocation2 + $0x91] sm:$0xff]
        %v411 = vld [vmem:[#allocation2 + $0x99] sm:$0xff]
        %v412 = vld [vmem:[#allocation2 + $0xa9] sm:$0xff]
        %v413 = vld [vmem:[#allocation2 + $0xb1] sm:$0xff]
        %v414 = vld [vmem:[#allocation2 + $0xc1] sm:$0xff]
        %v415 = vld [vmem:[#allocation2 + $0xc9] sm:$0xff]
        %v416 = vld [vmem:[#allocation2 + $0xd9] sm:$0xff]
        %v417 = vld [vmem:[#allocation2 + $0xe1] sm:$0xff]
        %v418 = vld [vmem:[#allocation2 + $0xf1] sm:$0xff]
        %v419 = vld [vmem:[#allocation2 + $0xf9] sm:$0xff]
        %v420 = vld [vmem:[#allocation2 + $0x109] sm:$0xff]
        %v421 = vld [vmem:[#allocation2 + $0x111] sm:$0xff]
        %v422 = vld [vmem:[#allocation2 + $0x121] sm:$0xff]
        %v423 = vld [vmem:[#allocation2 + $0x129] sm:$0xff]
        %v424 = vld [vmem:[#allocation2 + $0x139] sm:$0xff]
        %v425 = vld [vmem:[#allocation2 + $0x141] sm:$0xff]
        %v426 = vld [vmem:[#allocation2 + $0x151] sm:$0xff]
        %v427 = vld [vmem:[#allocation2 + $0x159] sm:$0xff]
        %v428 = vld [vmem:[#allocation2 + $0x169] sm:$0xff]
        %v429 = vld [vmem:[#allocation2 + $0x171] sm:$0xff]
        %v430 = vld [vmem:[#allocation2 + $0x181] sm:$0xff]
        %v431 = vld [vmem:[#allocation2 + $0x189] sm:$0xff]
        %v432 = vld [vmem:[#allocation2 + $0x199] sm:$0xff]
        %v433 = vld [vmem:[#allocation2 + $0x1a1] sm:$0xff]
        %v434 = vpack.c.bf16 %v399, %v398
        %v435 = vpack.c.bf16 %v401, %v400
        %v436 = vpack.c.bf16 %v403, %v402
        %v437 = vpack.c.bf16 %v405, %v404
        %v438 = vpack.c.bf16 %v407, %v406
        %v439 = vpack.c.bf16 %v409, %v408
        %v440 = vpack.c.bf16 %v411, %v410
        %v441 = vpack.c.bf16 %v413, %v412
        %v442 = vpack.c.bf16 %v415, %v414
        %v443 = vpack.c.bf16 %v417, %v416
        %v444 = vpack.c.bf16 %v419, %v418
        %v445 = vpack.c.bf16 %v421, %v420
        %v446 = vpack.c.bf16 %v423, %v422
        %v447 = vpack.c.bf16 %v425, %v424
        %v448 = vpack.c.bf16 %v427, %v426
        %v449 = vpack.c.bf16 %v429, %v428
        %v450 = vpack.c.bf16 %v431, %v430
        %v451 = vpack.c.bf16 %v433, %v432
        %v452 = vld [vmem:[#allocation2 + $0x2] sm:$0xff]
        %v453 = vld [vmem:[#allocation2 + $0xa] sm:$0xff]
        %v454 = vld [vmem:[#allocation2 + $0x1a] sm:$0xff]
        %v455 = vld [vmem:[#allocation2 + $0x22] sm:$0xff]
        %v456 = vld [vmem:[#allocation2 + $0x32] sm:$0xff]
        %v457 = vld [vmem:[#allocation2 + $0x3a] sm:$0xff]
        %v458 = vld [vmem:[#allocation2 + $0x4a] sm:$0xff]
        %v459 = vld [vmem:[#allocation2 + $0x52] sm:$0xff]
        %v460 = vld [vmem:[#allocation2 + $0x62] sm:$0xff]
        %v461 = vld [vmem:[#allocation2 + $0x6a] sm:$0xff]
        %v462 = vld [vmem:[#allocation2 + $0x7a] sm:$0xff]
        %v463 = vld [vmem:[#allocation2 + $0x82] sm:$0xff]
        %v464 = vld [vmem:[#allocation2 + $0x92] sm:$0xff]
        %v465 = vld [vmem:[#allocation2 + $0x9a] sm:$0xff]
        %v466 = vld [vmem:[#allocation2 + $0xaa] sm:$0xff]
        %v467 = vld [vmem:[#allocation2 + $0xb2] sm:$0xff]
        %v468 = vld [vmem:[#allocation2 + $0xc2] sm:$0xff]
        %v469 = vld [vmem:[#allocation2 + $0xca] sm:$0xff]
        %v470 = vld [vmem:[#allocation2 + $0xda] sm:$0xff]
        %v471 = vld [vmem:[#allocation2 + $0xe2] sm:$0xff]
        %v472 = vld [vmem:[#allocation2 + $0xf2] sm:$0xff]
        %v473 = vld [vmem:[#allocation2 + $0xfa] sm:$0xff]
        %v474 = vld [vmem:[#allocation2 + $0x10a] sm:$0xff]
        %v475 = vld [vmem:[#allocation2 + $0x112] sm:$0xff]
        %v476 = vld [vmem:[#allocation2 + $0x122] sm:$0xff]
        %v477 = vld [vmem:[#allocation2 + $0x12a] sm:$0xff]
        %v478 = vld [vmem:[#allocation2 + $0x13a] sm:$0xff]
        %v479 = vld [vmem:[#allocation2 + $0x142] sm:$0xff]
        %v480 = vld [vmem:[#allocation2 + $0x152] sm:$0xff]
        %v481 = vld [vmem:[#allocation2 + $0x15a] sm:$0xff]
        %v482 = vld [vmem:[#allocation2 + $0x16a] sm:$0xff]
        %v483 = vld [vmem:[#allocation2 + $0x172] sm:$0xff]
        %v484 = vld [vmem:[#allocation2 + $0x182] sm:$0xff]
        %v485 = vld [vmem:[#allocation2 + $0x18a] sm:$0xff]
        %v486 = vld [vmem:[#allocation2 + $0x19a] sm:$0xff]
        %v487 = vld [vmem:[#allocation2 + $0x1a2] sm:$0xff]
        %v488 = vpack.c.bf16 %v453, %v452
        %v489 = vpack.c.bf16 %v455, %v454
        %v490 = vpack.c.bf16 %v457, %v456
        %v491 = vpack.c.bf16 %v459, %v458
        %v492 = vpack.c.bf16 %v461, %v460
        %v493 = vpack.c.bf16 %v463, %v462
        %v494 = vpack.c.bf16 %v465, %v464
        %v495 = vpack.c.bf16 %v467, %v466
        %v496 = vpack.c.bf16 %v469, %v468
        %v497 = vpack.c.bf16 %v471, %v470
        %v498 = vpack.c.bf16 %v473, %v472
        %v499 = vpack.c.bf16 %v475, %v474
        %v500 = vpack.c.bf16 %v477, %v476
        %v501 = vpack.c.bf16 %v479, %v478
        %v502 = vpack.c.bf16 %v481, %v480
        %v503 = vpack.c.bf16 %v483, %v482
        %v504 = vpack.c.bf16 %v485, %v484
        %v505 = vpack.c.bf16 %v487, %v486
        %v506 = vld [vmem:[%s1] sm:$0xf]
        %v507 = vld [vmem:[%s1 + $0x4] sm:$0xf]
        %v508 = vld [vmem:[%s1 + $0x8] sm:$0xf]
        %v509 = vld [vmem:[%s1 + $0xc] sm:$0xf]
        %v510 = vld [vmem:[%s1 + $0x10] sm:$0xf]
        %v511 = vld [vmem:[%s1 + $0x14] sm:$0xf]
        %v512 = vld [vmem:[%s1 + $0x18] sm:$0xf]
        %v513 = vld [vmem:[%s1 + $0x1c] sm:$0xf]
        %v514 = vld [vmem:[%s1 + $0x20] sm:$0xf]
        %v515 = vld [vmem:[%s1 + $0x24] sm:$0xf]
        %v516 = vld [vmem:[%s1 + $0x28] sm:$0xf]
        %v517 = vld [vmem:[%s1 + $0x2c] sm:$0xf]
        %v518 = vld [vmem:[%s1 + $0x30] sm:$0xf]
        %v519 = vld [vmem:[%s1 + $0x34] sm:$0xf]
        %v520 = vld [vmem:[%s1 + $0x38] sm:$0xf]
        %v521 = vld [vmem:[%s1 + $0x3c] sm:$0xf]
        %v522 = vld [vmem:[%s1 + $0x40] sm:$0xf]
        %v523 = vld [vmem:[%s1 + $0x44] sm:$0xf]
        %v524 = vld [vmem:[%s1 + $0x48] sm:$0xf]
        %v525 = vld [vmem:[%s1 + $0x4c] sm:$0xf]
        %v526 = vld [vmem:[%s1 + $0x50] sm:$0xf]
        %v527 = vld [vmem:[%s1 + $0x54] sm:$0xf]
        %v528 = vld [vmem:[%s1 + $0x58] sm:$0xf]
        %v529 = vld [vmem:[%s1 + $0x5c] sm:$0xf]
        %v530 = vld [vmem:[%s1 + $0x60] sm:$0xf]
        %v531 = vld [vmem:[%s1 + $0x64] sm:$0xf]
        %v532 = vld [vmem:[%s1 + $0x68] sm:$0xf]
        %v533 = vld [vmem:[%s1 + $0x6c] sm:$0xf]
        %v534 = vld [vmem:[%s1 + $0x70] sm:$0xf]
        %v535 = vld [vmem:[%s1 + $0x74] sm:$0xf]
        %v536 = vld [vmem:[%s1 + $0x78] sm:$0xf]
        %v537 = vld [vmem:[%s1 + $0x7c] sm:$0xf]
        %v538 = vld [vmem:[%s1 + $0x80] sm:$0xf]
        %v539 = vld [vmem:[%s1 + $0x84] sm:$0xf]
        %v540 = vld [vmem:[%s1 + $0x88] sm:$0xf]
        %v541 = vld [vmem:[%s1 + $0x8c] sm:$0xf]
        %v542 = vld [vmem:[%s1 + $0x90] sm:$0xf]
        %v543 = vld [vmem:[%s1 + $0x94] sm:$0xf]
        %v544 = vld [vmem:[%s1 + $0x98] sm:$0xf]
        %v545 = vld [vmem:[%s1 + $0x9c] sm:$0xf]
        %v546 = vld [vmem:[%s1 + $0xa0] sm:$0xf]
        %v547 = vld [vmem:[%s1 + $0xa4] sm:$0xf]
        %v548 = vld [vmem:[%s1 + $0xa8] sm:$0xf]
        %v549 = vld [vmem:[%s1 + $0xac] sm:$0xf]
        %v550 = vld [vmem:[%s1 + $0xb0] sm:$0xf]
        %v551 = vld [vmem:[%s1 + $0xb4] sm:$0xf]
        %v552 = vld [vmem:[%s1 + $0xb8] sm:$0xf]
        %v553 = vld [vmem:[%s1 + $0xbc] sm:$0xf]
        %v554 = vld [vmem:[%s1 + $0xc0] sm:$0xf]
        %v555 = vld [vmem:[%s1 + $0xc4] sm:$0xf]
        %v556 = vld [vmem:[%s1 + $0xc8] sm:$0xf]
        %v557 = vld [vmem:[%s1 + $0xcc] sm:$0xf]
        %v558 = vld [vmem:[%s1 + $0xd0] sm:$0xf]
        %v559 = vld [vmem:[%s1 + $0xd4] sm:$0xf]
        %v560 = vld [vmem:[%s1 + $0xd8] sm:$0xf]
        %v561 = vld [vmem:[%s1 + $0xdc] sm:$0xf]
        %v562 = vld [vmem:[%s1 + $0xe0] sm:$0xf]
        %v563 = vld [vmem:[%s1 + $0xe4] sm:$0xf]
        %v564 = vld [vmem:[%s1 + $0xe8] sm:$0xf]
        %v565 = vld [vmem:[%s1 + $0xec] sm:$0xf]
        %v566 = vld [vmem:[%s1 + $0xf0] sm:$0xf]
        %v567 = vld [vmem:[%s1 + $0xf4] sm:$0xf]
        %v568 = vld [vmem:[%s1 + $0xf8] sm:$0xf]
        %v569 = vld [vmem:[%s1 + $0xfc] sm:$0xf]
        %v570 = vld [vmem:[%s1 + $0x100] sm:$0xf]
        %v571 = vld [vmem:[%s1 + $0x104] sm:$0xf]
        %v572 = vld [vmem:[%s1 + $0x108] sm:$0xf]
        %v573 = vld [vmem:[%s1 + $0x10c] sm:$0xf]
        %v574 = vld [vmem:[%s1 + $0x110] sm:$0xf]
        %v575 = vld [vmem:[%s1 + $0x114] sm:$0xf]
        %v576 = vld [vmem:[%s1 + $0x118] sm:$0xf]
        %v577 = vld [vmem:[%s1 + $0x11c] sm:$0xf]
        %v578 = vld [vmem:[%s1 + $0x120] sm:$0xf]
        %v579 = vld [vmem:[%s1 + $0x124] sm:$0xf]
        %v580 = vld [vmem:[%s1 + $0x128] sm:$0xf]
        %v581 = vld [vmem:[%s1 + $0x12c] sm:$0xf]
        %v582 = vld [vmem:[%s1 + $0x130] sm:$0xf]
        %v583 = vld [vmem:[%s1 + $0x134] sm:$0xf]
        %v584 = vld [vmem:[%s1 + $0x138] sm:$0xf]
        %v585 = vld [vmem:[%s1 + $0x13c] sm:$0xf]
        %v586 = vld [vmem:[%s1 + $0x140] sm:$0xf]
        %v587 = vld [vmem:[%s1 + $0x144] sm:$0xf]
        %v588 = vld [vmem:[%s1 + $0x148] sm:$0xf]
        %v589 = vld [vmem:[%s1 + $0x14c] sm:$0xf]
        %v590 = vld [vmem:[%s1 + $0x150] sm:$0xf]
        %v591 = vld [vmem:[%s1 + $0x154] sm:$0xf]
        %v592 = vld [vmem:[%s1 + $0x158] sm:$0xf]
        %v593 = vld [vmem:[%s1 + $0x15c] sm:$0xf]
        %v594 = vld [vmem:[%s1 + $0x160] sm:$0xf]
        %v595 = vld [vmem:[%s1 + $0x164] sm:$0xf]
        %v596 = vld [vmem:[%s1 + $0x168] sm:$0xf]
        %v597 = vld [vmem:[%s1 + $0x16c] sm:$0xf]
        %v598 = vld [vmem:[%s1 + $0x170] sm:$0xf]
        %v599 = vld [vmem:[%s1 + $0x174] sm:$0xf]
        %v600 = vld [vmem:[%s1 + $0x178] sm:$0xf]
        %v601 = vld [vmem:[%s1 + $0x17c] sm:$0xf]
        %v602 = vld [vmem:[%s1 + $0x180] sm:$0xf]
        %v603 = vld [vmem:[%s1 + $0x184] sm:$0xf]
        %v604 = vld [vmem:[%s1 + $0x188] sm:$0xf]
        %v605 = vld [vmem:[%s1 + $0x18c] sm:$0xf]
        %v606 = vld [vmem:[%s1 + $0x190] sm:$0xf]
        %v607 = vld [vmem:[%s1 + $0x194] sm:$0xf]
        %v608 = vld [vmem:[%s1 + $0x198] sm:$0xf]
        %v609 = vld [vmem:[%s1 + $0x19c] sm:$0xf]
        %v610 = vld [vmem:[%s1 + $0x1a0] sm:$0xf]
        %v611 = vld [vmem:[%s1 + $0x1a4] sm:$0xf]
        %v612 = vld [vmem:[%s1 + $0x1a8] sm:$0xf]
        %v613 = vld [vmem:[%s1 + $0x1ac] sm:$0xf]
        %v614 = vld [vmem:[%s1 + $0x1b0] sm:$0xf]
        %v615 = vld [vmem:[%s1 + $0x1b4] sm:$0xf]
        %v616 = vld [vmem:[%s1 + $0x1b8] sm:$0xf]
        %v617 = vld [vmem:[%s1 + $0x1bc] sm:$0xf]
        %v618 = vld [vmem:[%s1 + $0x1c0] sm:$0xf]
        %v619 = vld [vmem:[%s1 + $0x1c4] sm:$0xf]
        %v620 = vld [vmem:[%s1 + $0x1c8] sm:$0xf]
        %v621 = vld [vmem:[%s1 + $0x1cc] sm:$0xf]
        %v622 = vld [vmem:[%s1 + $0x1d0] sm:$0xf]
        %v623 = vld [vmem:[%s1 + $0x1d4] sm:$0xf]
        %v624 = vld [vmem:[%s1 + $0x1d8] sm:$0xf]
        %v625 = vld [vmem:[%s1 + $0x1dc] sm:$0xf]
        %v626 = vld [vmem:[%s1 + $0x1e0] sm:$0xf]
        %v627 = vld [vmem:[%s1 + $0x1e4] sm:$0xf]
        %v628 = vld [vmem:[%s1 + $0x1e8] sm:$0xf]
        %v629 = vld [vmem:[%s1 + $0x1ec] sm:$0xf]
        %v630 = vld [vmem:[%s1 + $0x1f0] sm:$0xf]
        %v631 = vld [vmem:[%s1 + $0x1f4] sm:$0xf]
        %v632 = vld [vmem:[%s1 + $0x1f8] sm:$0xf]
        %v633 = vld [vmem:[%s1 + $0x1fc] sm:$0xf]
        %v634 = vld [vmem:[%s1 + $0x200] sm:$0xf]
        %v635 = vld [vmem:[%s1 + $0x204] sm:$0xf]
        %v636 = vld [vmem:[%s1 + $0x208] sm:$0xf]
        %v637 = vld [vmem:[%s1 + $0x20c] sm:$0xf]
        %v638 = vld [vmem:[%s1 + $0x210] sm:$0xf]
        %v639 = vld [vmem:[%s1 + $0x214] sm:$0xf]
        %v640 = vld [vmem:[%s1 + $0x218] sm:$0xf]
        %v641 = vld [vmem:[%s1 + $0x21c] sm:$0xf]
        %v642 = vld [vmem:[%s1 + $0x220] sm:$0xf]
        %v643 = vld [vmem:[%s1 + $0x224] sm:$0xf]
        %v644 = vld [vmem:[%s1 + $0x228] sm:$0xf]
        %v645 = vld [vmem:[%s1 + $0x22c] sm:$0xf]
        %v646 = vld [vmem:[%s1 + $0x230] sm:$0xf]
        %v647 = vld [vmem:[%s1 + $0x234] sm:$0xf]
        %v648 = vld [vmem:[%s1 + $0x238] sm:$0xf]
        %v649 = vld [vmem:[%s1 + $0x23c] sm:$0xf]
        %v650 = vld [vmem:[%s2] sm:$0x1]
        %v652 = vlaneseq
        %v653 = vshrl.u32 %v652, 7
        %v654 = vsub.s32 0, %v653
        %v655 = vrot.slane %v650, %v654
        %v801 = vunpack.c.l.b16 %v506
        %v802 = vunpack.c.l.b16 %v507
        %v803 = vunpack.c.l.b16 %v508
        %v804 = vunpack.c.l.b16 %v509
        %v805 = vunpack.c.l.b16 %v510
        %v806 = vunpack.c.l.b16 %v511
        %v807 = vunpack.c.l.b16 %v512
        %v808 = vunpack.c.l.b16 %v513
        %v809 = vunpack.c.l.b16 %v514
        %v810 = vunpack.c.l.b16 %v515
        %v811 = vunpack.c.l.b16 %v516
        %v812 = vunpack.c.l.b16 %v517
        %v813 = vunpack.c.l.b16 %v518
        %v814 = vunpack.c.l.b16 %v519
        %v815 = vunpack.c.l.b16 %v520
        %v816 = vunpack.c.l.b16 %v521
        %v817 = vunpack.c.l.b16 %v522
        %v818 = vunpack.c.l.b16 %v523
        %v819 = vunpack.c.l.b16 %v524
        %v820 = vunpack.c.l.b16 %v525
        %v821 = vunpack.c.l.b16 %v526
        %v822 = vunpack.c.l.b16 %v527
        %v823 = vunpack.c.l.b16 %v528
        %v824 = vunpack.c.l.b16 %v529
        %v825 = vunpack.c.l.b16 %v530
        %v826 = vunpack.c.l.b16 %v531
        %v827 = vunpack.c.l.b16 %v532
        %v828 = vunpack.c.l.b16 %v533
        %v829 = vunpack.c.l.b16 %v534
        %v830 = vunpack.c.l.b16 %v535
        %v831 = vunpack.c.l.b16 %v536
        %v832 = vunpack.c.l.b16 %v537
        %v833 = vunpack.c.l.b16 %v538
        %v834 = vunpack.c.l.b16 %v539
        %v835 = vunpack.c.l.b16 %v540
        %v836 = vunpack.c.l.b16 %v541
        %v837 = vunpack.c.l.b16 %v542
        %v838 = vunpack.c.l.b16 %v543
        %v839 = vunpack.c.l.b16 %v544
        %v840 = vunpack.c.l.b16 %v545
        %v841 = vunpack.c.l.b16 %v546
        %v842 = vunpack.c.l.b16 %v547
        %v843 = vunpack.c.l.b16 %v548
        %v844 = vunpack.c.l.b16 %v549
        %v845 = vunpack.c.l.b16 %v550
        %v846 = vunpack.c.l.b16 %v551
        %v847 = vunpack.c.l.b16 %v552
        %v848 = vunpack.c.l.b16 %v553
        %v849 = vunpack.c.l.b16 %v554
        %v850 = vunpack.c.l.b16 %v555
        %v851 = vunpack.c.l.b16 %v556
        %v852 = vunpack.c.l.b16 %v557
        %v853 = vunpack.c.l.b16 %v558
        %v854 = vunpack.c.l.b16 %v559
        %v855 = vunpack.c.l.b16 %v560
        %v856 = vunpack.c.l.b16 %v561
        %v857 = vunpack.c.l.b16 %v562
        %v858 = vunpack.c.l.b16 %v563
        %v859 = vunpack.c.l.b16 %v564
        %v860 = vunpack.c.l.b16 %v565
        %v861 = vunpack.c.l.b16 %v566
        %v862 = vunpack.c.l.b16 %v567
        %v863 = vunpack.c.l.b16 %v568
        %v864 = vunpack.c.l.b16 %v569
        %v865 = vunpack.c.l.b16 %v570
        %v866 = vunpack.c.l.b16 %v571
        %v867 = vunpack.c.l.b16 %v572
        %v868 = vunpack.c.l.b16 %v573
        %v869 = vunpack.c.l.b16 %v574
        %v870 = vunpack.c.l.b16 %v575
        %v871 = vunpack.c.l.b16 %v576
        %v872 = vunpack.c.l.b16 %v577
        %v873 = vunpack.c.l.b16 %v578
        %v874 = vunpack.c.l.b16 %v579
        %v875 = vunpack.c.l.b16 %v580
        %v876 = vunpack.c.l.b16 %v581
        %v877 = vunpack.c.l.b16 %v582
        %v878 = vunpack.c.l.b16 %v583
        %v879 = vunpack.c.l.b16 %v584
        %v880 = vunpack.c.l.b16 %v585
        %v881 = vunpack.c.l.b16 %v586
        %v882 = vunpack.c.l.b16 %v587
        %v883 = vunpack.c.l.b16 %v588
        %v884 = vunpack.c.l.b16 %v589
        %v885 = vunpack.c.l.b16 %v590
        %v886 = vunpack.c.l.b16 %v591
        %v887 = vunpack.c.l.b16 %v592
        %v888 = vunpack.c.l.b16 %v593
        %v889 = vunpack.c.l.b16 %v594
        %v890 = vunpack.c.l.b16 %v595
        %v891 = vunpack.c.l.b16 %v596
        %v892 = vunpack.c.l.b16 %v597
        %v893 = vunpack.c.l.b16 %v598
        %v894 = vunpack.c.l.b16 %v599
        %v895 = vunpack.c.l.b16 %v600
        %v896 = vunpack.c.l.b16 %v601
        %v897 = vunpack.c.l.b16 %v602
        %v898 = vunpack.c.l.b16 %v603
        %v899 = vunpack.c.l.b16 %v604
        %v900 = vunpack.c.l.b16 %v605
        %v901 = vunpack.c.l.b16 %v606
        %v902 = vunpack.c.l.b16 %v607
        %v903 = vunpack.c.l.b16 %v608
        %v904 = vunpack.c.l.b16 %v609
        %v905 = vunpack.c.l.b16 %v610
        %v906 = vunpack.c.l.b16 %v611
        %v907 = vunpack.c.l.b16 %v612
        %v908 = vunpack.c.l.b16 %v613
        %v909 = vunpack.c.l.b16 %v614
        %v910 = vunpack.c.l.b16 %v615
        %v911 = vunpack.c.l.b16 %v616
        %v912 = vunpack.c.l.b16 %v617
        %v913 = vunpack.c.l.b16 %v618
        %v914 = vunpack.c.l.b16 %v619
        %v915 = vunpack.c.l.b16 %v620
        %v916 = vunpack.c.l.b16 %v621
        %v917 = vunpack.c.l.b16 %v622
        %v918 = vunpack.c.l.b16 %v623
        %v919 = vunpack.c.l.b16 %v624
        %v920 = vunpack.c.l.b16 %v625
        %v921 = vunpack.c.l.b16 %v626
        %v922 = vunpack.c.l.b16 %v627
        %v923 = vunpack.c.l.b16 %v628
        %v924 = vunpack.c.l.b16 %v629
        %v925 = vunpack.c.l.b16 %v630
        %v926 = vunpack.c.l.b16 %v631
        %v927 = vunpack.c.l.b16 %v632
        %v928 = vunpack.c.l.b16 %v633
        %v929 = vunpack.c.l.b16 %v634
        %v930 = vunpack.c.l.b16 %v635
        %v931 = vunpack.c.l.b16 %v636
        %v932 = vunpack.c.l.b16 %v637
        %v933 = vunpack.c.l.b16 %v638
        %v934 = vunpack.c.l.b16 %v639
        %v935 = vunpack.c.l.b16 %v640
        %v936 = vunpack.c.l.b16 %v641
        %v937 = vunpack.c.l.b16 %v642
        %v938 = vunpack.c.l.b16 %v643
        %v939 = vunpack.c.l.b16 %v644
        %v940 = vunpack.c.l.b16 %v645
        %v941 = vunpack.c.l.b16 %v646
        %v942 = vunpack.c.l.b16 %v647
        %v943 = vunpack.c.l.b16 %v648
        %v944 = vunpack.c.l.b16 %v649
        %v945 = vpack.c.b16 %v802, %v801
        %v946 = vpack.c.b16 %v804, %v803
        %v947 = vpack.c.b16 %v806, %v805
        %v948 = vpack.c.b16 %v808, %v807
        %v949 = vpack.c.b16 %v810, %v809
        %v950 = vpack.c.b16 %v812, %v811
        %v951 = vpack.c.b16 %v814, %v813
        %v952 = vpack.c.b16 %v816, %v815
        %v953 = vpack.c.b16 %v818, %v817
        %v954 = vpack.c.b16 %v820, %v819
        %v955 = vpack.c.b16 %v822, %v821
        %v956 = vpack.c.b16 %v824, %v823
        %v957 = vpack.c.b16 %v826, %v825
        %v958 = vpack.c.b16 %v828, %v827
        %v959 = vpack.c.b16 %v830, %v829
        %v960 = vpack.c.b16 %v832, %v831
        %v961 = vpack.c.b16 %v834, %v833
        %v962 = vpack.c.b16 %v836, %v835
        %v963 = vpack.c.b16 %v838, %v837
        %v964 = vpack.c.b16 %v840, %v839
        %v965 = vpack.c.b16 %v842, %v841
        %v966 = vpack.c.b16 %v844, %v843
        %v967 = vpack.c.b16 %v846, %v845
        %v968 = vpack.c.b16 %v848, %v847
        %v969 = vpack.c.b16 %v850, %v849
        %v970 = vpack.c.b16 %v852, %v851
        %v971 = vpack.c.b16 %v854, %v853
        %v972 = vpack.c.b16 %v856, %v855
        %v973 = vpack.c.b16 %v858, %v857
        %v974 = vpack.c.b16 %v860, %v859
        %v975 = vpack.c.b16 %v862, %v861
        %v976 = vpack.c.b16 %v864, %v863
        %v977 = vpack.c.b16 %v866, %v865
        %v978 = vpack.c.b16 %v868, %v867
        %v979 = vpack.c.b16 %v870, %v869
        %v980 = vpack.c.b16 %v872, %v871
        %v981 = vpack.c.b16 %v874, %v873
        %v982 = vpack.c.b16 %v876, %v875
        %v983 = vpack.c.b16 %v878, %v877
        %v984 = vpack.c.b16 %v880, %v879
        %v985 = vpack.c.b16 %v882, %v881
        %v986 = vpack.c.b16 %v884, %v883
        %v987 = vpack.c.b16 %v886, %v885
        %v988 = vpack.c.b16 %v888, %v887
        %v989 = vpack.c.b16 %v890, %v889
        %v990 = vpack.c.b16 %v892, %v891
        %v991 = vpack.c.b16 %v894, %v893
        %v992 = vpack.c.b16 %v896, %v895
        %v993 = vpack.c.b16 %v898, %v897
        %v994 = vpack.c.b16 %v900, %v899
        %v995 = vpack.c.b16 %v902, %v901
        %v996 = vpack.c.b16 %v904, %v903
        %v997 = vpack.c.b16 %v906, %v905
        %v998 = vpack.c.b16 %v908, %v907
        %v999 = vpack.c.b16 %v910, %v909
        %v1000 = vpack.c.b16 %v912, %v911
        %v1001 = vpack.c.b16 %v914, %v913
        %v1002 = vpack.c.b16 %v916, %v915
        %v1003 = vpack.c.b16 %v918, %v917
        %v1004 = vpack.c.b16 %v920, %v919
        %v1005 = vpack.c.b16 %v922, %v921
        %v1006 = vpack.c.b16 %v924, %v923
        %v1007 = vpack.c.b16 %v926, %v925
        %v1008 = vpack.c.b16 %v928, %v927
        %v1009 = vpack.c.b16 %v930, %v929
        %v1010 = vpack.c.b16 %v932, %v931
        %v1011 = vpack.c.b16 %v934, %v933
        %v1012 = vpack.c.b16 %v936, %v935
        %v1013 = vpack.c.b16 %v938, %v937
        %v1014 = vpack.c.b16 %v940, %v939
        %v1015 = vpack.c.b16 %v942, %v941
        %v1016 = vpack.c.b16 %v944, %v943
        %1089 = vmatprep.subr.bf16.mxu0 0
        %1090 = vmatpush1.bf16.msra.mxu0 %v945
        %1091 = vmatprep.subr.bf16.mxu0 0
        %1092 = vmatpush1.bf16.msra.mxu0 %v946
        %1093 = vmatprep.subr.bf16.mxu0 0
        %1094 = vmatpush1.bf16.msra.mxu0 %v947
        %1095 = vmatprep.subr.bf16.mxu0 0
        %1096 = vmatpush1.bf16.msra.mxu0 %v948
        %1097 = vmatprep.subr.bf16.mxu0 0
        %1098 = vmatpush1.bf16.msra.mxu0 %v949
        %1099 = vmatprep.subr.bf16.mxu0 0
        %1100 = vmatpush1.bf16.msra.mxu0 %v950
        %1101 = vmatprep.subr.bf16.mxu0 0
        %1102 = vmatpush1.bf16.msra.mxu0 %v951
        %1103 = vmatprep.subr.bf16.mxu0 0
        %1104 = vmatpush1.bf16.msra.mxu0 %v952
        %1105 = vmatprep.subr.bf16.mxu0 0
        %1106 = vmatpush1.bf16.msra.mxu0 %v953
        %1107 = vmatprep.subr.bf16.mxu0 0
        %1108 = vmatpush1.bf16.msra.mxu0 %v954
        %1109 = vmatprep.subr.bf16.mxu0 0
        %1110 = vmatpush1.bf16.msra.mxu0 %v955
        %1111 = vmatprep.subr.bf16.mxu0 0
        %1112 = vmatpush1.bf16.msra.mxu0 %v956
        %1113 = vmatprep.subr.bf16.mxu0 0
        %1114 = vmatpush1.bf16.msra.mxu0 %v957
        %1115 = vmatprep.subr.bf16.mxu0 0
        %1116 = vmatpush1.bf16.msra.mxu0 %v958
        %1117 = vmatprep.subr.bf16.mxu0 0
        %1118 = vmatpush1.bf16.msra.mxu0 %v959
        %1119 = vmatprep.subr.bf16.mxu0 0
        %1120 = vmatpush1.bf16.msra.mxu0 %v960
        %1121 = vmatprep.mubr.bf16.mxu0 %v434
        %1122 = vmatmul.mubr.bf16.gmra.mrb[0].mxu0 %v380
        %v1123 = vpop.f32.mrb[0].mxu0
        %v1124 = vadd.f32 %v655, %v1123
        %v1125 = vpop.f32.mrb[0].mxu0
        %v1126 = vpop.f32.mrb[0].mxu0
        %v1127 = vadd.f32 %v655, %v1126
        %v1128 = vpop.f32.mrb[0].mxu0
        %1129 = vmatprep.mubr.bf16.mxu0 %v435
        %1130 = vmatmul.mubr.bf16.gmra.mrb[0].mxu0 %v381
        %v1131 = vpop.f32.mrb[0].mxu0
        %v1132 = vadd.f32 %v655, %v1131
        %v1133 = vpop.f32.mrb[0].mxu0
        %v1134 = vpop.f32.mrb[0].mxu0
        %v1135 = vadd.f32 %v655, %v1134
        %v1136 = vpop.f32.mrb[0].mxu0
        %1137 = vmatprep.mubr.bf16.mxu0 %v436
        %1138 = vmatmul.mubr.bf16.gmra.mrb[0].mxu0 %v382
        %v1139 = vpop.f32.mrb[0].mxu0
        %v1140 = vadd.f32 %v655, %v1139
        %v1141 = vpop.f32.mrb[0].mxu0
        %v1142 = vpop.f32.mrb[0].mxu0
        %v1143 = vadd.f32 %v655, %v1142
        %v1144 = vpop.f32.mrb[0].mxu0
        %1145 = vmatprep.mubr.bf16.mxu0 %v437
        %1146 = vmatmul.mubr.bf16.gmra.mrb[0].mxu0 %v383
        %v1147 = vpop.f32.mrb[0].mxu0
        %v1148 = vadd.f32 %v655, %v1147
        %v1149 = vpop.f32.mrb[0].mxu0
        %v1150 = vpop.f32.mrb[0].mxu0
        %v1151 = vadd.f32 %v655, %v1150
        %v1152 = vpop.f32.mrb[0].mxu0
        %1153 = vmatprep.mubr.bf16.mxu0 %v438
        %1154 = vmatmul.mubr.bf16.gmra.mrb[0].mxu0 %v384
        %v1155 = vpop.f32.mrb[0].mxu0
        %v1156 = vadd.f32 %v655, %v1155
        %v1157 = vpop.f32.mrb[0].mxu0
        %v1158 = vpop.f32.mrb[0].mxu0
        %v1159 = vadd.f32 %v655, %v1158
        %v1160 = vpop.f32.mrb[0].mxu0
        %1161 = vmatprep.mubr.bf16.mxu0 %v439
        %1162 = vmatmul.mubr.bf16.gmra.mrb[0].mxu0 %v385
        %v1163 = vpop.f32.mrb[0].mxu0
        %v1164 = vadd.f32 %v655, %v1163
        %v1165 = vpop.f32.mrb[0].mxu0
        %v1166 = vpop.f32.mrb[0].mxu0
        %v1167 = vadd.f32 %v655, %v1166
        %v1168 = vpop.f32.mrb[0].mxu0
        %1169 = vmatprep.mubr.bf16.mxu0 %v440
        %1170 = vmatmul.mubr.bf16.gmra.mrb[0].mxu0 %v386
        %v1171 = vpop.f32.mrb[0].mxu0
        %v1172 = vadd.f32 %v655, %v1171
        %v1173 = vpop.f32.mrb[0].mxu0
        %v1174 = vpop.f32.mrb[0].mxu0
        %v1175 = vadd.f32 %v655, %v1174
        %v1176 = vpop.f32.mrb[0].mxu0
        %1177 = vmatprep.mubr.bf16.mxu0 %v441
        %1178 = vmatmul.mubr.bf16.gmra.mrb[0].mxu0 %v387
        %v1179 = vpop.f32.mrb[0].mxu0
        %v1180 = vadd.f32 %v655, %v1179
        %v1181 = vpop.f32.mrb[0].mxu0
        %v1182 = vpop.f32.mrb[0].mxu0
        %v1183 = vadd.f32 %v655, %v1182
        %v1184 = vpop.f32.mrb[0].mxu0
        %1185 = vmatprep.mubr.bf16.mxu0 %v442
        %1186 = vmatmul.mubr.bf16.gmra.mrb[0].mxu0 %v388
        %v1187 = vpop.f32.mrb[0].mxu0
        %v1188 = vadd.f32 %v655, %v1187
        %v1189 = vpop.f32.mrb[0].mxu0
        %v1190 = vpop.f32.mrb[0].mxu0
        %v1191 = vadd.f32 %v655, %v1190
        %v1192 = vpop.f32.mrb[0].mxu0
        %1193 = vmatprep.mubr.bf16.mxu0 %v443
        %1194 = vmatmul.mubr.bf16.gmra.mrb[0].mxu0 %v389
        %v1195 = vpop.f32.mrb[0].mxu0
        %v1196 = vadd.f32 %v655, %v1195
        %v1197 = vpop.f32.mrb[0].mxu0
        %v1198 = vpop.f32.mrb[0].mxu0
        %v1199 = vadd.f32 %v655, %v1198
        %v1200 = vpop.f32.mrb[0].mxu0
        %1201 = vmatprep.mubr.bf16.mxu0 %v444
        %1202 = vmatmul.mubr.bf16.gmra.mrb[0].mxu0 %v390
        %v1203 = vpop.f32.mrb[0].mxu0
        %v1204 = vadd.f32 %v655, %v1203
        %v1205 = vpop.f32.mrb[0].mxu0
        %v1206 = vpop.f32.mrb[0].mxu0
        %v1207 = vadd.f32 %v655, %v1206
        %v1208 = vpop.f32.mrb[0].mxu0
        %1209 = vmatprep.mubr.bf16.mxu0 %v445
        %1210 = vmatmul.mubr.bf16.gmra.mrb[0].mxu0 %v391
        %v1211 = vpop.f32.mrb[0].mxu0
        %v1212 = vadd.f32 %v655, %v1211
        %v1213 = vpop.f32.mrb[0].mxu0
        %v1214 = vpop.f32.mrb[0].mxu0
        %v1215 = vadd.f32 %v655, %v1214
        %v1216 = vpop.f32.mrb[0].mxu0
        %1217 = vmatprep.mubr.bf16.mxu0 %v446
        %1218 = vmatmul.mubr.bf16.gmra.mrb[0].mxu0 %v392
        %v1219 = vpop.f32.mrb[0].mxu0
        %v1220 = vadd.f32 %v655, %v1219
        %v1221 = vpop.f32.mrb[0].mxu0
        %v1222 = vpop.f32.mrb[0].mxu0
        %v1223 = vadd.f32 %v655, %v1222
        %v1224 = vpop.f32.mrb[0].mxu0
        %1225 = vmatprep.mubr.bf16.mxu0 %v447
        %1226 = vmatmul.mubr.bf16.gmra.mrb[0].mxu0 %v393
        %v1227 = vpop.f32.mrb[0].mxu0
        %v1228 = vadd.f32 %v655, %v1227
        %v1229 = vpop.f32.mrb[0].mxu0
        %v1230 = vpop.f32.mrb[0].mxu0
        %v1231 = vadd.f32 %v655, %v1230
        %v1232 = vpop.f32.mrb[0].mxu0
        %1233 = vmatprep.mubr.bf16.mxu0 %v448
        %1234 = vmatmul.mubr.bf16.gmra.mrb[0].mxu0 %v394
        %v1235 = vpop.f32.mrb[0].mxu0
        %v1236 = vadd.f32 %v655, %v1235
        %v1237 = vpop.f32.mrb[0].mxu0
        %v1238 = vpop.f32.mrb[0].mxu0
        %v1239 = vadd.f32 %v655, %v1238
        %v1240 = vpop.f32.mrb[0].mxu0
        %1241 = vmatprep.mubr.bf16.mxu0 %v449
        %1242 = vmatmul.mubr.bf16.gmra.mrb[0].mxu0 %v395
        %v1243 = vpop.f32.mrb[0].mxu0
        %v1244 = vadd.f32 %v655, %v1243
        %v1245 = vpop.f32.mrb[0].mxu0
        %v1246 = vpop.f32.mrb[0].mxu0
        %v1247 = vadd.f32 %v655, %v1246
        %v1248 = vpop.f32.mrb[0].mxu0
        %1249 = vdwg.mxu0
        %1250 = vmatprep.subr.bf16.mxu0 0
        %1251 = vmatpush1.bf16.msra.mxu0 %v961
        %1252 = vmatprep.subr.bf16.mxu0 0
        %1253 = vmatpush1.bf16.msra.mxu0 %v962
        %1254 = vmatprep.subr.bf16.mxu0 0
        %1255 = vmatpush1.bf16.msra.mxu0 %v963
        %1256 = vmatprep.subr.bf16.mxu0 0
        %1257 = vmatpush1.bf16.msra.mxu0 %v964
        %1258 = vmatprep.subr.bf16.mxu0 0
        %1259 = vmatpush1.bf16.msra.mxu0 %v965
        %1260 = vmatprep.subr.bf16.mxu0 0
        %1261 = vmatpush1.bf16.msra.mxu0 %v966
        %1262 = vmatprep.subr.bf16.mxu0 0
        %1263 = vmatpush1.bf16.msra.mxu0 %v967
        %1264 = vmatprep.subr.bf16.mxu0 0
        %1265 = vmatpush1.bf16.msra.mxu0 %v968
        %1266 = vmatprep.subr.bf16.mxu0 0
        %1267 = vmatpush1.bf16.msra.mxu0 %v969
        %1268 = vmatprep.subr.bf16.mxu0 0
        %1269 = vmatpush1.bf16.msra.mxu0 %v970
        %1270 = vmatprep.subr.bf16.mxu0 0
        %1271 = vmatpush1.bf16.msra.mxu0 %v971
        %1272 = vmatprep.subr.bf16.mxu0 0
        %1273 = vmatpush1.bf16.msra.mxu0 %v972
        %1274 = vmatprep.subr.bf16.mxu0 0
        %1275 = vmatpush1.bf16.msra.mxu0 %v973
        %1276 = vmatprep.subr.bf16.mxu0 0
        %1277 = vmatpush1.bf16.msra.mxu0 %v974
        %1278 = vmatprep.subr.bf16.mxu0 0
        %1279 = vmatpush1.bf16.msra.mxu0 %v975
        %1280 = vmatprep.subr.bf16.mxu0 0
        %1281 = vmatpush1.bf16.msra.mxu0 %v976
        %1282 = vmatprep.mubr.bf16.mxu0 %v381
        %1283 = vmatmul.mubr.bf16.gmra.mrb[0].mxu0 %v488
        %v1284 = vpop.f32.mrb[0].mxu0
        %v1285 = vadd.f32 %v1124, %v1284
        %v1286 = vpop.f32.mrb[0].mxu0
        %v1287 = vpop.f32.mrb[0].mxu0
        %v1288 = vadd.f32 %v1127, %v1287
        %v1289 = vpop.f32.mrb[0].mxu0
        %1290 = vmatprep.mubr.bf16.mxu0 %v382
        %1291 = vmatmul.mubr.bf16.gmra.mrb[0].mxu0 %v489
        %v1292 = vpop.f32.mrb[0].mxu0
        %v1293 = vadd.f32 %v1132, %v1292
        %v1294 = vpop.f32.mrb[0].mxu0
        %v1295 = vpop.f32.mrb[0].mxu0
        %v1296 = vadd.f32 %v1135, %v1295
        %v1297 = vpop.f32.mrb[0].mxu0
        %1298 = vmatprep.mubr.bf16.mxu0 %v383
        %1299 = vmatmul.mubr.bf16.gmra.mrb[0].mxu0 %v490
        %v1300 = vpop.f32.mrb[0].mxu0
        %v1301 = vadd.f32 %v1140, %v1300
        %v1302 = vpop.f32.mrb[0].mxu0
        %v1303 = vpop.f32.mrb[0].mxu0
        %v1304 = vadd.f32 %v1143, %v1303
        %v1305 = vpop.f32.mrb[0].mxu0
        %1306 = vmatprep.mubr.bf16.mxu0 %v384
        %1307 = vmatmul.mubr.bf16.gmra.mrb[0].mxu0 %v491
        %v1308 = vpop.f32.mrb[0].mxu0
        %v1309 = vadd.f32 %v1148, %v1308
        %v1310 = vpop.f32.mrb[0].mxu0
        %v1311 = vpop.f32.mrb[0].mxu0
        %v1312 = vadd.f32 %v1151, %v1311
        %v1313 = vpop.f32.mrb[0].mxu0
        %1314 = vmatprep.mubr.bf16.mxu0 %v385
        %1315 = vmatmul.mubr.bf16.gmra.mrb[0].mxu0 %v492
        %v1316 = vpop.f32.mrb[0].mxu0
        %v1317 = vadd.f32 %v1156, %v1316
        %v1318 = vpop.f32.mrb[0].mxu0
        %v1319 = vpop.f32.mrb[0].mxu0
        %v1320 = vadd.f32 %v1159, %v1319
        %v1321 = vpop.f32.mrb[0].mxu0
        %1322 = vmatprep.mubr.bf16.mxu0 %v386
        %1323 = vmatmul.mubr.bf16.gmra.mrb[0].mxu0 %v493
        %v1324 = vpop.f32.mrb[0].mxu0
        %v1325 = vadd.f32 %v1164, %v1324
        %v1326 = vpop.f32.mrb[0].mxu0
        %v1327 = vpop.f32.mrb[0].mxu0
        %v1328 = vadd.f32 %v1167, %v1327
        %v1329 = vpop.f32.mrb[0].mxu0
        %1330 = vmatprep.mubr.bf16.mxu0 %v387
        %1331 = vmatmul.mubr.bf16.gmra.mrb[0].mxu0 %v494
        %v1332 = vpop.f32.mrb[0].mxu0
        %v1333 = vadd.f32 %v1172, %v1332
        %v1334 = vpop.f32.mrb[0].mxu0
        %v1335 = vpop.f32.mrb[0].mxu0
        %v1336 = vadd.f32 %v1175, %v1335
        %v1337 = vpop.f32.mrb[0].mxu0
        %1338 = vmatprep.mubr.bf16.mxu0 %v388
        %1339 = vmatmul.mubr.bf16.gmra.mrb[0].mxu0 %v495
        %v1340 = vpop.f32.mrb[0].mxu0
        %v1341 = vadd.f32 %v1180, %v1340
        %v1342 = vpop.f32.mrb[0].mxu0
        %v1343 = vpop.f32.mrb[0].mxu0
        %v1344 = vadd.f32 %v1183, %v1343
        %v1345 = vpop.f32.mrb[0].mxu0
        %1346 = vmatprep.mubr.bf16.mxu0 %v389
        %1347 = vmatmul.mubr.bf16.gmra.mrb[0].mxu0 %v496
        %v1348 = vpop.f32.mrb[0].mxu0
        %v1349 = vadd.f32 %v1188, %v1348
        %v1350 = vpop.f32.mrb[0].mxu0
        %v1351 = vpop.f32.mrb[0].mxu0
        %v1352 = vadd.f32 %v1191, %v1351
        %v1353 = vpop.f32.mrb[0].mxu0
        %1354 = vmatprep.mubr.bf16.mxu0 %v390
        %1355 = vmatmul.mubr.bf16.gmra.mrb[0].mxu0 %v497
        %v1356 = vpop.f32.mrb[0].mxu0
        %v1357 = vadd.f32 %v1196, %v1356
        %v1358 = vpop.f32.mrb[0].mxu0
        %v1359 = vpop.f32.mrb[0].mxu0
        %v1360 = vadd.f32 %v1199, %v1359
        %v1361 = vpop.f32.mrb[0].mxu0
        %1362 = vmatprep.mubr.bf16.mxu0 %v391
        %1363 = vmatmul.mubr.bf16.gmra.mrb[0].mxu0 %v498
        %v1364 = vpop.f32.mrb[0].mxu0
        %v1365 = vadd.f32 %v1204, %v1364
        %v1366 = vpop.f32.mrb[0].mxu0
        %v1367 = vpop.f32.mrb[0].mxu0
        %v1368 = vadd.f32 %v1207, %v1367
        %v1369 = vpop.f32.mrb[0].mxu0
        %1370 = vmatprep.mubr.bf16.mxu0 %v392
        %1371 = vmatmul.mubr.bf16.gmra.mrb[0].mxu0 %v499
        %v1372 = vpop.f32.mrb[0].mxu0
        %v1373 = vadd.f32 %v1212, %v1372
        %v1374 = vpop.f32.mrb[0].mxu0
        %v1375 = vpop.f32.mrb[0].mxu0
        %v1376 = vadd.f32 %v1215, %v1375
        %v1377 = vpop.f32.mrb[0].mxu0
        %1378 = vmatprep.mubr.bf16.mxu0 %v393
        %1379 = vmatmul.mubr.bf16.gmra.mrb[0].mxu0 %v500
        %v1380 = vpop.f32.mrb[0].mxu0
        %v1381 = vadd.f32 %v1220, %v1380
        %v1382 = vpop.f32.mrb[0].mxu0
        %v1383 = vpop.f32.mrb[0].mxu0
        %v1384 = vadd.f32 %v1223, %v1383
        %v1385 = vpop.f32.mrb[0].mxu0
        %1386 = vmatprep.mubr.bf16.mxu0 %v394
        %1387 = vmatmul.mubr.bf16.gmra.mrb[0].mxu0 %v501
        %v1388 = vpop.f32.mrb[0].mxu0
        %v1389 = vadd.f32 %v1228, %v1388
        %v1390 = vpop.f32.mrb[0].mxu0
        %v1391 = vpop.f32.mrb[0].mxu0
        %v1392 = vadd.f32 %v1231, %v1391
        %v1393 = vpop.f32.mrb[0].mxu0
        %1394 = vmatprep.mubr.bf16.mxu0 %v395
        %1395 = vmatmul.mubr.bf16.gmra.mrb[0].mxu0 %v502
        %v1396 = vpop.f32.mrb[0].mxu0
        %v1397 = vadd.f32 %v1236, %v1396
        %v1398 = vpop.f32.mrb[0].mxu0
        %v1399 = vpop.f32.mrb[0].mxu0
        %v1400 = vadd.f32 %v1239, %v1399
        %v1401 = vpop.f32.mrb[0].mxu0
        %1402 = vmatprep.mubr.bf16.mxu0 %v396
        %1403 = vmatmul.mubr.bf16.gmra.mrb[0].mxu0 %v503
        %v1404 = vpop.f32.mrb[0].mxu0
        %v1405 = vadd.f32 %v1244, %v1404
        %v1406 = vpop.f32.mrb[0].mxu0
        %v1407 = vpop.f32.mrb[0].mxu0
        %v1408 = vadd.f32 %v1247, %v1407
        %v1409 = vpop.f32.mrb[0].mxu0
        %1410 = vdwg.mxu0
        %1411 = vmatprep.subr.bf16.mxu0 0
        %1412 = vmatpush1.bf16.msra.mxu0 %v977
        %1413 = vmatprep.subr.bf16.mxu0 0
        %1414 = vmatpush1.bf16.msra.mxu0 %v978
        %1415 = vmatprep.subr.bf16.mxu0 0
        %1416 = vmatpush1.bf16.msra.mxu0 %v979
        %1417 = vmatprep.subr.bf16.mxu0 0
        %1418 = vmatpush1.bf16.msra.mxu0 %v980
        %1419 = vmatprep.subr.bf16.mxu0 0
        %1420 = vmatpush1.bf16.msra.mxu0 %v981
        %1421 = vmatprep.subr.bf16.mxu0 0
        %1422 = vmatpush1.bf16.msra.mxu0 %v982
        %1423 = vmatprep.subr.bf16.mxu0 0
        %1424 = vmatpush1.bf16.msra.mxu0 %v983
        %1425 = vmatprep.subr.bf16.mxu0 0
        %1426 = vmatpush1.bf16.msra.mxu0 %v984
        %1427 = vmatprep.subr.bf16.mxu0 0
        %1428 = vmatpush1.bf16.msra.mxu0 %v985
        %1429 = vmatprep.subr.bf16.mxu0 0
        %1430 = vmatpush1.bf16.msra.mxu0 %v986
        %1431 = vmatprep.subr.bf16.mxu0 0
        %1432 = vmatpush1.bf16.msra.mxu0 %v987
        %1433 = vmatprep.subr.bf16.mxu0 0
        %1434 = vmatpush1.bf16.msra.mxu0 %v988
        %1435 = vmatprep.subr.bf16.mxu0 0
        %1436 = vmatpush1.bf16.msra.mxu0 %v989
        %1437 = vmatprep.subr.bf16.mxu0 0
        %1438 = vmatpush1.bf16.msra.mxu0 %v990
        %1439 = vmatprep.subr.bf16.mxu0 0
        %1440 = vmatpush1.bf16.msra.mxu0 %v991
        %1441 = vmatprep.subr.bf16.mxu0 0
        %1442 = vmatpush1.bf16.msra.mxu0 %v992
        %1443 = vmatprep.mubr.bf16.mxu0 %v489
        %1444 = vmatmul.mubr.bf16.gmra.mrb[0].mxu0 %v435
        %v1445 = vpop.f32.mrb[0].mxu0
        %v1446 = vadd.f32 %v1285, %v1445
        %v1447 = vpop.f32.mrb[0].mxu0
        %v1448 = vpop.f32.mrb[0].mxu0
        %v1449 = vadd.f32 %v1288, %v1448
        %v1450 = vpop.f32.mrb[0].mxu0
        %1451 = vmatprep.mubr.bf16.mxu0 %v490
        %1452 = vmatmul.mubr.bf16.gmra.mrb[0].mxu0 %v436
        %v1453 = vpop.f32.mrb[0].mxu0
        %v1454 = vadd.f32 %v1293, %v1453
        %v1455 = vpop.f32.mrb[0].mxu0
        %v1456 = vpop.f32.mrb[0].mxu0
        %v1457 = vadd.f32 %v1296, %v1456
        %v1458 = vpop.f32.mrb[0].mxu0
        %1459 = vmatprep.mubr.bf16.mxu0 %v491
        %1460 = vmatmul.mubr.bf16.gmra.mrb[0].mxu0 %v437
        %v1461 = vpop.f32.mrb[0].mxu0
        %v1462 = vadd.f32 %v1301, %v1461
        %v1463 = vpop.f32.mrb[0].mxu0
        %v1464 = vpop.f32.mrb[0].mxu0
        %v1465 = vadd.f32 %v1304, %v1464
        %v1466 = vpop.f32.mrb[0].mxu0
        %1467 = vmatprep.mubr.bf16.mxu0 %v492
        %1468 = vmatmul.mubr.bf16.gmra.mrb[0].mxu0 %v438
        %v1469 = vpop.f32.mrb[0].mxu0
        %v1470 = vadd.f32 %v1309, %v1469
        %v1471 = vpop.f32.mrb[0].mxu0
        %v1472 = vpop.f32.mrb[0].mxu0
        %v1473 = vadd.f32 %v1312, %v1472
        %v1474 = vpop.f32.mrb[0].mxu0
        %1475 = vmatprep.mubr.bf16.mxu0 %v493
        %1476 = vmatmul.mubr.bf16.gmra.mrb[0].mxu0 %v439
        %v1477 = vpop.f32.mrb[0].mxu0
        %v1478 = vadd.f32 %v1317, %v1477
        %v1479 = vpop.f32.mrb[0].mxu0
        %v1480 = vpop.f32.mrb[0].mxu0
        %v1481 = vadd.f32 %v1320, %v1480
        %v1482 = vpop.f32.mrb[0].mxu0
        %1483 = vmatprep.mubr.bf16.mxu0 %v494
        %1484 = vmatmul.mubr.bf16.gmra.mrb[0].mxu0 %v440
        %v1485 = vpop.f32.mrb[0].mxu0
        %v1486 = vadd.f32 %v1325, %v1485
        %v1487 = vpop.f32.mrb[0].mxu0
        %v1488 = vpop.f32.mrb[0].mxu0
        %v1489 = vadd.f32 %v1328, %v1488
        %v1490 = vpop.f32.mrb[0].mxu0
        %1491 = vmatprep.mubr.bf16.mxu0 %v495
        %1492 = vmatmul.mubr.bf16.gmra.mrb[0].mxu0 %v441
        %v1493 = vpop.f32.mrb[0].mxu0
        %v1494 = vadd.f32 %v1333, %v1493
        %v1495 = vpop.f32.mrb[0].mxu0
        %v1496 = vpop.f32.mrb[0].mxu0
        %v1497 = vadd.f32 %v1336, %v1496
        %v1498 = vpop.f32.mrb[0].mxu0
        %1499 = vmatprep.mubr.bf16.mxu0 %v496
        %1500 = vmatmul.mubr.bf16.gmra.mrb[0].mxu0 %v442
        %v1501 = vpop.f32.mrb[0].mxu0
        %v1502 = vadd.f32 %v1341, %v1501
        %v1503 = vpop.f32.mrb[0].mxu0
        %v1504 = vpop.f32.mrb[0].mxu0
        %v1505 = vadd.f32 %v1344, %v1504
        %v1506 = vpop.f32.mrb[0].mxu0
        %1507 = vmatprep.mubr.bf16.mxu0 %v497
        %1508 = vmatmul.mubr.bf16.gmra.mrb[0].mxu0 %v443
        %v1509 = vpop.f32.mrb[0].mxu0
        %v1510 = vadd.f32 %v1349, %v1509
        %v1511 = vpop.f32.mrb[0].mxu0
        %v1512 = vpop.f32.mrb[0].mxu0
        %v1513 = vadd.f32 %v1352, %v1512
        %v1514 = vpop.f32.mrb[0].mxu0
        %1515 = vmatprep.mubr.bf16.mxu0 %v498
        %1516 = vmatmul.mubr.bf16.gmra.mrb[0].mxu0 %v444
        %v1517 = vpop.f32.mrb[0].mxu0
        %v1518 = vadd.f32 %v1357, %v1517
        %v1519 = vpop.f32.mrb[0].mxu0
        %v1520 = vpop.f32.mrb[0].mxu0
        %v1521 = vadd.f32 %v1360, %v1520
        %v1522 = vpop.f32.mrb[0].mxu0
        %1523 = vmatprep.mubr.bf16.mxu0 %v499
        %1524 = vmatmul.mubr.bf16.gmra.mrb[0].mxu0 %v445
        %v1525 = vpop.f32.mrb[0].mxu0
        %v1526 = vadd.f32 %v1365, %v1525
        %v1527 = vpop.f32.mrb[0].mxu0
        %v1528 = vpop.f32.mrb[0].mxu0
        %v1529 = vadd.f32 %v1368, %v1528
        %v1530 = vpop.f32.mrb[0].mxu0
        %1531 = vmatprep.mubr.bf16.mxu0 %v500
        %1532 = vmatmul.mubr.bf16.gmra.mrb[0].mxu0 %v446
        %v1533 = vpop.f32.mrb[0].mxu0
        %v1534 = vadd.f32 %v1373, %v1533
        %v1535 = vpop.f32.mrb[0].mxu0
        %v1536 = vpop.f32.mrb[0].mxu0
        %v1537 = vadd.f32 %v1376, %v1536
        %v1538 = vpop.f32.mrb[0].mxu0
        %1539 = vmatprep.mubr.bf16.mxu0 %v501
        %1540 = vmatmul.mubr.bf16.gmra.mrb[0].mxu0 %v447
        %v1541 = vpop.f32.mrb[0].mxu0
        %v1542 = vadd.f32 %v1381, %v1541
        %v1543 = vpop.f32.mrb[0].mxu0
        %v1544 = vpop.f32.mrb[0].mxu0
        %v1545 = vadd.f32 %v1384, %v1544
        %v1546 = vpop.f32.mrb[0].mxu0
        %1547 = vmatprep.mubr.bf16.mxu0 %v502
        %1548 = vmatmul.mubr.bf16.gmra.mrb[0].mxu0 %v448
        %v1549 = vpop.f32.mrb[0].mxu0
        %v1550 = vadd.f32 %v1389, %v1549
        %v1551 = vpop.f32.mrb[0].mxu0
        %v1552 = vpop.f32.mrb[0].mxu0
        %v1553 = vadd.f32 %v1392, %v1552
        %v1554 = vpop.f32.mrb[0].mxu0
        %1555 = vmatprep.mubr.bf16.mxu0 %v503
        %1556 = vmatmul.mubr.bf16.gmra.mrb[0].mxu0 %v449
        %v1557 = vpop.f32.mrb[0].mxu0
        %v1558 = vadd.f32 %v1397, %v1557
        %v1559 = vpop.f32.mrb[0].mxu0
        %v1560 = vpop.f32.mrb[0].mxu0
        %v1561 = vadd.f32 %v1400, %v1560
        %v1562 = vpop.f32.mrb[0].mxu0
        %1563 = vmatprep.mubr.bf16.mxu0 %v504
        %1564 = vmatmul.mubr.bf16.gmra.mrb[0].mxu0 %v450
        %v1565 = vpop.f32.mrb[0].mxu0
        %v1566 = vadd.f32 %v1405, %v1565
        %v1567 = vpop.f32.mrb[0].mxu0
        %v1568 = vpop.f32.mrb[0].mxu0
        %v1569 = vadd.f32 %v1408, %v1568
        %v1570 = vpop.f32.mrb[0].mxu0
        %1571 = vdwg.mxu0
        %1572 = vmatprep.subr.bf16.mxu0 0
        %1573 = vmatpush1.bf16.msra.mxu0 %v993
        %1574 = vmatprep.subr.bf16.mxu0 0
        %1575 = vmatpush1.bf16.msra.mxu0 %v994
        %1576 = vmatprep.subr.bf16.mxu0 0
        %1577 = vmatpush1.bf16.msra.mxu0 %v995
        %1578 = vmatprep.subr.bf16.mxu0 0
        %1579 = vmatpush1.bf16.msra.mxu0 %v996
        %1580 = vmatprep.subr.bf16.mxu0 0
        %1581 = vmatpush1.bf16.msra.mxu0 %v997
        %1582 = vmatprep.subr.bf16.mxu0 0
        %1583 = vmatpush1.bf16.msra.mxu0 %v998
        %1584 = vmatprep.subr.bf16.mxu0 0
        %1585 = vmatpush1.bf16.msra.mxu0 %v999
        %1586 = vmatprep.subr.bf16.mxu0 0
        %1587 = vmatpush1.bf16.msra.mxu0 %v1000
        %1588 = vmatprep.subr.bf16.mxu0 0
        %1589 = vmatpush1.bf16.msra.mxu0 %v1001
        %1590 = vmatprep.subr.bf16.mxu0 0
        %1591 = vmatpush1.bf16.msra.mxu0 %v1002
        %1592 = vmatprep.subr.bf16.mxu0 0
        %1593 = vmatpush1.bf16.msra.mxu0 %v1003
        %1594 = vmatprep.subr.bf16.mxu0 0
        %1595 = vmatpush1.bf16.msra.mxu0 %v1004
        %1596 = vmatprep.subr.bf16.mxu0 0
        %1597 = vmatpush1.bf16.msra.mxu0 %v1005
        %1598 = vmatprep.subr.bf16.mxu0 0
        %1599 = vmatpush1.bf16.msra.mxu0 %v1006
        %1600 = vmatprep.subr.bf16.mxu0 0
        %1601 = vmatpush1.bf16.msra.mxu0 %v1007
        %1602 = vmatprep.subr.bf16.mxu0 0
        %1603 = vmatpush1.bf16.msra.mxu0 %v1008
        %1604 = vmatprep.mubr.bf16.mxu0 %v436
        %1605 = vmatmul.mubr.bf16.gmra.mrb[0].mxu0 %v382
        %v1606 = vpop.f32.mrb[0].mxu0
        %v1607 = vadd.f32 %v1446, %v1606
        %v1608 = vpop.f32.mrb[0].mxu0
        %v1609 = vpop.f32.mrb[0].mxu0
        %v1610 = vadd.f32 %v1449, %v1609
        %v1611 = vpop.f32.mrb[0].mxu0
        %1612 = vmatprep.mubr.bf16.mxu0 %v437
        %1613 = vmatmul.mubr.bf16.gmra.mrb[0].mxu0 %v383
        %v1614 = vpop.f32.mrb[0].mxu0
        %v1615 = vadd.f32 %v1454, %v1614
        %v1616 = vpop.f32.mrb[0].mxu0
        %v1617 = vpop.f32.mrb[0].mxu0
        %v1618 = vadd.f32 %v1457, %v1617
        %v1619 = vpop.f32.mrb[0].mxu0
        %1620 = vmatprep.mubr.bf16.mxu0 %v438
        %1621 = vmatmul.mubr.bf16.gmra.mrb[0].mxu0 %v384
        %v1622 = vpop.f32.mrb[0].mxu0
        %v1623 = vadd.f32 %v1462, %v1622
        %v1624 = vpop.f32.mrb[0].mxu0
        %v1625 = vpop.f32.mrb[0].mxu0
        %v1626 = vadd.f32 %v1465, %v1625
        %v1627 = vpop.f32.mrb[0].mxu0
        %1628 = vmatprep.mubr.bf16.mxu0 %v439
        %1629 = vmatmul.mubr.bf16.gmra.mrb[0].mxu0 %v385
        %v1630 = vpop.f32.mrb[0].mxu0
        %v1631 = vadd.f32 %v1470, %v1630
        %v1632 = vpop.f32.mrb[0].mxu0
        %v1633 = vpop.f32.mrb[0].mxu0
        %v1634 = vadd.f32 %v1473, %v1633
        %v1635 = vpop.f32.mrb[0].mxu0
        %1636 = vmatprep.mubr.bf16.mxu0 %v440
        %1637 = vmatmul.mubr.bf16.gmra.mrb[0].mxu0 %v386
        %v1638 = vpop.f32.mrb[0].mxu0
        %v1639 = vadd.f32 %v1478, %v1638
        %v1640 = vpop.f32.mrb[0].mxu0
        %v1641 = vpop.f32.mrb[0].mxu0
        %v1642 = vadd.f32 %v1481, %v1641
        %v1643 = vpop.f32.mrb[0].mxu0
        %1644 = vmatprep.mubr.bf16.mxu0 %v441
        %1645 = vmatmul.mubr.bf16.gmra.mrb[0].mxu0 %v387
        %v1646 = vpop.f32.mrb[0].mxu0
        %v1647 = vadd.f32 %v1486, %v1646
        %v1648 = vpop.f32.mrb[0].mxu0
        %v1649 = vpop.f32.mrb[0].mxu0
        %v1650 = vadd.f32 %v1489, %v1649
        %v1651 = vpop.f32.mrb[0].mxu0
        %1652 = vmatprep.mubr.bf16.mxu0 %v442
        %1653 = vmatmul.mubr.bf16.gmra.mrb[0].mxu0 %v388
        %v1654 = vpop.f32.mrb[0].mxu0
        %v1655 = vadd.f32 %v1494, %v1654
        %v1656 = vpop.f32.mrb[0].mxu0
        %v1657 = vpop.f32.mrb[0].mxu0
        %v1658 = vadd.f32 %v1497, %v1657
        %v1659 = vpop.f32.mrb[0].mxu0
        %1660 = vmatprep.mubr.bf16.mxu0 %v443
        %1661 = vmatmul.mubr.bf16.gmra.mrb[0].mxu0 %v389
        %v1662 = vpop.f32.mrb[0].mxu0
        %v1663 = vadd.f32 %v1502, %v1662
        %v1664 = vpop.f32.mrb[0].mxu0
        %v1665 = vpop.f32.mrb[0].mxu0
        %v1666 = vadd.f32 %v1505, %v1665
        %v1667 = vpop.f32.mrb[0].mxu0
        %1668 = vmatprep.mubr.bf16.mxu0 %v444
        %1669 = vmatmul.mubr.bf16.gmra.mrb[0].mxu0 %v390
        %v1670 = vpop.f32.mrb[0].mxu0
        %v1671 = vadd.f32 %v1510, %v1670
        %v1672 = vpop.f32.mrb[0].mxu0
        %v1673 = vpop.f32.mrb[0].mxu0
        %v1674 = vadd.f32 %v1513, %v1673
        %v1675 = vpop.f32.mrb[0].mxu0
        %1676 = vmatprep.mubr.bf16.mxu0 %v445
        %1677 = vmatmul.mubr.bf16.gmra.mrb[0].mxu0 %v391
        %v1678 = vpop.f32.mrb[0].mxu0
        %v1679 = vadd.f32 %v1518, %v1678
        %v1680 = vpop.f32.mrb[0].mxu0
        %v1681 = vpop.f32.mrb[0].mxu0
        %v1682 = vadd.f32 %v1521, %v1681
        %v1683 = vpop.f32.mrb[0].mxu0
        %1684 = vmatprep.mubr.bf16.mxu0 %v446
        %1685 = vmatmul.mubr.bf16.gmra.mrb[0].mxu0 %v392
        %v1686 = vpop.f32.mrb[0].mxu0
        %v1687 = vadd.f32 %v1526, %v1686
        %v1688 = vpop.f32.mrb[0].mxu0
        %v1689 = vpop.f32.mrb[0].mxu0
        %v1690 = vadd.f32 %v1529, %v1689
        %v1691 = vpop.f32.mrb[0].mxu0
        %1692 = vmatprep.mubr.bf16.mxu0 %v447
        %1693 = vmatmul.mubr.bf16.gmra.mrb[0].mxu0 %v393
        %v1694 = vpop.f32.mrb[0].mxu0
        %v1695 = vadd.f32 %v1534, %v1694
        %v1696 = vpop.f32.mrb[0].mxu0
        %v1697 = vpop.f32.mrb[0].mxu0
        %v1698 = vadd.f32 %v1537, %v1697
        %v1699 = vpop.f32.mrb[0].mxu0
        %1700 = vmatprep.mubr.bf16.mxu0 %v448
        %1701 = vmatmul.mubr.bf16.gmra.mrb[0].mxu0 %v394
        %v1702 = vpop.f32.mrb[0].mxu0
        %v1703 = vadd.f32 %v1542, %v1702
        %v1704 = vpop.f32.mrb[0].mxu0
        %v1705 = vpop.f32.mrb[0].mxu0
        %v1706 = vadd.f32 %v1545, %v1705
        %v1707 = vpop.f32.mrb[0].mxu0
        %1708 = vmatprep.mubr.bf16.mxu0 %v449
        %1709 = vmatmul.mubr.bf16.gmra.mrb[0].mxu0 %v395
        %v1710 = vpop.f32.mrb[0].mxu0
        %v1711 = vadd.f32 %v1550, %v1710
        %v1712 = vpop.f32.mrb[0].mxu0
        %v1713 = vpop.f32.mrb[0].mxu0
        %v1714 = vadd.f32 %v1553, %v1713
        %v1715 = vpop.f32.mrb[0].mxu0
        %1716 = vmatprep.mubr.bf16.mxu0 %v450
        %1717 = vmatmul.mubr.bf16.gmra.mrb[0].mxu0 %v396
        %v1718 = vpop.f32.mrb[0].mxu0
        %v1719 = vadd.f32 %v1558, %v1718
        %v1720 = vpop.f32.mrb[0].mxu0
        %v1721 = vpop.f32.mrb[0].mxu0
        %v1722 = vadd.f32 %v1561, %v1721
        %v1723 = vpop.f32.mrb[0].mxu0
        %1724 = vmatprep.mubr.bf16.mxu0 %v451
        %1725 = vmatmul.mubr.bf16.gmra.mrb[0].mxu0 %v397
        %v1726 = vpop.f32.mrb[0].mxu0
        %v1727 = vadd.f32 %v1566, %v1726
        %v1728 = vpop.f32.mrb[0].mxu0
        %v1729 = vpop.f32.mrb[0].mxu0
        %v1730 = vadd.f32 %v1569, %v1729
        %v1731 = vpop.f32.mrb[0].mxu0
        %1732 = vdwg.mxu0
        %1733 = vmatprep.subr.bf16.mxu0 0
        %1734 = vmatpush1.bf16.msra.mxu0 %v1009
        %1735 = vmatprep.subr.bf16.mxu0 0
        %1736 = vmatpush1.bf16.msra.mxu0 %v1010
        %1737 = vmatprep.subr.bf16.mxu0 0
        %1738 = vmatpush1.bf16.msra.mxu0 %v1011
        %1739 = vmatprep.subr.bf16.mxu0 0
        %1740 = vmatpush1.bf16.msra.mxu0 %v1012
        %1741 = vmatprep.subr.bf16.mxu0 0
        %1742 = vmatpush1.bf16.msra.mxu0 %v1013
        %1743 = vmatprep.subr.bf16.mxu0 0
        %1744 = vmatpush1.bf16.msra.mxu0 %v1014
        %1745 = vmatprep.subr.bf16.mxu0 0
        %1746 = vmatpush1.bf16.msra.mxu0 %v1015
        %1747 = vmatprep.subr.bf16.mxu0 0
        %1748 = vmatpush1.bf16.msra.mxu0 %v1016
        %1749 = vmatprep.subr.bf16.mxu0 0
        %1750 = vmatpush1.bf16.msra.mxu0 0
        %1751 = vmatprep.subr.bf16.mxu0 0
        %1752 = vmatpush1.bf16.msra.mxu0 0
        %1753 = vmatprep.subr.bf16.mxu0 0
        %1754 = vmatpush1.bf16.msra.mxu0 0
        %1755 = vmatprep.subr.bf16.mxu0 0
        %1756 = vmatpush1.bf16.msra.mxu0 0
        %1757 = vmatprep.subr.bf16.mxu0 0
        %1758 = vmatpush1.bf16.msra.mxu0 0
        %1759 = vmatprep.subr.bf16.mxu0 0
        %1760 = vmatpush1.bf16.msra.mxu0 0
        %1761 = vmatprep.subr.bf16.mxu0 0
        %1762 = vmatpush1.bf16.msra.mxu0 0
        %1763 = vmatprep.subr.bf16.mxu0 0
        %1764 = vmatpush1.bf16.msra.mxu0 0
        %1765 = vmatprep.mubr.bf16.mxu0 0
        %1766 = vmatmul.mubr.bf16.gmra.mrb[0].mxu0 %v490
        %v1767 = vpop.f32.mrb[0].mxu0
        %v1768 = vadd.f32 %v1607, %v1767
        %v1769 = vpop.f32.mrb[0].mxu0
        %v1770 = vpop.f32.mrb[0].mxu0
        %v1771 = vadd.f32 %v1610, %v1770
        %v1772 = vpop.f32.mrb[0].mxu0
        %1773 = vmatprep.mubr.bf16.mxu0 0
        %1774 = vmatmul.mubr.bf16.gmra.mrb[0].mxu0 %v491
        %v1775 = vpop.f32.mrb[0].mxu0
        %v1776 = vadd.f32 %v1615, %v1775
        %v1777 = vpop.f32.mrb[0].mxu0
        %v1778 = vpop.f32.mrb[0].mxu0
        %v1779 = vadd.f32 %v1618, %v1778
        %v1780 = vpop.f32.mrb[0].mxu0
        %1781 = vmatprep.mubr.bf16.mxu0 0
        %1782 = vmatmul.mubr.bf16.gmra.mrb[0].mxu0 %v492
        %v1783 = vpop.f32.mrb[0].mxu0
        %v1784 = vadd.f32 %v1623, %v1783
        %v1785 = vpop.f32.mrb[0].mxu0
        %v1786 = vpop.f32.mrb[0].mxu0
        %v1787 = vadd.f32 %v1626, %v1786
        %v1788 = vpop.f32.mrb[0].mxu0
        %1789 = vmatprep.mubr.bf16.mxu0 0
        %1790 = vmatmul.mubr.bf16.gmra.mrb[0].mxu0 %v493
        %v1791 = vpop.f32.mrb[0].mxu0
        %v1792 = vadd.f32 %v1631, %v1791
        %v1793 = vpop.f32.mrb[0].mxu0
        %v1794 = vpop.f32.mrb[0].mxu0
        %v1795 = vadd.f32 %v1634, %v1794
        %v1796 = vpop.f32.mrb[0].mxu0
        %1797 = vmatprep.mubr.bf16.mxu0 0
        %1798 = vmatmul.mubr.bf16.gmra.mrb[0].mxu0 %v494
        %v1799 = vpop.f32.mrb[0].mxu0
        %v1800 = vadd.f32 %v1639, %v1799
        %v1801 = vpop.f32.mrb[0].mxu0
        %v1802 = vpop.f32.mrb[0].mxu0
        %v1803 = vadd.f32 %v1642, %v1802
        %v1804 = vpop.f32.mrb[0].mxu0
        %1805 = vmatprep.mubr.bf16.mxu0 0
        %1806 = vmatmul.mubr.bf16.gmra.mrb[0].mxu0 %v495
        %v1807 = vpop.f32.mrb[0].mxu0
        %v1808 = vadd.f32 %v1647, %v1807
        %v1809 = vpop.f32.mrb[0].mxu0
        %v1810 = vpop.f32.mrb[0].mxu0
        %v1811 = vadd.f32 %v1650, %v1810
        %v1812 = vpop.f32.mrb[0].mxu0
        %1813 = vmatprep.mubr.bf16.mxu0 0
        %1814 = vmatmul.mubr.bf16.gmra.mrb[0].mxu0 %v496
        %v1815 = vpop.f32.mrb[0].mxu0
        %v1816 = vadd.f32 %v1655, %v1815
        %v1817 = vpop.f32.mrb[0].mxu0
        %v1818 = vpop.f32.mrb[0].mxu0
        %v1819 = vadd.f32 %v1658, %v1818
        %v1820 = vpop.f32.mrb[0].mxu0
        %1821 = vmatprep.mubr.bf16.mxu0 0
        %1822 = vmatmul.mubr.bf16.gmra.mrb[0].mxu0 %v497
        %v1823 = vpop.f32.mrb[0].mxu0
        %v1824 = vadd.f32 %v1663, %v1823
        %v1825 = vpop.f32.mrb[0].mxu0
        %v1826 = vpop.f32.mrb[0].mxu0
        %v1827 = vadd.f32 %v1666, %v1826
        %v1828 = vpop.f32.mrb[0].mxu0
        %1829 = vmatprep.mubr.bf16.mxu0 0
        %1830 = vmatmul.mubr.bf16.gmra.mrb[0].mxu0 %v498
        %v1831 = vpop.f32.mrb[0].mxu0
        %v1832 = vadd.f32 %v1671, %v1831
        %v1833 = vpop.f32.mrb[0].mxu0
        %v1834 = vpop.f32.mrb[0].mxu0
        %v1835 = vadd.f32 %v1674, %v1834
        %v1836 = vpop.f32.mrb[0].mxu0
        %1837 = vmatprep.mubr.bf16.mxu0 0
        %1838 = vmatmul.mubr.bf16.gmra.mrb[0].mxu0 %v499
        %v1839 = vpop.f32.mrb[0].mxu0
        %v1840 = vadd.f32 %v1679, %v1839
        %v1841 = vpop.f32.mrb[0].mxu0
        %v1842 = vpop.f32.mrb[0].mxu0
        %v1843 = vadd.f32 %v1682, %v1842
        %v1844 = vpop.f32.mrb[0].mxu0
        %1845 = vmatprep.mubr.bf16.mxu0 0
        %1846 = vmatmul.mubr.bf16.gmra.mrb[0].mxu0 %v500
        %v1847 = vpop.f32.mrb[0].mxu0
        %v1848 = vadd.f32 %v1687, %v1847
        %v1849 = vpop.f32.mrb[0].mxu0
        %v1850 = vpop.f32.mrb[0].mxu0
        %v1851 = vadd.f32 %v1690, %v1850
        %v1852 = vpop.f32.mrb[0].mxu0
        %1853 = vmatprep.mubr.bf16.mxu0 0
        %1854 = vmatmul.mubr.bf16.gmra.mrb[0].mxu0 %v501
        %v1855 = vpop.f32.mrb[0].mxu0
        %v1856 = vadd.f32 %v1695, %v1855
        %v1857 = vpop.f32.mrb[0].mxu0
        %v1858 = vpop.f32.mrb[0].mxu0
        %v1859 = vadd.f32 %v1698, %v1858
        %v1860 = vpop.f32.mrb[0].mxu0
        %1861 = vmatprep.mubr.bf16.mxu0 0
        %1862 = vmatmul.mubr.bf16.gmra.mrb[0].mxu0 %v502
        %v1863 = vpop.f32.mrb[0].mxu0
        %v1864 = vadd.f32 %v1703, %v1863
        %v1865 = vpop.f32.mrb[0].mxu0
        %v1866 = vpop.f32.mrb[0].mxu0
        %v1867 = vadd.f32 %v1706, %v1866
        %v1868 = vpop.f32.mrb[0].mxu0
        %1869 = vmatprep.mubr.bf16.mxu0 0
        %1870 = vmatmul.mubr.bf16.gmra.mrb[0].mxu0 %v503
        %v1871 = vpop.f32.mrb[0].mxu0
        %v1872 = vadd.f32 %v1711, %v1871
        %v1873 = vpop.f32.mrb[0].mxu0
        %v1874 = vpop.f32.mrb[0].mxu0
        %v1875 = vadd.f32 %v1714, %v1874
        %v1876 = vpop.f32.mrb[0].mxu0
        %1877 = vmatprep.mubr.bf16.mxu0 0
        %1878 = vmatmul.mubr.bf16.gmra.mrb[0].mxu0 %v504
        %v1879 = vpop.f32.mrb[0].mxu0
        %v1880 = vadd.f32 %v1719, %v1879
        %v1881 = vpop.f32.mrb[0].mxu0
        %v1882 = vpop.f32.mrb[0].mxu0
        %v1883 = vadd.f32 %v1722, %v1882
        %v1884 = vpop.f32.mrb[0].mxu0
        %1885 = vmatprep.mubr.bf16.mxu0 0
        %1886 = vmatmul.mubr.bf16.gmra.mrb[0].mxu0 %v505
        %v1887 = vpop.f32.mrb[0].mxu0
        %v1888 = vadd.f32 %v1727, %v1887
        %v1889 = vpop.f32.mrb[0].mxu0
        %v1890 = vpop.f32.mrb[0].mxu0
        %v1891 = vadd.f32 %v1730, %v1890
        %v1892 = vpop.f32.mrb[0].mxu0
        %1893 = vdwg.mxu0
        %v1894 = vmax.f32 %v1768, 0.0
        %v1895 = vmax.f32 %v1771, 0.0
        %v1896 = vmax.f32 %v1776, 0.0
        %v1897 = vmax.f32 %v1779, 0.0
        %v1898 = vmax.f32 %v1784, 0.0
        %v1899 = vmax.f32 %v1787, 0.0
        %v1900 = vmax.f32 %v1792, 0.0
        %v1901 = vmax.f32 %v1795, 0.0
        %v1902 = vmax.f32 %v1800, 0.0
        %v1903 = vmax.f32 %v1803, 0.0
        %v1904 = vmax.f32 %v1808, 0.0
        %v1905 = vmax.f32 %v1811, 0.0
        %v1906 = vmax.f32 %v1816, 0.0
        %v1907 = vmax.f32 %v1819, 0.0
        %v1908 = vmax.f32 %v1824, 0.0
        %v1909 = vmax.f32 %v1827, 0.0
        %v1910 = vmax.f32 %v1832, 0.0
        %v1911 = vmax.f32 %v1835, 0.0
        %v1912 = vmax.f32 %v1840, 0.0
        %v1913 = vmax.f32 %v1843, 0.0
        %v1914 = vmax.f32 %v1848, 0.0
        %v1915 = vmax.f32 %v1851, 0.0
        %v1916 = vmax.f32 %v1856, 0.0
        %v1917 = vmax.f32 %v1859, 0.0
        %v1918 = vmax.f32 %v1864, 0.0
        %v1919 = vmax.f32 %v1867, 0.0
        %v1920 = vmax.f32 %v1872, 0.0
        %v1921 = vmax.f32 %v1875, 0.0
        %v1922 = vmax.f32 %v1880, 0.0
        %v1923 = vmax.f32 %v1883, 0.0
        %v1924 = vmax.f32 %v1888, 0.0
        %v1925 = vmax.f32 %v1891, 0.0
        %1926 = vst.msk [vmem:[%s310 + $0x1] sm:$0xff] %vm311, %v1894
        %1927 = vst.msk [vmem:[%s310 + $0x9] sm:$0xff] %vm311, %v1895
        %1928 = vst.msk [vmem:[%s310 + $0x19] sm:$0xff] %vm311, %v1896
        %1929 = vst.msk [vmem:[%s310 + $0x21] sm:$0xff] %vm311, %v1897
        %1930 = vst.msk [vmem:[%s310 + $0x31] sm:$0xff] %vm311, %v1898
        %1931 = vst.msk [vmem:[%s310 + $0x39] sm:$0xff] %vm311, %v1899
        %1932 = vst.msk [vmem:[%s310 + $0x49] sm:$0xff] %vm311, %v1900
        %1933 = vst.msk [vmem:[%s310 + $0x51] sm:$0xff] %vm311, %v1901
        %1934 = vst.msk [vmem:[%s310 + $0x61] sm:$0xff] %vm311, %v1902
        %1935 = vst.msk [vmem:[%s310 + $0x69] sm:$0xff] %vm311, %v1903
        %1936 = vst.msk [vmem:[%s310 + $0x79] sm:$0xff] %vm311, %v1904
        %1937 = vst.msk [vmem:[%s310 + $0x81] sm:$0xff] %vm311, %v1905
        %1938 = vst.msk [vmem:[%s310 + $0x91] sm:$0xff] %vm311, %v1906
        %1939 = vst.msk [vmem:[%s310 + $0x99] sm:$0xff] %vm311, %v1907
        %1940 = vst.msk [vmem:[%s310 + $0xa9] sm:$0xff] %vm311, %v1908
        %1941 = vst.msk [vmem:[%s310 + $0xb1] sm:$0xff] %vm311, %v1909
        %1942 = vst.msk [vmem:[%s310 + $0xc1] sm:$0xff] %vm311, %v1910
        %1943 = vst.msk [vmem:[%s310 + $0xc9] sm:$0xff] %vm311, %v1911
        %1944 = vst.msk [vmem:[%s310 + $0xd9] sm:$0xff] %vm311, %v1912
        %1945 = vst.msk [vmem:[%s310 + $0xe1] sm:$0xff] %vm311, %v1913
        %1946 = vst.msk [vmem:[%s310 + $0xf1] sm:$0xff] %vm311, %v1914
        %1947 = vst.msk [vmem:[%s310 + $0xf9] sm:$0xff] %vm311, %v1915
        %1948 = vst.msk [vmem:[%s310 + $0x109] sm:$0xff] %vm311, %v1916
        %1949 = vst.msk [vmem:[%s310 + $0x111] sm:$0xff] %vm311, %v1917
        %1950 = vst.msk [vmem:[%s310 + $0x121] sm:$0xff] %vm311, %v1918
        %1951 = vst.msk [vmem:[%s310 + $0x129] sm:$0xff] %vm311, %v1919
        %1952 = vst.msk [vmem:[%s310 + $0x139] sm:$0xff] %vm311, %v1920
        %1953 = vst.msk [vmem:[%s310 + $0x141] sm:$0xff] %vm311, %v1921
        %1954 = vst.msk [vmem:[%s310 + $0x151] sm:$0xff] %vm311, %v1922
        %1955 = vst.msk [vmem:[%s310 + $0x159] sm:$0xff] %vm311, %v1923
        %1956 = vst.msk [vmem:[%s310 + $0x169] sm:$0xff] %vm311, %v1924
        %1957 = vst.msk [vmem:[%s310 + $0x171] sm:$0xff] %vm311, %v1925
        %v1958 = vld [vmem:[#allocation2] sm:$0xff]
        %v1959 = vld [vmem:[#allocation2 + $0x8] sm:$0xff]
        %v1960 = vld [vmem:[#allocation2 + $0x18] sm:$0xff]
        %v1961 = vld [vmem:[#allocation2 + $0x20] sm:$0xff]
        %v1962 = vld [vmem:[#allocation2 + $0x30] sm:$0xff]
        %v1963 = vld [vmem:[#allocation2 + $0x38] sm:$0xff]
        %v1964 = vld [vmem:[#allocation2 + $0x48] sm:$0xff]
        %v1965 = vld [vmem:[#allocation2 + $0x50] sm:$0xff]
        %v1966 = vld [vmem:[#allocation2 + $0x60] sm:$0xff]
        %v1967 = vld [vmem:[#allocation2 + $0x68] sm:$0xff]
        %v1968 = vld [vmem:[#allocation2 + $0x78] sm:$0xff]
        %v1969 = vld [vmem:[#allocation2 + $0x80] sm:$0xff]
        %v1970 = vld [vmem:[#allocation2 + $0x90] sm:$0xff]
        %v1971 = vld [vmem:[#allocation2 + $0x98] sm:$0xff]
        %v1972 = vld [vmem:[#allocation2 + $0xa8] sm:$0xff]
        %v1973 = vld [vmem:[#allocation2 + $0xb0] sm:$0xff]
        %v1974 = vld [vmem:[#allocation2 + $0xc0] sm:$0xff]
        %v1975 = vld [vmem:[#allocation2 + $0xc8] sm:$0xff]
        %v1976 = vld [vmem:[#allocation2 + $0xd8] sm:$0xff]
        %v1977 = vld [vmem:[#allocation2 + $0xe0] sm:$0xff]
        %v1978 = vld [vmem:[#allocation2 + $0xf0] sm:$0xff]
        %v1979 = vld [vmem:[#allocation2 + $0xf8] sm:$0xff]
        %v1980 = vld [vmem:[#allocation2 + $0x108] sm:$0xff]
        %v1981 = vld [vmem:[#allocation2 + $0x110] sm:$0xff]
        %v1982 = vld [vmem:[#allocation2 + $0x120] sm:$0xff]
        %v1983 = vld [vmem:[#allocation2 + $0x128] sm:$0xff]
        %v1984 = vld [vmem:[#allocation2 + $0x138] sm:$0xff]
        %v1985 = vld [vmem:[#allocation2 + $0x140] sm:$0xff]
        %v1986 = vld [vmem:[#allocation2 + $0x150] sm:$0xff]
        %v1987 = vld [vmem:[#allocation2 + $0x158] sm:$0xff]
        %v1988 = vld [vmem:[#allocation2 + $0x168] sm:$0xff]
        %v1989 = vld [vmem:[#allocation2 + $0x170] sm:$0xff]
        %v1990 = vld [vmem:[#allocation2 + $0x180] sm:$0xff]
        %v1991 = vld [vmem:[#allocation2 + $0x188] sm:$0xff]
        %v1992 = vld [vmem:[#allocation2 + $0x198] sm:$0xff]
        %v1993 = vld [vmem:[#allocation2 + $0x1a0] sm:$0xff]
        %v1994 = vpack.c.bf16 %v1959, %v1958
        %v1995 = vpack.c.bf16 %v1961, %v1960
        %v1996 = vpack.c.bf16 %v1963, %v1962
        %v1997 = vpack.c.bf16 %v1965, %v1964
        %v1998 = vpack.c.bf16 %v1967, %v1966
        %v1999 = vpack.c.bf16 %v1969, %v1968
        %v2000 = vpack.c.bf16 %v1971, %v1970
        %v2001 = vpack.c.bf16 %v1973, %v1972
        %v2002 = vpack.c.bf16 %v1975, %v1974
        %v2003 = vpack.c.bf16 %v1977, %v1976
        %v2004 = vpack.c.bf16 %v1979, %v1978
        %v2005 = vpack.c.bf16 %v1981, %v1980
        %v2006 = vpack.c.bf16 %v1983, %v1982
        %v2007 = vpack.c.bf16 %v1985, %v1984
        %v2008 = vpack.c.bf16 %v1987, %v1986
        %v2009 = vpack.c.bf16 %v1989, %v1988
        %v2010 = vpack.c.bf16 %v1991, %v1990
        %v2011 = vpack.c.bf16 %v1993, %v1992
        %v2012 = vld [vmem:[#allocation2 + $0x1] sm:$0xff]
        %v2013 = vld [vmem:[#allocation2 + $0x9] sm:$0xff]
        %v2014 = vld [vmem:[#allocation2 + $0x19] sm:$0xff]
        %v2015 = vld [vmem:[#allocation2 + $0x21] sm:$0xff]
        %v2016 = vld [vmem:[#allocation2 + $0x31] sm:$0xff]
        %v2017 = vld [vmem:[#allocation2 + $0x39] sm:$0xff]
        %v2018 = vld [vmem:[#allocation2 + $0x49] sm:$0xff]
        %v2019 = vld [vmem:[#allocation2 + $0x51] sm:$0xff]
        %v2020 = vld [vmem:[#allocation2 + $0x61] sm:$0xff]
        %v2021 = vld [vmem:[#allocation2 + $0x69] sm:$0xff]
        %v2022 = vld [vmem:[#allocation2 + $0x79] sm:$0xff]
        %v2023 = vld [vmem:[#allocation2 + $0x81] sm:$0xff]
        %v2024 = vld [vmem:[#allocation2 + $0x91] sm:$0xff]
        %v2025 = vld [vmem:[#allocation2 + $0x99] sm:$0xff]
        %v2026 = vld [vmem:[#allocation2 + $0xa9] sm:$0xff]
        %v2027 = vld [vmem:[#allocation2 + $0xb1] sm:$0xff]
        %v2028 = vld [vmem:[#allocation2 + $0xc1] sm:$0xff]
        %v2029 = vld [vmem:[#allocation2 + $0xc9] sm:$0xff]
        %v2030 = vld [vmem:[#allocation2 + $0xd9] sm:$0xff]
        %v2031 = vld [vmem:[#allocation2 + $0xe1] sm:$0xff]
        %v2032 = vld [vmem:[#allocation2 + $0xf1] sm:$0xff]
        %v2033 = vld [vmem:[#allocation2 + $0xf9] sm:$0xff]
        %v2034 = vld [vmem:[#allocation2 + $0x109] sm:$0xff]
        %v2035 = vld [vmem:[#allocation2 + $0x111] sm:$0xff]
        %v2036 = vld [vmem:[#allocation2 + $0x121] sm:$0xff]
        %v2037 = vld [vmem:[#allocation2 + $0x129] sm:$0xff]
        %v2038 = vld [vmem:[#allocation2 + $0x139] sm:$0xff]
        %v2039 = vld [vmem:[#allocation2 + $0x141] sm:$0xff]
        %v2040 = vld [vmem:[#allocation2 + $0x151] sm:$0xff]
        %v2041 = vld [vmem:[#allocation2 + $0x159] sm:$0xff]
        %v2042 = vld [vmem:[#allocation2 + $0x169] sm:$0xff]
        %v2043 = vld [vmem:[#allocation2 + $0x171] sm:$0xff]
        %v2044 = vld [vmem:[#allocation2 + $0x181] sm:$0xff]
        %v2045 = vld [vmem:[#allocation2 + $0x189] sm:$0xff]
        %v2046 = vld [vmem:[#allocation2 + $0x199] sm:$0xff]
        %v2047 = vld [vmem:[#allocation2 + $0x1a1] sm:$0xff]
        %v2048 = vpack.c.bf16 %v2013, %v2012
        %v2049 = vpack.c.bf16 %v2015, %v2014
        %v2050 = vpack.c.bf16 %v2017, %v2016
        %v2051 = vpack.c.bf16 %v2019, %v2018
        %v2052 = vpack.c.bf16 %v2021, %v2020
        %v2053 = vpack.c.bf16 %v2023, %v2022
        %v2054 = vpack.c.bf16 %v2025, %v2024
        %v2055 = vpack.c.bf16 %v2027, %v2026
        %v2056 = vpack.c.bf16 %v2029, %v2028
        %v2057 = vpack.c.bf16 %v2031, %v2030
        %v2058 = vpack.c.bf16 %v2033, %v2032
        %v2059 = vpack.c.bf16 %v2035, %v2034
        %v2060 = vpack.c.bf16 %v2037, %v2036
        %v2061 = vpack.c.bf16 %v2039, %v2038
        %v2062 = vpack.c.bf16 %v2041, %v2040
        %v2063 = vpack.c.bf16 %v2043, %v2042
        %v2064 = vpack.c.bf16 %v2045, %v2044
        %v2065 = vpack.c.bf16 %v2047, %v2046
        %v2066 = vld [vmem:[#allocation2 + $0x2] sm:$0xff]
        %v2067 = vld [vmem:[#allocation2 + $0xa] sm:$0xff]
        %v2068 = vld [vmem:[#allocation2 + $0x1a] sm:$0xff]
        %v2069 = vld [vmem:[#allocation2 + $0x22] sm:$0xff]
        %v2070 = vld [vmem:[#allocation2 + $0x32] sm:$0xff]
        %v2071 = vld [vmem:[#allocation2 + $0x3a] sm:$0xff]
        %v2072 = vld [vmem:[#allocation2 + $0x4a] sm:$0xff]
        %v2073 = vld [vmem:[#allocation2 + $0x52] sm:$0xff]
        %v2074 = vld [vmem:[#allocation2 + $0x62] sm:$0xff]
        %v2075 = vld [vmem:[#allocation2 + $0x6a] sm:$0xff]
        %v2076 = vld [vmem:[#allocation2 + $0x7a] sm:$0xff]
        %v2077 = vld [vmem:[#allocation2 + $0x82] sm:$0xff]
        %v2078 = vld [vmem:[#allocation2 + $0x92] sm:$0xff]
        %v2079 = vld [vmem:[#allocation2 + $0x9a] sm:$0xff]
        %v2080 = vld [vmem:[#allocation2 + $0xaa] sm:$0xff]
        %v2081 = vld [vmem:[#allocation2 + $0xb2] sm:$0xff]
        %v2082 = vld [vmem:[#allocation2 + $0xc2] sm:$0xff]
        %v2083 = vld [vmem:[#allocation2 + $0xca] sm:$0xff]
        %v2084 = vld [vmem:[#allocation2 + $0xda] sm:$0xff]
        %v2085 = vld [vmem:[#allocation2 + $0xe2] sm:$0xff]
        %v2086 = vld [vmem:[#allocation2 + $0xf2] sm:$0xff]
        %v2087 = vld [vmem:[#allocation2 + $0xfa] sm:$0xff]
        %v2088 = vld [vmem:[#allocation2 + $0x10a] sm:$0xff]
        %v2089 = vld [vmem:[#allocation2 + $0x112] sm:$0xff]
        %v2090 = vld [vmem:[#allocation2 + $0x122] sm:$0xff]
        %v2091 = vld [vmem:[#allocation2 + $0x12a] sm:$0xff]
        %v2092 = vld [vmem:[#allocation2 + $0x13a] sm:$0xff]
        %v2093 = vld [vmem:[#allocation2 + $0x142] sm:$0xff]
        %v2094 = vld [vmem:[#allocation2 + $0x152] sm:$0xff]
        %v2095 = vld [vmem:[#allocation2 + $0x15a] sm:$0xff]
        %v2096 = vld [vmem:[#allocation2 + $0x16a] sm:$0xff]
        %v2097 = vld [vmem:[#allocation2 + $0x172] sm:$0xff]
        %v2098 = vld [vmem:[#allocation2 + $0x182] sm:$0xff]
        %v2099 = vld [vmem:[#allocation2 + $0x18a] sm:$0xff]
        %v2100 = vld [vmem:[#allocation2 + $0x19a] sm:$0xff]
        %v2101 = vld [vmem:[#allocation2 + $0x1a2] sm:$0xff]
        %v2102 = vpack.c.bf16 %v2067, %v2066
        %v2103 = vpack.c.bf16 %v2069, %v2068
        %v2104 = vpack.c.bf16 %v2071, %v2070
        %v2105 = vpack.c.bf16 %v2073, %v2072
        %v2106 = vpack.c.bf16 %v2075, %v2074
        %v2107 = vpack.c.bf16 %v2077, %v2076
        %v2108 = vpack.c.bf16 %v2079, %v2078
        %v2109 = vpack.c.bf16 %v2081, %v2080
        %v2110 = vpack.c.bf16 %v2083, %v2082
        %v2111 = vpack.c.bf16 %v2085, %v2084
        %v2112 = vpack.c.bf16 %v2087, %v2086
        %v2113 = vpack.c.bf16 %v2089, %v2088
        %v2114 = vpack.c.bf16 %v2091, %v2090
        %v2115 = vpack.c.bf16 %v2093, %v2092
        %v2116 = vpack.c.bf16 %v2095, %v2094
        %v2117 = vpack.c.bf16 %v2097, %v2096
        %v2118 = vpack.c.bf16 %v2099, %v2098
        %v2119 = vpack.c.bf16 %v2101, %v2100
        %v2120 = vld [vmem:[%s3] sm:$0xf]
        %v2121 = vld [vmem:[%s3 + $0x4] sm:$0xf]
        %v2122 = vld [vmem:[%s3 + $0x8] sm:$0xf]
        %v2123 = vld [vmem:[%s3 + $0xc] sm:$0xf]
        %v2124 = vld [vmem:[%s3 + $0x10] sm:$0xf]
        %v2125 = vld [vmem:[%s3 + $0x14] sm:$0xf]
        %v2126 = vld [vmem:[%s3 + $0x18] sm:$0xf]
        %v2127 = vld [vmem:[%s3 + $0x1c] sm:$0xf]
        %v2128 = vld [vmem:[%s3 + $0x20] sm:$0xf]
        %v2129 = vld [vmem:[%s3 + $0x24] sm:$0xf]
        %v2130 = vld [vmem:[%s3 + $0x28] sm:$0xf]
        %v2131 = vld [vmem:[%s3 + $0x2c] sm:$0xf]
        %v2132 = vld [vmem:[%s3 + $0x30] sm:$0xf]
        %v2133 = vld [vmem:[%s3 + $0x34] sm:$0xf]
        %v2134 = vld [vmem:[%s3 + $0x38] sm:$0xf]
        %v2135 = vld [vmem:[%s3 + $0x3c] sm:$0xf]
        %v2136 = vld [vmem:[%s3 + $0x40] sm:$0xf]
        %v2137 = vld [vmem:[%s3 + $0x44] sm:$0xf]
        %v2138 = vld [vmem:[%s3 + $0x48] sm:$0xf]
        %v2139 = vld [vmem:[%s3 + $0x4c] sm:$0xf]
        %v2140 = vld [vmem:[%s3 + $0x50] sm:$0xf]
        %v2141 = vld [vmem:[%s3 + $0x54] sm:$0xf]
        %v2142 = vld [vmem:[%s3 + $0x58] sm:$0xf]
        %v2143 = vld [vmem:[%s3 + $0x5c] sm:$0xf]
        %v2144 = vld [vmem:[%s3 + $0x60] sm:$0xf]
        %v2145 = vld [vmem:[%s3 + $0x64] sm:$0xf]
        %v2146 = vld [vmem:[%s3 + $0x68] sm:$0xf]
        %v2147 = vld [vmem:[%s3 + $0x6c] sm:$0xf]
        %v2148 = vld [vmem:[%s3 + $0x70] sm:$0xf]
        %v2149 = vld [vmem:[%s3 + $0x74] sm:$0xf]
        %v2150 = vld [vmem:[%s3 + $0x78] sm:$0xf]
        %v2151 = vld [vmem:[%s3 + $0x7c] sm:$0xf]
        %v2152 = vld [vmem:[%s3 + $0x80] sm:$0xf]
        %v2153 = vld [vmem:[%s3 + $0x84] sm:$0xf]
        %v2154 = vld [vmem:[%s3 + $0x88] sm:$0xf]
        %v2155 = vld [vmem:[%s3 + $0x8c] sm:$0xf]
        %v2156 = vld [vmem:[%s3 + $0x90] sm:$0xf]
        %v2157 = vld [vmem:[%s3 + $0x94] sm:$0xf]
        %v2158 = vld [vmem:[%s3 + $0x98] sm:$0xf]
        %v2159 = vld [vmem:[%s3 + $0x9c] sm:$0xf]
        %v2160 = vld [vmem:[%s3 + $0xa0] sm:$0xf]
        %v2161 = vld [vmem:[%s3 + $0xa4] sm:$0xf]
        %v2162 = vld [vmem:[%s3 + $0xa8] sm:$0xf]
        %v2163 = vld [vmem:[%s3 + $0xac] sm:$0xf]
        %v2164 = vld [vmem:[%s3 + $0xb0] sm:$0xf]
        %v2165 = vld [vmem:[%s3 + $0xb4] sm:$0xf]
        %v2166 = vld [vmem:[%s3 + $0xb8] sm:$0xf]
        %v2167 = vld [vmem:[%s3 + $0xbc] sm:$0xf]
        %v2168 = vld [vmem:[%s3 + $0xc0] sm:$0xf]
        %v2169 = vld [vmem:[%s3 + $0xc4] sm:$0xf]
        %v2170 = vld [vmem:[%s3 + $0xc8] sm:$0xf]
        %v2171 = vld [vmem:[%s3 + $0xcc] sm:$0xf]
        %v2172 = vld [vmem:[%s3 + $0xd0] sm:$0xf]
        %v2173 = vld [vmem:[%s3 + $0xd4] sm:$0xf]
        %v2174 = vld [vmem:[%s3 + $0xd8] sm:$0xf]
        %v2175 = vld [vmem:[%s3 + $0xdc] sm:$0xf]
        %v2176 = vld [vmem:[%s3 + $0xe0] sm:$0xf]
        %v2177 = vld [vmem:[%s3 + $0xe4] sm:$0xf]
        %v2178 = vld [vmem:[%s3 + $0xe8] sm:$0xf]
        %v2179 = vld [vmem:[%s3 + $0xec] sm:$0xf]
        %v2180 = vld [vmem:[%s3 + $0xf0] sm:$0xf]
        %v2181 = vld [vmem:[%s3 + $0xf4] sm:$0xf]
        %v2182 = vld [vmem:[%s3 + $0xf8] sm:$0xf]
        %v2183 = vld [vmem:[%s3 + $0xfc] sm:$0xf]
        %v2184 = vld [vmem:[%s3 + $0x100] sm:$0xf]
        %v2185 = vld [vmem:[%s3 + $0x104] sm:$0xf]
        %v2186 = vld [vmem:[%s3 + $0x108] sm:$0xf]
        %v2187 = vld [vmem:[%s3 + $0x10c] sm:$0xf]
        %v2188 = vld [vmem:[%s3 + $0x110] sm:$0xf]
        %v2189 = vld [vmem:[%s3 + $0x114] sm:$0xf]
        %v2190 = vld [vmem:[%s3 + $0x118] sm:$0xf]
        %v2191 = vld [vmem:[%s3 + $0x11c] sm:$0xf]
        %v2192 = vld [vmem:[%s3 + $0x120] sm:$0xf]
        %v2193 = vld [vmem:[%s3 + $0x124] sm:$0xf]
        %v2194 = vld [vmem:[%s3 + $0x128] sm:$0xf]
        %v2195 = vld [vmem:[%s3 + $0x12c] sm:$0xf]
        %v2196 = vld [vmem:[%s3 + $0x130] sm:$0xf]
        %v2197 = vld [vmem:[%s3 + $0x134] sm:$0xf]
        %v2198 = vld [vmem:[%s3 + $0x138] sm:$0xf]
        %v2199 = vld [vmem:[%s3 + $0x13c] sm:$0xf]
        %v2200 = vld [vmem:[%s3 + $0x140] sm:$0xf]
        %v2201 = vld [vmem:[%s3 + $0x144] sm:$0xf]
        %v2202 = vld [vmem:[%s3 + $0x148] sm:$0xf]
        %v2203 = vld [vmem:[%s3 + $0x14c] sm:$0xf]
        %v2204 = vld [vmem:[%s3 + $0x150] sm:$0xf]
        %v2205 = vld [vmem:[%s3 + $0x154] sm:$0xf]
        %v2206 = vld [vmem:[%s3 + $0x158] sm:$0xf]
        %v2207 = vld [vmem:[%s3 + $0x15c] sm:$0xf]
        %v2208 = vld [vmem:[%s3 + $0x160] sm:$0xf]
        %v2209 = vld [vmem:[%s3 + $0x164] sm:$0xf]
        %v2210 = vld [vmem:[%s3 + $0x168] sm:$0xf]
        %v2211 = vld [vmem:[%s3 + $0x16c] sm:$0xf]
        %v2212 = vld [vmem:[%s3 + $0x170] sm:$0xf]
        %v2213 = vld [vmem:[%s3 + $0x174] sm:$0xf]
        %v2214 = vld [vmem:[%s3 + $0x178] sm:$0xf]
        %v2215 = vld [vmem:[%s3 + $0x17c] sm:$0xf]
        %v2216 = vld [vmem:[%s3 + $0x180] sm:$0xf]
        %v2217 = vld [vmem:[%s3 + $0x184] sm:$0xf]
        %v2218 = vld [vmem:[%s3 + $0x188] sm:$0xf]
        %v2219 = vld [vmem:[%s3 + $0x18c] sm:$0xf]
        %v2220 = vld [vmem:[%s3 + $0x190] sm:$0xf]
        %v2221 = vld [vmem:[%s3 + $0x194] sm:$0xf]
        %v2222 = vld [vmem:[%s3 + $0x198] sm:$0xf]
        %v2223 = vld [vmem:[%s3 + $0x19c] sm:$0xf]
        %v2224 = vld [vmem:[%s3 + $0x1a0] sm:$0xf]
        %v2225 = vld [vmem:[%s3 + $0x1a4] sm:$0xf]
        %v2226 = vld [vmem:[%s3 + $0x1a8] sm:$0xf]
        %v2227 = vld [vmem:[%s3 + $0x1ac] sm:$0xf]
        %v2228 = vld [vmem:[%s3 + $0x1b0] sm:$0xf]
        %v2229 = vld [vmem:[%s3 + $0x1b4] sm:$0xf]
        %v2230 = vld [vmem:[%s3 + $0x1b8] sm:$0xf]
        %v2231 = vld [vmem:[%s3 + $0x1bc] sm:$0xf]
        %v2232 = vld [vmem:[%s3 + $0x1c0] sm:$0xf]
        %v2233 = vld [vmem:[%s3 + $0x1c4] sm:$0xf]
        %v2234 = vld [vmem:[%s3 + $0x1c8] sm:$0xf]
        %v2235 = vld [vmem:[%s3 + $0x1cc] sm:$0xf]
        %v2236 = vld [vmem:[%s3 + $0x1d0] sm:$0xf]
        %v2237 = vld [vmem:[%s3 + $0x1d4] sm:$0xf]
        %v2238 = vld [vmem:[%s3 + $0x1d8] sm:$0xf]
        %v2239 = vld [vmem:[%s3 + $0x1dc] sm:$0xf]
        %v2240 = vld [vmem:[%s3 + $0x1e0] sm:$0xf]
        %v2241 = vld [vmem:[%s3 + $0x1e4] sm:$0xf]
        %v2242 = vld [vmem:[%s3 + $0x1e8] sm:$0xf]
        %v2243 = vld [vmem:[%s3 + $0x1ec] sm:$0xf]
        %v2244 = vld [vmem:[%s3 + $0x1f0] sm:$0xf]
        %v2245 = vld [vmem:[%s3 + $0x1f4] sm:$0xf]
        %v2246 = vld [vmem:[%s3 + $0x1f8] sm:$0xf]
        %v2247 = vld [vmem:[%s3 + $0x1fc] sm:$0xf]
        %v2248 = vld [vmem:[%s3 + $0x200] sm:$0xf]
        %v2249 = vld [vmem:[%s3 + $0x204] sm:$0xf]
        %v2250 = vld [vmem:[%s3 + $0x208] sm:$0xf]
        %v2251 = vld [vmem:[%s3 + $0x20c] sm:$0xf]
        %v2252 = vld [vmem:[%s3 + $0x210] sm:$0xf]
        %v2253 = vld [vmem:[%s3 + $0x214] sm:$0xf]
        %v2254 = vld [vmem:[%s3 + $0x218] sm:$0xf]
        %v2255 = vld [vmem:[%s3 + $0x21c] sm:$0xf]
        %v2256 = vld [vmem:[%s3 + $0x220] sm:$0xf]
        %v2257 = vld [vmem:[%s3 + $0x224] sm:$0xf]
        %v2258 = vld [vmem:[%s3 + $0x228] sm:$0xf]
        %v2259 = vld [vmem:[%s3 + $0x22c] sm:$0xf]
        %v2260 = vld [vmem:[%s3 + $0x230] sm:$0xf]
        %v2261 = vld [vmem:[%s3 + $0x234] sm:$0xf]
        %v2262 = vld [vmem:[%s3 + $0x238] sm:$0xf]
        %v2263 = vld [vmem:[%s3 + $0x23c] sm:$0xf]
        %v2264 = vld [vmem:[%s4] sm:$0x1]
        %v2266 = vlaneseq
        %v2267 = vshrl.u32 %v2266, 7
        %v2268 = vsub.s32 0, %v2267
        %v2269 = vrot.slane %v2264, %v2268
        %v2415 = vunpack.c.l.b16 %v2120
        %v2416 = vunpack.c.l.b16 %v2121
        %v2417 = vunpack.c.l.b16 %v2122
        %v2418 = vunpack.c.l.b16 %v2123
        %v2419 = vunpack.c.l.b16 %v2124
        %v2420 = vunpack.c.l.b16 %v2125
        %v2421 = vunpack.c.l.b16 %v2126
        %v2422 = vunpack.c.l.b16 %v2127
        %v2423 = vunpack.c.l.b16 %v2128
        %v2424 = vunpack.c.l.b16 %v2129
        %v2425 = vunpack.c.l.b16 %v2130
        %v2426 = vunpack.c.l.b16 %v2131
        %v2427 = vunpack.c.l.b16 %v2132
        %v2428 = vunpack.c.l.b16 %v2133
        %v2429 = vunpack.c.l.b16 %v2134
        %v2430 = vunpack.c.l.b16 %v2135
        %v2431 = vunpack.c.l.b16 %v2136
        %v2432 = vunpack.c.l.b16 %v2137
        %v2433 = vunpack.c.l.b16 %v2138
        %v2434 = vunpack.c.l.b16 %v2139
        %v2435 = vunpack.c.l.b16 %v2140
        %v2436 = vunpack.c.l.b16 %v2141
        %v2437 = vunpack.c.l.b16 %v2142
        %v2438 = vunpack.c.l.b16 %v2143
        %v2439 = vunpack.c.l.b16 %v2144
        %v2440 = vunpack.c.l.b16 %v2145
        %v2441 = vunpack.c.l.b16 %v2146
        %v2442 = vunpack.c.l.b16 %v2147
        %v2443 = vunpack.c.l.b16 %v2148
        %v2444 = vunpack.c.l.b16 %v2149
        %v2445 = vunpack.c.l.b16 %v2150
        %v2446 = vunpack.c.l.b16 %v2151
        %v2447 = vunpack.c.l.b16 %v2152
        %v2448 = vunpack.c.l.b16 %v2153
        %v2449 = vunpack.c.l.b16 %v2154
        %v2450 = vunpack.c.l.b16 %v2155
        %v2451 = vunpack.c.l.b16 %v2156
        %v2452 = vunpack.c.l.b16 %v2157
        %v2453 = vunpack.c.l.b16 %v2158
        %v2454 = vunpack.c.l.b16 %v2159
        %v2455 = vunpack.c.l.b16 %v2160
        %v2456 = vunpack.c.l.b16 %v2161
        %v2457 = vunpack.c.l.b16 %v2162
        %v2458 = vunpack.c.l.b16 %v2163
        %v2459 = vunpack.c.l.b16 %v2164
        %v2460 = vunpack.c.l.b16 %v2165
        %v2461 = vunpack.c.l.b16 %v2166
        %v2462 = vunpack.c.l.b16 %v2167
        %v2463 = vunpack.c.l.b16 %v2168
        %v2464 = vunpack.c.l.b16 %v2169
        %v2465 = vunpack.c.l.b16 %v2170
        %v2466 = vunpack.c.l.b16 %v2171
        %v2467 = vunpack.c.l.b16 %v2172
        %v2468 = vunpack.c.l.b16 %v2173
        %v2469 = vunpack.c.l.b16 %v2174
        %v2470 = vunpack.c.l.b16 %v2175
        %v2471 = vunpack.c.l.b16 %v2176
        %v2472 = vunpack.c.l.b16 %v2177
        %v2473 = vunpack.c.l.b16 %v2178
        %v2474 = vunpack.c.l.b16 %v2179
        %v2475 = vunpack.c.l.b16 %v2180
        %v2476 = vunpack.c.l.b16 %v2181
        %v2477 = vunpack.c.l.b16 %v2182
        %v2478 = vunpack.c.l.b16 %v2183
        %v2479 = vunpack.c.l.b16 %v2184
        %v2480 = vunpack.c.l.b16 %v2185
        %v2481 = vunpack.c.l.b16 %v2186
        %v2482 = vunpack.c.l.b16 %v2187
        %v2483 = vunpack.c.l.b16 %v2188
        %v2484 = vunpack.c.l.b16 %v2189
        %v2485 = vunpack.c.l.b16 %v2190
        %v2486 = vunpack.c.l.b16 %v2191
        %v2487 = vunpack.c.l.b16 %v2192
        %v2488 = vunpack.c.l.b16 %v2193
        %v2489 = vunpack.c.l.b16 %v2194
        %v2490 = vunpack.c.l.b16 %v2195
        %v2491 = vunpack.c.l.b16 %v2196
        %v2492 = vunpack.c.l.b16 %v2197
        %v2493 = vunpack.c.l.b16 %v2198
        %v2494 = vunpack.c.l.b16 %v2199
        %v2495 = vunpack.c.l.b16 %v2200
        %v2496 = vunpack.c.l.b16 %v2201
        %v2497 = vunpack.c.l.b16 %v2202
        %v2498 = vunpack.c.l.b16 %v2203
        %v2499 = vunpack.c.l.b16 %v2204
        %v2500 = vunpack.c.l.b16 %v2205
        %v2501 = vunpack.c.l.b16 %v2206
        %v2502 = vunpack.c.l.b16 %v2207
        %v2503 = vunpack.c.l.b16 %v2208
        %v2504 = vunpack.c.l.b16 %v2209
        %v2505 = vunpack.c.l.b16 %v2210
        %v2506 = vunpack.c.l.b16 %v2211
        %v2507 = vunpack.c.l.b16 %v2212
        %v2508 = vunpack.c.l.b16 %v2213
        %v2509 = vunpack.c.l.b16 %v2214
        %v2510 = vunpack.c.l.b16 %v2215
        %v2511 = vunpack.c.l.b16 %v2216
        %v2512 = vunpack.c.l.b16 %v2217
        %v2513 = vunpack.c.l.b16 %v2218
        %v2514 = vunpack.c.l.b16 %v2219
        %v2515 = vunpack.c.l.b16 %v2220
        %v2516 = vunpack.c.l.b16 %v2221
        %v2517 = vunpack.c.l.b16 %v2222
        %v2518 = vunpack.c.l.b16 %v2223
        %v2519 = vunpack.c.l.b16 %v2224
        %v2520 = vunpack.c.l.b16 %v2225
        %v2521 = vunpack.c.l.b16 %v2226
        %v2522 = vunpack.c.l.b16 %v2227
        %v2523 = vunpack.c.l.b16 %v2228
        %v2524 = vunpack.c.l.b16 %v2229
        %v2525 = vunpack.c.l.b16 %v2230
        %v2526 = vunpack.c.l.b16 %v2231
        %v2527 = vunpack.c.l.b16 %v2232
        %v2528 = vunpack.c.l.b16 %v2233
        %v2529 = vunpack.c.l.b16 %v2234
        %v2530 = vunpack.c.l.b16 %v2235
        %v2531 = vunpack.c.l.b16 %v2236
        %v2532 = vunpack.c.l.b16 %v2237
        %v2533 = vunpack.c.l.b16 %v2238
        %v2534 = vunpack.c.l.b16 %v2239
        %v2535 = vunpack.c.l.b16 %v2240
        %v2536 = vunpack.c.l.b16 %v2241
        %v2537 = vunpack.c.l.b16 %v2242
        %v2538 = vunpack.c.l.b16 %v2243
        %v2539 = vunpack.c.l.b16 %v2244
        %v2540 = vunpack.c.l.b16 %v2245
        %v2541 = vunpack.c.l.b16 %v2246
        %v2542 = vunpack.c.l.b16 %v2247
        %v2543 = vunpack.c.l.b16 %v2248
        %v2544 = vunpack.c.l.b16 %v2249
        %v2545 = vunpack.c.l.b16 %v2250
        %v2546 = vunpack.c.l.b16 %v2251
        %v2547 = vunpack.c.l.b16 %v2252
        %v2548 = vunpack.c.l.b16 %v2253
        %v2549 = vunpack.c.l.b16 %v2254
        %v2550 = vunpack.c.l.b16 %v2255
        %v2551 = vunpack.c.l.b16 %v2256
        %v2552 = vunpack.c.l.b16 %v2257
        %v2553 = vunpack.c.l.b16 %v2258
        %v2554 = vunpack.c.l.b16 %v2259
        %v2555 = vunpack.c.l.b16 %v2260
        %v2556 = vunpack.c.l.b16 %v2261
        %v2557 = vunpack.c.l.b16 %v2262
        %v2558 = vunpack.c.l.b16 %v2263
        %v2559 = vpack.c.b16 %v2416, %v2415
        %v2560 = vpack.c.b16 %v2418, %v2417
        %v2561 = vpack.c.b16 %v2420, %v2419
        %v2562 = vpack.c.b16 %v2422, %v2421
        %v2563 = vpack.c.b16 %v2424, %v2423
        %v2564 = vpack.c.b16 %v2426, %v2425
        %v2565 = vpack.c.b16 %v2428, %v2427
        %v2566 = vpack.c.b16 %v2430, %v2429
        %v2567 = vpack.c.b16 %v2432, %v2431
        %v2568 = vpack.c.b16 %v2434, %v2433
        %v2569 = vpack.c.b16 %v2436, %v2435
        %v2570 = vpack.c.b16 %v2438, %v2437
        %v2571 = vpack.c.b16 %v2440, %v2439
        %v2572 = vpack.c.b16 %v2442, %v2441
        %v2573 = vpack.c.b16 %v2444, %v2443
        %v2574 = vpack.c.b16 %v2446, %v2445
        %v2575 = vpack.c.b16 %v2448, %v2447
        %v2576 = vpack.c.b16 %v2450, %v2449
        %v2577 = vpack.c.b16 %v2452, %v2451
        %v2578 = vpack.c.b16 %v2454, %v2453
        %v2579 = vpack.c.b16 %v2456, %v2455
        %v2580 = vpack.c.b16 %v2458, %v2457
        %v2581 = vpack.c.b16 %v2460, %v2459
        %v2582 = vpack.c.b16 %v2462, %v2461
        %v2583 = vpack.c.b16 %v2464, %v2463
        %v2584 = vpack.c.b16 %v2466, %v2465
        %v2585 = vpack.c.b16 %v2468, %v2467
        %v2586 = vpack.c.b16 %v2470, %v2469
        %v2587 = vpack.c.b16 %v2472, %v2471
        %v2588 = vpack.c.b16 %v2474, %v2473
        %v2589 = vpack.c.b16 %v2476, %v2475
        %v2590 = vpack.c.b16 %v2478, %v2477
        %v2591 = vpack.c.b16 %v2480, %v2479
        %v2592 = vpack.c.b16 %v2482, %v2481
        %v2593 = vpack.c.b16 %v2484, %v2483
        %v2594 = vpack.c.b16 %v2486, %v2485
        %v2595 = vpack.c.b16 %v2488, %v2487
        %v2596 = vpack.c.b16 %v2490, %v2489
        %v2597 = vpack.c.b16 %v2492, %v2491
        %v2598 = vpack.c.b16 %v2494, %v2493
        %v2599 = vpack.c.b16 %v2496, %v2495
        %v2600 = vpack.c.b16 %v2498, %v2497
        %v2601 = vpack.c.b16 %v2500, %v2499
        %v2602 = vpack.c.b16 %v2502, %v2501
        %v2603 = vpack.c.b16 %v2504, %v2503
        %v2604 = vpack.c.b16 %v2506, %v2505
        %v2605 = vpack.c.b16 %v2508, %v2507
        %v2606 = vpack.c.b16 %v2510, %v2509
        %v2607 = vpack.c.b16 %v2512, %v2511
        %v2608 = vpack.c.b16 %v2514, %v2513
        %v2609 = vpack.c.b16 %v2516, %v2515
        %v2610 = vpack.c.b16 %v2518, %v2517
        %v2611 = vpack.c.b16 %v2520, %v2519
        %v2612 = vpack.c.b16 %v2522, %v2521
        %v2613 = vpack.c.b16 %v2524, %v2523
        %v2614 = vpack.c.b16 %v2526, %v2525
        %v2615 = vpack.c.b16 %v2528, %v2527
        %v2616 = vpack.c.b16 %v2530, %v2529
        %v2617 = vpack.c.b16 %v2532, %v2531
        %v2618 = vpack.c.b16 %v2534, %v2533
        %v2619 = vpack.c.b16 %v2536, %v2535
        %v2620 = vpack.c.b16 %v2538, %v2537
        %v2621 = vpack.c.b16 %v2540, %v2539
        %v2622 = vpack.c.b16 %v2542, %v2541
        %v2623 = vpack.c.b16 %v2544, %v2543
        %v2624 = vpack.c.b16 %v2546, %v2545
        %v2625 = vpack.c.b16 %v2548, %v2547
        %v2626 = vpack.c.b16 %v2550, %v2549
        %v2627 = vpack.c.b16 %v2552, %v2551
        %v2628 = vpack.c.b16 %v2554, %v2553
        %v2629 = vpack.c.b16 %v2556, %v2555
        %v2630 = vpack.c.b16 %v2558, %v2557
        %2703 = vmatprep.subr.bf16.mxu0 0
        %2704 = vmatpush1.bf16.msra.mxu0 %v2559
        %2705 = vmatprep.subr.bf16.mxu0 0
        %2706 = vmatpush1.bf16.msra.mxu0 %v2560
        %2707 = vmatprep.subr.bf16.mxu0 0
        %2708 = vmatpush1.bf16.msra.mxu0 %v2561
        %2709 = vmatprep.subr.bf16.mxu0 0
        %2710 = vmatpush1.bf16.msra.mxu0 %v2562
        %2711 = vmatprep.subr.bf16.mxu0 0
        %2712 = vmatpush1.bf16.msra.mxu0 %v2563
        %2713 = vmatprep.subr.bf16.mxu0 0
        %2714 = vmatpush1.bf16.msra.mxu0 %v2564
        %2715 = vmatprep.subr.bf16.mxu0 0
        %2716 = vmatpush1.bf16.msra.mxu0 %v2565
        %2717 = vmatprep.subr.bf16.mxu0 0
        %2718 = vmatpush1.bf16.msra.mxu0 %v2566
        %2719 = vmatprep.subr.bf16.mxu0 0
        %2720 = vmatpush1.bf16.msra.mxu0 %v2567
        %2721 = vmatprep.subr.bf16.mxu0 0
        %2722 = vmatpush1.bf16.msra.mxu0 %v2568
        %2723 = vmatprep.subr.bf16.mxu0 0
        %2724 = vmatpush1.bf16.msra.mxu0 %v2569
        %2725 = vmatprep.subr.bf16.mxu0 0
        %2726 = vmatpush1.bf16.msra.mxu0 %v2570
        %2727 = vmatprep.subr.bf16.mxu0 0
        %2728 = vmatpush1.bf16.msra.mxu0 %v2571
        %2729 = vmatprep.subr.bf16.mxu0 0
        %2730 = vmatpush1.bf16.msra.mxu0 %v2572
        %2731 = vmatprep.subr.bf16.mxu0 0
        %2732 = vmatpush1.bf16.msra.mxu0 %v2573
        %2733 = vmatprep.subr.bf16.mxu0 0
        %2734 = vmatpush1.bf16.msra.mxu0 %v2574
        %2735 = vmatprep.mubr.bf16.mxu0 %v2048
        %2736 = vmatmul.mubr.bf16.gmra.mrb[0].mxu0 %v1994
        %v2737 = vpop.f32.mrb[0].mxu0
        %v2738 = vadd.f32 %v2269, %v2737
        %v2739 = vpop.f32.mrb[0].mxu0
        %v2740 = vpop.f32.mrb[0].mxu0
        %v2741 = vadd.f32 %v2269, %v2740
        %v2742 = vpop.f32.mrb[0].mxu0
        %2743 = vmatprep.mubr.bf16.mxu0 %v2049
        %2744 = vmatmul.mubr.bf16.gmra.mrb[0].mxu0 %v1995
        %v2745 = vpop.f32.mrb[0].mxu0
        %v2746 = vadd.f32 %v2269, %v2745
        %v2747 = vpop.f32.mrb[0].mxu0
        %v2748 = vpop.f32.mrb[0].mxu0
        %v2749 = vadd.f32 %v2269, %v2748
        %v2750 = vpop.f32.mrb[0].mxu0
        %2751 = vmatprep.mubr.bf16.mxu0 %v2050
        %2752 = vmatmul.mubr.bf16.gmra.mrb[0].mxu0 %v1996
        %v2753 = vpop.f32.mrb[0].mxu0
        %v2754 = vadd.f32 %v2269, %v2753
        %v2755 = vpop.f32.mrb[0].mxu0
        %v2756 = vpop.f32.mrb[0].mxu0
        %v2757 = vadd.f32 %v2269, %v2756
        %v2758 = vpop.f32.mrb[0].mxu0
        %2759 = vmatprep.mubr.bf16.mxu0 %v2051
        %2760 = vmatmul.mubr.bf16.gmra.mrb[0].mxu0 %v1997
        %v2761 = vpop.f32.mrb[0].mxu0
        %v2762 = vadd.f32 %v2269, %v2761
        %v2763 = vpop.f32.mrb[0].mxu0
        %v2764 = vpop.f32.mrb[0].mxu0
        %v2765 = vadd.f32 %v2269, %v2764
        %v2766 = vpop.f32.mrb[0].mxu0
        %2767 = vmatprep.mubr.bf16.mxu0 %v2052
        %2768 = vmatmul.mubr.bf16.gmra.mrb[0].mxu0 %v1998
        %v2769 = vpop.f32.mrb[0].mxu0
        %v2770 = vadd.f32 %v2269, %v2769
        %v2771 = vpop.f32.mrb[0].mxu0
        %v2772 = vpop.f32.mrb[0].mxu0
        %v2773 = vadd.f32 %v2269, %v2772
        %v2774 = vpop.f32.mrb[0].mxu0
        %2775 = vmatprep.mubr.bf16.mxu0 %v2053
        %2776 = vmatmul.mubr.bf16.gmra.mrb[0].mxu0 %v1999
        %v2777 = vpop.f32.mrb[0].mxu0
        %v2778 = vadd.f32 %v2269, %v2777
        %v2779 = vpop.f32.mrb[0].mxu0
        %v2780 = vpop.f32.mrb[0].mxu0
        %v2781 = vadd.f32 %v2269, %v2780
        %v2782 = vpop.f32.mrb[0].mxu0
        %2783 = vmatprep.mubr.bf16.mxu0 %v2054
        %2784 = vmatmul.mubr.bf16.gmra.mrb[0].mxu0 %v2000
        %v2785 = vpop.f32.mrb[0].mxu0
        %v2786 = vadd.f32 %v2269, %v2785
        %v2787 = vpop.f32.mrb[0].mxu0
        %v2788 = vpop.f32.mrb[0].mxu0
        %v2789 = vadd.f32 %v2269, %v2788
        %v2790 = vpop.f32.mrb[0].mxu0
        %2791 = vmatprep.mubr.bf16.mxu0 %v2055
        %2792 = vmatmul.mubr.bf16.gmra.mrb[0].mxu0 %v2001
        %v2793 = vpop.f32.mrb[0].mxu0
        %v2794 = vadd.f32 %v2269, %v2793
        %v2795 = vpop.f32.mrb[0].mxu0
        %v2796 = vpop.f32.mrb[0].mxu0
        %v2797 = vadd.f32 %v2269, %v2796
        %v2798 = vpop.f32.mrb[0].mxu0
        %2799 = vmatprep.mubr.bf16.mxu0 %v2056
        %2800 = vmatmul.mubr.bf16.gmra.mrb[0].mxu0 %v2002
        %v2801 = vpop.f32.mrb[0].mxu0
        %v2802 = vadd.f32 %v2269, %v2801
        %v2803 = vpop.f32.mrb[0].mxu0
        %v2804 = vpop.f32.mrb[0].mxu0
        %v2805 = vadd.f32 %v2269, %v2804
        %v2806 = vpop.f32.mrb[0].mxu0
        %2807 = vmatprep.mubr.bf16.mxu0 %v2057
        %2808 = vmatmul.mubr.bf16.gmra.mrb[0].mxu0 %v2003
        %v2809 = vpop.f32.mrb[0].mxu0
        %v2810 = vadd.f32 %v2269, %v2809
        %v2811 = vpop.f32.mrb[0].mxu0
        %v2812 = vpop.f32.mrb[0].mxu0
        %v2813 = vadd.f32 %v2269, %v2812
        %v2814 = vpop.f32.mrb[0].mxu0
        %2815 = vmatprep.mubr.bf16.mxu0 %v2058
        %2816 = vmatmul.mubr.bf16.gmra.mrb[0].mxu0 %v2004
        %v2817 = vpop.f32.mrb[0].mxu0
        %v2818 = vadd.f32 %v2269, %v2817
        %v2819 = vpop.f32.mrb[0].mxu0
        %v2820 = vpop.f32.mrb[0].mxu0
        %v2821 = vadd.f32 %v2269, %v2820
        %v2822 = vpop.f32.mrb[0].mxu0
        %2823 = vmatprep.mubr.bf16.mxu0 %v2059
        %2824 = vmatmul.mubr.bf16.gmra.mrb[0].mxu0 %v2005
        %v2825 = vpop.f32.mrb[0].mxu0
        %v2826 = vadd.f32 %v2269, %v2825
        %v2827 = vpop.f32.mrb[0].mxu0
        %v2828 = vpop.f32.mrb[0].mxu0
        %v2829 = vadd.f32 %v2269, %v2828
        %v2830 = vpop.f32.mrb[0].mxu0
        %2831 = vmatprep.mubr.bf16.mxu0 %v2060
        %2832 = vmatmul.mubr.bf16.gmra.mrb[0].mxu0 %v2006
        %v2833 = vpop.f32.mrb[0].mxu0
        %v2834 = vadd.f32 %v2269, %v2833
        %v2835 = vpop.f32.mrb[0].mxu0
        %v2836 = vpop.f32.mrb[0].mxu0
        %v2837 = vadd.f32 %v2269, %v2836
        %v2838 = vpop.f32.mrb[0].mxu0
        %2839 = vmatprep.mubr.bf16.mxu0 %v2061
        %2840 = vmatmul.mubr.bf16.gmra.mrb[0].mxu0 %v2007
        %v2841 = vpop.f32.mrb[0].mxu0
        %v2842 = vadd.f32 %v2269, %v2841
        %v2843 = vpop.f32.mrb[0].mxu0
        %v2844 = vpop.f32.mrb[0].mxu0
        %v2845 = vadd.f32 %v2269, %v2844
        %v2846 = vpop.f32.mrb[0].mxu0
        %2847 = vmatprep.mubr.bf16.mxu0 %v2062
        %2848 = vmatmul.mubr.bf16.gmra.mrb[0].mxu0 %v2008
        %v2849 = vpop.f32.mrb[0].mxu0
        %v2850 = vadd.f32 %v2269, %v2849
        %v2851 = vpop.f32.mrb[0].mxu0
        %v2852 = vpop.f32.mrb[0].mxu0
        %v2853 = vadd.f32 %v2269, %v2852
        %v2854 = vpop.f32.mrb[0].mxu0
        %2855 = vmatprep.mubr.bf16.mxu0 %v2063
        %2856 = vmatmul.mubr.bf16.gmra.mrb[0].mxu0 %v2009
        %v2857 = vpop.f32.mrb[0].mxu0
        %v2858 = vadd.f32 %v2269, %v2857
        %v2859 = vpop.f32.mrb[0].mxu0
        %v2860 = vpop.f32.mrb[0].mxu0
        %v2861 = vadd.f32 %v2269, %v2860
        %v2862 = vpop.f32.mrb[0].mxu0
        %2863 = vdwg.mxu0
        %2864 = vmatprep.subr.bf16.mxu0 0
        %2865 = vmatpush1.bf16.msra.mxu0 %v2575
        %2866 = vmatprep.subr.bf16.mxu0 0
        %2867 = vmatpush1.bf16.msra.mxu0 %v2576
        %2868 = vmatprep.subr.bf16.mxu0 0
        %2869 = vmatpush1.bf16.msra.mxu0 %v2577
        %2870 = vmatprep.subr.bf16.mxu0 0
        %2871 = vmatpush1.bf16.msra.mxu0 %v2578
        %2872 = vmatprep.subr.bf16.mxu0 0
        %2873 = vmatpush1.bf16.msra.mxu0 %v2579
        %2874 = vmatprep.subr.bf16.mxu0 0
        %2875 = vmatpush1.bf16.msra.mxu0 %v2580
        %2876 = vmatprep.subr.bf16.mxu0 0
        %2877 = vmatpush1.bf16.msra.mxu0 %v2581
        %2878 = vmatprep.subr.bf16.mxu0 0
        %2879 = vmatpush1.bf16.msra.mxu0 %v2582
        %2880 = vmatprep.subr.bf16.mxu0 0
        %2881 = vmatpush1.bf16.msra.mxu0 %v2583
        %2882 = vmatprep.subr.bf16.mxu0 0
        %2883 = vmatpush1.bf16.msra.mxu0 %v2584
        %2884 = vmatprep.subr.bf16.mxu0 0
        %2885 = vmatpush1.bf16.msra.mxu0 %v2585
        %2886 = vmatprep.subr.bf16.mxu0 0
        %2887 = vmatpush1.bf16.msra.mxu0 %v2586
        %2888 = vmatprep.subr.bf16.mxu0 0
        %2889 = vmatpush1.bf16.msra.mxu0 %v2587
        %2890 = vmatprep.subr.bf16.mxu0 0
        %2891 = vmatpush1.bf16.msra.mxu0 %v2588
        %2892 = vmatprep.subr.bf16.mxu0 0
        %2893 = vmatpush1.bf16.msra.mxu0 %v2589
        %2894 = vmatprep.subr.bf16.mxu0 0
        %2895 = vmatpush1.bf16.msra.mxu0 %v2590
        %2896 = vmatprep.mubr.bf16.mxu0 %v1995
        %2897 = vmatmul.mubr.bf16.gmra.mrb[0].mxu0 %v2102
        %v2898 = vpop.f32.mrb[0].mxu0
        %v2899 = vadd.f32 %v2738, %v2898
        %v2900 = vpop.f32.mrb[0].mxu0
        %v2901 = vpop.f32.mrb[0].mxu0
        %v2902 = vadd.f32 %v2741, %v2901
        %v2903 = vpop.f32.mrb[0].mxu0
        %2904 = vmatprep.mubr.bf16.mxu0 %v1996
        %2905 = vmatmul.mubr.bf16.gmra.mrb[0].mxu0 %v2103
        %v2906 = vpop.f32.mrb[0].mxu0
        %v2907 = vadd.f32 %v2746, %v2906
        %v2908 = vpop.f32.mrb[0].mxu0
        %v2909 = vpop.f32.mrb[0].mxu0
        %v2910 = vadd.f32 %v2749, %v2909
        %v2911 = vpop.f32.mrb[0].mxu0
        %2912 = vmatprep.mubr.bf16.mxu0 %v1997
        %2913 = vmatmul.mubr.bf16.gmra.mrb[0].mxu0 %v2104
        %v2914 = vpop.f32.mrb[0].mxu0
        %v2915 = vadd.f32 %v2754, %v2914
        %v2916 = vpop.f32.mrb[0].mxu0
        %v2917 = vpop.f32.mrb[0].mxu0
        %v2918 = vadd.f32 %v2757, %v2917
        %v2919 = vpop.f32.mrb[0].mxu0
        %2920 = vmatprep.mubr.bf16.mxu0 %v1998
        %2921 = vmatmul.mubr.bf16.gmra.mrb[0].mxu0 %v2105
        %v2922 = vpop.f32.mrb[0].mxu0
        %v2923 = vadd.f32 %v2762, %v2922
        %v2924 = vpop.f32.mrb[0].mxu0
        %v2925 = vpop.f32.mrb[0].mxu0
        %v2926 = vadd.f32 %v2765, %v2925
        %v2927 = vpop.f32.mrb[0].mxu0
        %2928 = vmatprep.mubr.bf16.mxu0 %v1999
        %2929 = vmatmul.mubr.bf16.gmra.mrb[0].mxu0 %v2106
        %v2930 = vpop.f32.mrb[0].mxu0
        %v2931 = vadd.f32 %v2770, %v2930
        %v2932 = vpop.f32.mrb[0].mxu0
        %v2933 = vpop.f32.mrb[0].mxu0
        %v2934 = vadd.f32 %v2773, %v2933
        %v2935 = vpop.f32.mrb[0].mxu0
        %2936 = vmatprep.mubr.bf16.mxu0 %v2000
        %2937 = vmatmul.mubr.bf16.gmra.mrb[0].mxu0 %v2107
        %v2938 = vpop.f32.mrb[0].mxu0
        %v2939 = vadd.f32 %v2778, %v2938
        %v2940 = vpop.f32.mrb[0].mxu0
        %v2941 = vpop.f32.mrb[0].mxu0
        %v2942 = vadd.f32 %v2781, %v2941
        %v2943 = vpop.f32.mrb[0].mxu0
        %2944 = vmatprep.mubr.bf16.mxu0 %v2001
        %2945 = vmatmul.mubr.bf16.gmra.mrb[0].mxu0 %v2108
        %v2946 = vpop.f32.mrb[0].mxu0
        %v2947 = vadd.f32 %v2786, %v2946
        %v2948 = vpop.f32.mrb[0].mxu0
        %v2949 = vpop.f32.mrb[0].mxu0
        %v2950 = vadd.f32 %v2789, %v2949
        %v2951 = vpop.f32.mrb[0].mxu0
        %2952 = vmatprep.mubr.bf16.mxu0 %v2002
        %2953 = vmatmul.mubr.bf16.gmra.mrb[0].mxu0 %v2109
        %v2954 = vpop.f32.mrb[0].mxu0
        %v2955 = vadd.f32 %v2794, %v2954
        %v2956 = vpop.f32.mrb[0].mxu0
        %v2957 = vpop.f32.mrb[0].mxu0
        %v2958 = vadd.f32 %v2797, %v2957
        %v2959 = vpop.f32.mrb[0].mxu0
        %2960 = vmatprep.mubr.bf16.mxu0 %v2003
        %2961 = vmatmul.mubr.bf16.gmra.mrb[0].mxu0 %v2110
        %v2962 = vpop.f32.mrb[0].mxu0
        %v2963 = vadd.f32 %v2802, %v2962
        %v2964 = vpop.f32.mrb[0].mxu0
        %v2965 = vpop.f32.mrb[0].mxu0
        %v2966 = vadd.f32 %v2805, %v2965
        %v2967 = vpop.f32.mrb[0].mxu0
        %2968 = vmatprep.mubr.bf16.mxu0 %v2004
        %2969 = vmatmul.mubr.bf16.gmra.mrb[0].mxu0 %v2111
        %v2970 = vpop.f32.mrb[0].mxu0
        %v2971 = vadd.f32 %v2810, %v2970
        %v2972 = vpop.f32.mrb[0].mxu0
        %v2973 = vpop.f32.mrb[0].mxu0
        %v2974 = vadd.f32 %v2813, %v2973
        %v2975 = vpop.f32.mrb[0].mxu0
        %2976 = vmatprep.mubr.bf16.mxu0 %v2005
        %2977 = vmatmul.mubr.bf16.gmra.mrb[0].mxu0 %v2112
        %v2978 = vpop.f32.mrb[0].mxu0
        %v2979 = vadd.f32 %v2818, %v2978
        %v2980 = vpop.f32.mrb[0].mxu0
        %v2981 = vpop.f32.mrb[0].mxu0
        %v2982 = vadd.f32 %v2821, %v2981
        %v2983 = vpop.f32.mrb[0].mxu0
        %2984 = vmatprep.mubr.bf16.mxu0 %v2006
        %2985 = vmatmul.mubr.bf16.gmra.mrb[0].mxu0 %v2113
        %v2986 = vpop.f32.mrb[0].mxu0
        %v2987 = vadd.f32 %v2826, %v2986
        %v2988 = vpop.f32.mrb[0].mxu0
        %v2989 = vpop.f32.mrb[0].mxu0
        %v2990 = vadd.f32 %v2829, %v2989
        %v2991 = vpop.f32.mrb[0].mxu0
        %2992 = vmatprep.mubr.bf16.mxu0 %v2007
        %2993 = vmatmul.mubr.bf16.gmra.mrb[0].mxu0 %v2114
        %v2994 = vpop.f32.mrb[0].mxu0
        %v2995 = vadd.f32 %v2834, %v2994
        %v2996 = vpop.f32.mrb[0].mxu0
        %v2997 = vpop.f32.mrb[0].mxu0
        %v2998 = vadd.f32 %v2837, %v2997
        %v2999 = vpop.f32.mrb[0].mxu0
        %3000 = vmatprep.mubr.bf16.mxu0 %v2008
        %3001 = vmatmul.mubr.bf16.gmra.mrb[0].mxu0 %v2115
        %v3002 = vpop.f32.mrb[0].mxu0
        %v3003 = vadd.f32 %v2842, %v3002
        %v3004 = vpop.f32.mrb[0].mxu0
        %v3005 = vpop.f32.mrb[0].mxu0
        %v3006 = vadd.f32 %v2845, %v3005
        %v3007 = vpop.f32.mrb[0].mxu0
        %3008 = vmatprep.mubr.bf16.mxu0 %v2009
        %3009 = vmatmul.mubr.bf16.gmra.mrb[0].mxu0 %v2116
        %v3010 = vpop.f32.mrb[0].mxu0
        %v3011 = vadd.f32 %v2850, %v3010
        %v3012 = vpop.f32.mrb[0].mxu0
        %v3013 = vpop.f32.mrb[0].mxu0
        %v3014 = vadd.f32 %v2853, %v3013
        %v3015 = vpop.f32.mrb[0].mxu0
        %3016 = vmatprep.mubr.bf16.mxu0 %v2010
        %3017 = vmatmul.mubr.bf16.gmra.mrb[0].mxu0 %v2117
        %v3018 = vpop.f32.mrb[0].mxu0
        %v3019 = vadd.f32 %v2858, %v3018
        %v3020 = vpop.f32.mrb[0].mxu0
        %v3021 = vpop.f32.mrb[0].mxu0
        %v3022 = vadd.f32 %v2861, %v3021
        %v3023 = vpop.f32.mrb[0].mxu0
        %3024 = vdwg.mxu0
        %3025 = vmatprep.subr.bf16.mxu0 0
        %3026 = vmatpush1.bf16.msra.mxu0 %v2591
        %3027 = vmatprep.subr.bf16.mxu0 0
        %3028 = vmatpush1.bf16.msra.mxu0 %v2592
        %3029 = vmatprep.subr.bf16.mxu0 0
        %3030 = vmatpush1.bf16.msra.mxu0 %v2593
        %3031 = vmatprep.subr.bf16.mxu0 0
        %3032 = vmatpush1.bf16.msra.mxu0 %v2594
        %3033 = vmatprep.subr.bf16.mxu0 0
        %3034 = vmatpush1.bf16.msra.mxu0 %v2595
        %3035 = vmatprep.subr.bf16.mxu0 0
        %3036 = vmatpush1.bf16.msra.mxu0 %v2596
        %3037 = vmatprep.subr.bf16.mxu0 0
        %3038 = vmatpush1.bf16.msra.mxu0 %v2597
        %3039 = vmatprep.subr.bf16.mxu0 0
        %3040 = vmatpush1.bf16.msra.mxu0 %v2598
        %3041 = vmatprep.subr.bf16.mxu0 0
        %3042 = vmatpush1.bf16.msra.mxu0 %v2599
        %3043 = vmatprep.subr.bf16.mxu0 0
        %3044 = vmatpush1.bf16.msra.mxu0 %v2600
        %3045 = vmatprep.subr.bf16.mxu0 0
        %3046 = vmatpush1.bf16.msra.mxu0 %v2601
        %3047 = vmatprep.subr.bf16.mxu0 0
        %3048 = vmatpush1.bf16.msra.mxu0 %v2602
        %3049 = vmatprep.subr.bf16.mxu0 0
        %3050 = vmatpush1.bf16.msra.mxu0 %v2603
        %3051 = vmatprep.subr.bf16.mxu0 0
        %3052 = vmatpush1.bf16.msra.mxu0 %v2604
        %3053 = vmatprep.subr.bf16.mxu0 0
        %3054 = vmatpush1.bf16.msra.mxu0 %v2605
        %3055 = vmatprep.subr.bf16.mxu0 0
        %3056 = vmatpush1.bf16.msra.mxu0 %v2606
        %3057 = vmatprep.mubr.bf16.mxu0 %v2103
        %3058 = vmatmul.mubr.bf16.gmra.mrb[0].mxu0 %v2049
        %v3059 = vpop.f32.mrb[0].mxu0
        %v3060 = vadd.f32 %v2899, %v3059
        %v3061 = vpop.f32.mrb[0].mxu0
        %v3062 = vpop.f32.mrb[0].mxu0
        %v3063 = vadd.f32 %v2902, %v3062
        %v3064 = vpop.f32.mrb[0].mxu0
        %3065 = vmatprep.mubr.bf16.mxu0 %v2104
        %3066 = vmatmul.mubr.bf16.gmra.mrb[0].mxu0 %v2050
        %v3067 = vpop.f32.mrb[0].mxu0
        %v3068 = vadd.f32 %v2907, %v3067
        %v3069 = vpop.f32.mrb[0].mxu0
        %v3070 = vpop.f32.mrb[0].mxu0
        %v3071 = vadd.f32 %v2910, %v3070
        %v3072 = vpop.f32.mrb[0].mxu0
        %3073 = vmatprep.mubr.bf16.mxu0 %v2105
        %3074 = vmatmul.mubr.bf16.gmra.mrb[0].mxu0 %v2051
        %v3075 = vpop.f32.mrb[0].mxu0
        %v3076 = vadd.f32 %v2915, %v3075
        %v3077 = vpop.f32.mrb[0].mxu0
        %v3078 = vpop.f32.mrb[0].mxu0
        %v3079 = vadd.f32 %v2918, %v3078
        %v3080 = vpop.f32.mrb[0].mxu0
        %3081 = vmatprep.mubr.bf16.mxu0 %v2106
        %3082 = vmatmul.mubr.bf16.gmra.mrb[0].mxu0 %v2052
        %v3083 = vpop.f32.mrb[0].mxu0
        %v3084 = vadd.f32 %v2923, %v3083
        %v3085 = vpop.f32.mrb[0].mxu0
        %v3086 = vpop.f32.mrb[0].mxu0
        %v3087 = vadd.f32 %v2926, %v3086
        %v3088 = vpop.f32.mrb[0].mxu0
        %3089 = vmatprep.mubr.bf16.mxu0 %v2107
        %3090 = vmatmul.mubr.bf16.gmra.mrb[0].mxu0 %v2053
        %v3091 = vpop.f32.mrb[0].mxu0
        %v3092 = vadd.f32 %v2931, %v3091
        %v3093 = vpop.f32.mrb[0].mxu0
        %v3094 = vpop.f32.mrb[0].mxu0
        %v3095 = vadd.f32 %v2934, %v3094
        %v3096 = vpop.f32.mrb[0].mxu0
        %3097 = vmatprep.mubr.bf16.mxu0 %v2108
        %3098 = vmatmul.mubr.bf16.gmra.mrb[0].mxu0 %v2054
        %v3099 = vpop.f32.mrb[0].mxu0
        %v3100 = vadd.f32 %v2939, %v3099
        %v3101 = vpop.f32.mrb[0].mxu0
        %v3102 = vpop.f32.mrb[0].mxu0
        %v3103 = vadd.f32 %v2942, %v3102
        %v3104 = vpop.f32.mrb[0].mxu0
        %3105 = vmatprep.mubr.bf16.mxu0 %v2109
        %3106 = vmatmul.mubr.bf16.gmra.mrb[0].mxu0 %v2055
        %v3107 = vpop.f32.mrb[0].mxu0
        %v3108 = vadd.f32 %v2947, %v3107
        %v3109 = vpop.f32.mrb[0].mxu0
        %v3110 = vpop.f32.mrb[0].mxu0
        %v3111 = vadd.f32 %v2950, %v3110
        %v3112 = vpop.f32.mrb[0].mxu0
        %3113 = vmatprep.mubr.bf16.mxu0 %v2110
        %3114 = vmatmul.mubr.bf16.gmra.mrb[0].mxu0 %v2056
        %v3115 = vpop.f32.mrb[0].mxu0
        %v3116 = vadd.f32 %v2955, %v3115
        %v3117 = vpop.f32.mrb[0].mxu0
        %v3118 = vpop.f32.mrb[0].mxu0
        %v3119 = vadd.f32 %v2958, %v3118
        %v3120 = vpop.f32.mrb[0].mxu0
        %3121 = vmatprep.mubr.bf16.mxu0 %v2111
        %3122 = vmatmul.mubr.bf16.gmra.mrb[0].mxu0 %v2057
        %v3123 = vpop.f32.mrb[0].mxu0
        %v3124 = vadd.f32 %v2963, %v3123
        %v3125 = vpop.f32.mrb[0].mxu0
        %v3126 = vpop.f32.mrb[0].mxu0
        %v3127 = vadd.f32 %v2966, %v3126
        %v3128 = vpop.f32.mrb[0].mxu0
        %3129 = vmatprep.mubr.bf16.mxu0 %v2112
        %3130 = vmatmul.mubr.bf16.gmra.mrb[0].mxu0 %v2058
        %v3131 = vpop.f32.mrb[0].mxu0
        %v3132 = vadd.f32 %v2971, %v3131
        %v3133 = vpop.f32.mrb[0].mxu0
        %v3134 = vpop.f32.mrb[0].mxu0
        %v3135 = vadd.f32 %v2974, %v3134
        %v3136 = vpop.f32.mrb[0].mxu0
        %3137 = vmatprep.mubr.bf16.mxu0 %v2113
        %3138 = vmatmul.mubr.bf16.gmra.mrb[0].mxu0 %v2059
        %v3139 = vpop.f32.mrb[0].mxu0
        %v3140 = vadd.f32 %v2979, %v3139
        %v3141 = vpop.f32.mrb[0].mxu0
        %v3142 = vpop.f32.mrb[0].mxu0
        %v3143 = vadd.f32 %v2982, %v3142
        %v3144 = vpop.f32.mrb[0].mxu0
        %3145 = vmatprep.mubr.bf16.mxu0 %v2114
        %3146 = vmatmul.mubr.bf16.gmra.mrb[0].mxu0 %v2060
        %v3147 = vpop.f32.mrb[0].mxu0
        %v3148 = vadd.f32 %v2987, %v3147
        %v3149 = vpop.f32.mrb[0].mxu0
        %v3150 = vpop.f32.mrb[0].mxu0
        %v3151 = vadd.f32 %v2990, %v3150
        %v3152 = vpop.f32.mrb[0].mxu0
        %3153 = vmatprep.mubr.bf16.mxu0 %v2115
        %3154 = vmatmul.mubr.bf16.gmra.mrb[0].mxu0 %v2061
        %v3155 = vpop.f32.mrb[0].mxu0
        %v3156 = vadd.f32 %v2995, %v3155
        %v3157 = vpop.f32.mrb[0].mxu0
        %v3158 = vpop.f32.mrb[0].mxu0
        %v3159 = vadd.f32 %v2998, %v3158
        %v3160 = vpop.f32.mrb[0].mxu0
        %3161 = vmatprep.mubr.bf16.mxu0 %v2116
        %3162 = vmatmul.mubr.bf16.gmra.mrb[0].mxu0 %v2062
        %v3163 = vpop.f32.mrb[0].mxu0
        %v3164 = vadd.f32 %v3003, %v3163
        %v3165 = vpop.f32.mrb[0].mxu0
        %v3166 = vpop.f32.mrb[0].mxu0
        %v3167 = vadd.f32 %v3006, %v3166
        %v3168 = vpop.f32.mrb[0].mxu0
        %3169 = vmatprep.mubr.bf16.mxu0 %v2117
        %3170 = vmatmul.mubr.bf16.gmra.mrb[0].mxu0 %v2063
        %v3171 = vpop.f32.mrb[0].mxu0
        %v3172 = vadd.f32 %v3011, %v3171
        %v3173 = vpop.f32.mrb[0].mxu0
        %v3174 = vpop.f32.mrb[0].mxu0
        %v3175 = vadd.f32 %v3014, %v3174
        %v3176 = vpop.f32.mrb[0].mxu0
        %3177 = vmatprep.mubr.bf16.mxu0 %v2118
        %3178 = vmatmul.mubr.bf16.gmra.mrb[0].mxu0 %v2064
        %v3179 = vpop.f32.mrb[0].mxu0
        %v3180 = vadd.f32 %v3019, %v3179
        %v3181 = vpop.f32.mrb[0].mxu0
        %v3182 = vpop.f32.mrb[0].mxu0
        %v3183 = vadd.f32 %v3022, %v3182
        %v3184 = vpop.f32.mrb[0].mxu0
        %3185 = vdwg.mxu0
        %3186 = vmatprep.subr.bf16.mxu0 0
        %3187 = vmatpush1.bf16.msra.mxu0 %v2607
        %3188 = vmatprep.subr.bf16.mxu0 0
        %3189 = vmatpush1.bf16.msra.mxu0 %v2608
        %3190 = vmatprep.subr.bf16.mxu0 0
        %3191 = vmatpush1.bf16.msra.mxu0 %v2609
        %3192 = vmatprep.subr.bf16.mxu0 0
        %3193 = vmatpush1.bf16.msra.mxu0 %v2610
        %3194 = vmatprep.subr.bf16.mxu0 0
        %3195 = vmatpush1.bf16.msra.mxu0 %v2611
        %3196 = vmatprep.subr.bf16.mxu0 0
        %3197 = vmatpush1.bf16.msra.mxu0 %v2612
        %3198 = vmatprep.subr.bf16.mxu0 0
        %3199 = vmatpush1.bf16.msra.mxu0 %v2613
        %3200 = vmatprep.subr.bf16.mxu0 0
        %3201 = vmatpush1.bf16.msra.mxu0 %v2614
        %3202 = vmatprep.subr.bf16.mxu0 0
        %3203 = vmatpush1.bf16.msra.mxu0 %v2615
        %3204 = vmatprep.subr.bf16.mxu0 0
        %3205 = vmatpush1.bf16.msra.mxu0 %v2616
        %3206 = vmatprep.subr.bf16.mxu0 0
        %3207 = vmatpush1.bf16.msra.mxu0 %v2617
        %3208 = vmatprep.subr.bf16.mxu0 0
        %3209 = vmatpush1.bf16.msra.mxu0 %v2618
        %3210 = vmatprep.subr.bf16.mxu0 0
        %3211 = vmatpush1.bf16.msra.mxu0 %v2619
        %3212 = vmatprep.subr.bf16.mxu0 0
        %3213 = vmatpush1.bf16.msra.mxu0 %v2620
        %3214 = vmatprep.subr.bf16.mxu0 0
        %3215 = vmatpush1.bf16.msra.mxu0 %v2621
        %3216 = vmatprep.subr.bf16.mxu0 0
        %3217 = vmatpush1.bf16.msra.mxu0 %v2622
        %3218 = vmatprep.mubr.bf16.mxu0 %v2050
        %3219 = vmatmul.mubr.bf16.gmra.mrb[0].mxu0 %v1996
        %v3220 = vpop.f32.mrb[0].mxu0
        %v3221 = vadd.f32 %v3060, %v3220
        %v3222 = vpop.f32.mrb[0].mxu0
        %v3223 = vpop.f32.mrb[0].mxu0
        %v3224 = vadd.f32 %v3063, %v3223
        %v3225 = vpop.f32.mrb[0].mxu0
        %3226 = vmatprep.mubr.bf16.mxu0 %v2051
        %3227 = vmatmul.mubr.bf16.gmra.mrb[0].mxu0 %v1997
        %v3228 = vpop.f32.mrb[0].mxu0
        %v3229 = vadd.f32 %v3068, %v3228
        %v3230 = vpop.f32.mrb[0].mxu0
        %v3231 = vpop.f32.mrb[0].mxu0
        %v3232 = vadd.f32 %v3071, %v3231
        %v3233 = vpop.f32.mrb[0].mxu0
        %3234 = vmatprep.mubr.bf16.mxu0 %v2052
        %3235 = vmatmul.mubr.bf16.gmra.mrb[0].mxu0 %v1998
        %v3236 = vpop.f32.mrb[0].mxu0
        %v3237 = vadd.f32 %v3076, %v3236
        %v3238 = vpop.f32.mrb[0].mxu0
        %v3239 = vpop.f32.mrb[0].mxu0
        %v3240 = vadd.f32 %v3079, %v3239
        %v3241 = vpop.f32.mrb[0].mxu0
        %3242 = vmatprep.mubr.bf16.mxu0 %v2053
        %3243 = vmatmul.mubr.bf16.gmra.mrb[0].mxu0 %v1999
        %v3244 = vpop.f32.mrb[0].mxu0
        %v3245 = vadd.f32 %v3084, %v3244
        %v3246 = vpop.f32.mrb[0].mxu0
        %v3247 = vpop.f32.mrb[0].mxu0
        %v3248 = vadd.f32 %v3087, %v3247
        %v3249 = vpop.f32.mrb[0].mxu0
        %3250 = vmatprep.mubr.bf16.mxu0 %v2054
        %3251 = vmatmul.mubr.bf16.gmra.mrb[0].mxu0 %v2000
        %v3252 = vpop.f32.mrb[0].mxu0
        %v3253 = vadd.f32 %v3092, %v3252
        %v3254 = vpop.f32.mrb[0].mxu0
        %v3255 = vpop.f32.mrb[0].mxu0
        %v3256 = vadd.f32 %v3095, %v3255
        %v3257 = vpop.f32.mrb[0].mxu0
        %3258 = vmatprep.mubr.bf16.mxu0 %v2055
        %3259 = vmatmul.mubr.bf16.gmra.mrb[0].mxu0 %v2001
        %v3260 = vpop.f32.mrb[0].mxu0
        %v3261 = vadd.f32 %v3100, %v3260
        %v3262 = vpop.f32.mrb[0].mxu0
        %v3263 = vpop.f32.mrb[0].mxu0
        %v3264 = vadd.f32 %v3103, %v3263
        %v3265 = vpop.f32.mrb[0].mxu0
        %3266 = vmatprep.mubr.bf16.mxu0 %v2056
        %3267 = vmatmul.mubr.bf16.gmra.mrb[0].mxu0 %v2002
        %v3268 = vpop.f32.mrb[0].mxu0
        %v3269 = vadd.f32 %v3108, %v3268
        %v3270 = vpop.f32.mrb[0].mxu0
        %v3271 = vpop.f32.mrb[0].mxu0
        %v3272 = vadd.f32 %v3111, %v3271
        %v3273 = vpop.f32.mrb[0].mxu0
        %3274 = vmatprep.mubr.bf16.mxu0 %v2057
        %3275 = vmatmul.mubr.bf16.gmra.mrb[0].mxu0 %v2003
        %v3276 = vpop.f32.mrb[0].mxu0
        %v3277 = vadd.f32 %v3116, %v3276
        %v3278 = vpop.f32.mrb[0].mxu0
        %v3279 = vpop.f32.mrb[0].mxu0
        %v3280 = vadd.f32 %v3119, %v3279
        %v3281 = vpop.f32.mrb[0].mxu0
        %3282 = vmatprep.mubr.bf16.mxu0 %v2058
        %3283 = vmatmul.mubr.bf16.gmra.mrb[0].mxu0 %v2004
        %v3284 = vpop.f32.mrb[0].mxu0
        %v3285 = vadd.f32 %v3124, %v3284
        %v3286 = vpop.f32.mrb[0].mxu0
        %v3287 = vpop.f32.mrb[0].mxu0
        %v3288 = vadd.f32 %v3127, %v3287
        %v3289 = vpop.f32.mrb[0].mxu0
        %3290 = vmatprep.mubr.bf16.mxu0 %v2059
        %3291 = vmatmul.mubr.bf16.gmra.mrb[0].mxu0 %v2005
        %v3292 = vpop.f32.mrb[0].mxu0
        %v3293 = vadd.f32 %v3132, %v3292
        %v3294 = vpop.f32.mrb[0].mxu0
        %v3295 = vpop.f32.mrb[0].mxu0
        %v3296 = vadd.f32 %v3135, %v3295
        %v3297 = vpop.f32.mrb[0].mxu0
        %3298 = vmatprep.mubr.bf16.mxu0 %v2060
        %3299 = vmatmul.mubr.bf16.gmra.mrb[0].mxu0 %v2006
        %v3300 = vpop.f32.mrb[0].mxu0
        %v3301 = vadd.f32 %v3140, %v3300
        %v3302 = vpop.f32.mrb[0].mxu0
        %v3303 = vpop.f32.mrb[0].mxu0
        %v3304 = vadd.f32 %v3143, %v3303
        %v3305 = vpop.f32.mrb[0].mxu0
        %3306 = vmatprep.mubr.bf16.mxu0 %v2061
        %3307 = vmatmul.mubr.bf16.gmra.mrb[0].mxu0 %v2007
        %v3308 = vpop.f32.mrb[0].mxu0
        %v3309 = vadd.f32 %v3148, %v3308
        %v3310 = vpop.f32.mrb[0].mxu0
        %v3311 = vpop.f32.mrb[0].mxu0
        %v3312 = vadd.f32 %v3151, %v3311
        %v3313 = vpop.f32.mrb[0].mxu0
        %3314 = vmatprep.mubr.bf16.mxu0 %v2062
        %3315 = vmatmul.mubr.bf16.gmra.mrb[0].mxu0 %v2008
        %v3316 = vpop.f32.mrb[0].mxu0
        %v3317 = vadd.f32 %v3156, %v3316
        %v3318 = vpop.f32.mrb[0].mxu0
        %v3319 = vpop.f32.mrb[0].mxu0
        %v3320 = vadd.f32 %v3159, %v3319
        %v3321 = vpop.f32.mrb[0].mxu0
        %3322 = vmatprep.mubr.bf16.mxu0 %v2063
        %3323 = vmatmul.mubr.bf16.gmra.mrb[0].mxu0 %v2009
        %v3324 = vpop.f32.mrb[0].mxu0
        %v3325 = vadd.f32 %v3164, %v3324
        %v3326 = vpop.f32.mrb[0].mxu0
        %v3327 = vpop.f32.mrb[0].mxu0
        %v3328 = vadd.f32 %v3167, %v3327
        %v3329 = vpop.f32.mrb[0].mxu0
        %3330 = vmatprep.mubr.bf16.mxu0 %v2064
        %3331 = vmatmul.mubr.bf16.gmra.mrb[0].mxu0 %v2010
        %v3332 = vpop.f32.mrb[0].mxu0
        %v3333 = vadd.f32 %v3172, %v3332
        %v3334 = vpop.f32.mrb[0].mxu0
        %v3335 = vpop.f32.mrb[0].mxu0
        %v3336 = vadd.f32 %v3175, %v3335
        %v3337 = vpop.f32.mrb[0].mxu0
        %3338 = vmatprep.mubr.bf16.mxu0 %v2065
        %3339 = vmatmul.mubr.bf16.gmra.mrb[0].mxu0 %v2011
        %v3340 = vpop.f32.mrb[0].mxu0
        %v3341 = vadd.f32 %v3180, %v3340
        %v3342 = vpop.f32.mrb[0].mxu0
        %v3343 = vpop.f32.mrb[0].mxu0
        %v3344 = vadd.f32 %v3183, %v3343
        %v3345 = vpop.f32.mrb[0].mxu0
        %3346 = vdwg.mxu0
        %3347 = vmatprep.subr.bf16.mxu0 0
        %3348 = vmatpush1.bf16.msra.mxu0 %v2623
        %3349 = vmatprep.subr.bf16.mxu0 0
        %3350 = vmatpush1.bf16.msra.mxu0 %v2624
        %3351 = vmatprep.subr.bf16.mxu0 0
        %3352 = vmatpush1.bf16.msra.mxu0 %v2625
        %3353 = vmatprep.subr.bf16.mxu0 0
        %3354 = vmatpush1.bf16.msra.mxu0 %v2626
        %3355 = vmatprep.subr.bf16.mxu0 0
        %3356 = vmatpush1.bf16.msra.mxu0 %v2627
        %3357 = vmatprep.subr.bf16.mxu0 0
        %3358 = vmatpush1.bf16.msra.mxu0 %v2628
        %3359 = vmatprep.subr.bf16.mxu0 0
        %3360 = vmatpush1.bf16.msra.mxu0 %v2629
        %3361 = vmatprep.subr.bf16.mxu0 0
        %3362 = vmatpush1.bf16.msra.mxu0 %v2630
        %3363 = vmatprep.subr.bf16.mxu0 0
        %3364 = vmatpush1.bf16.msra.mxu0 0
        %3365 = vmatprep.subr.bf16.mxu0 0
        %3366 = vmatpush1.bf16.msra.mxu0 0
        %3367 = vmatprep.subr.bf16.mxu0 0
        %3368 = vmatpush1.bf16.msra.mxu0 0
        %3369 = vmatprep.subr.bf16.mxu0 0
        %3370 = vmatpush1.bf16.msra.mxu0 0
        %3371 = vmatprep.subr.bf16.mxu0 0
        %3372 = vmatpush1.bf16.msra.mxu0 0
        %3373 = vmatprep.subr.bf16.mxu0 0
        %3374 = vmatpush1.bf16.msra.mxu0 0
        %3375 = vmatprep.subr.bf16.mxu0 0
        %3376 = vmatpush1.bf16.msra.mxu0 0
        %3377 = vmatprep.subr.bf16.mxu0 0
        %3378 = vmatpush1.bf16.msra.mxu0 0
        %3379 = vmatprep.mubr.bf16.mxu0 0
        %3380 = vmatmul.mubr.bf16.gmra.mrb[0].mxu0 %v2104
        %v3381 = vpop.f32.mrb[0].mxu0
        %v3382 = vadd.f32 %v3221, %v3381
        %v3383 = vpop.f32.mrb[0].mxu0
        %v3384 = vpop.f32.mrb[0].mxu0
        %v3385 = vadd.f32 %v3224, %v3384
        %v3386 = vpop.f32.mrb[0].mxu0
        %3387 = vmatprep.mubr.bf16.mxu0 0
        %3388 = vmatmul.mubr.bf16.gmra.mrb[0].mxu0 %v2105
        %v3389 = vpop.f32.mrb[0].mxu0
        %v3390 = vadd.f32 %v3229, %v3389
        %v3391 = vpop.f32.mrb[0].mxu0
        %v3392 = vpop.f32.mrb[0].mxu0
        %v3393 = vadd.f32 %v3232, %v3392
        %v3394 = vpop.f32.mrb[0].mxu0
        %3395 = vmatprep.mubr.bf16.mxu0 0
        %3396 = vmatmul.mubr.bf16.gmra.mrb[0].mxu0 %v2106
        %v3397 = vpop.f32.mrb[0].mxu0
        %v3398 = vadd.f32 %v3237, %v3397
        %v3399 = vpop.f32.mrb[0].mxu0
        %v3400 = vpop.f32.mrb[0].mxu0
        %v3401 = vadd.f32 %v3240, %v3400
        %v3402 = vpop.f32.mrb[0].mxu0
        %3403 = vmatprep.mubr.bf16.mxu0 0
        %3404 = vmatmul.mubr.bf16.gmra.mrb[0].mxu0 %v2107
        %v3405 = vpop.f32.mrb[0].mxu0
        %v3406 = vadd.f32 %v3245, %v3405
        %v3407 = vpop.f32.mrb[0].mxu0
        %v3408 = vpop.f32.mrb[0].mxu0
        %v3409 = vadd.f32 %v3248, %v3408
        %v3410 = vpop.f32.mrb[0].mxu0
        %3411 = vmatprep.mubr.bf16.mxu0 0
        %3412 = vmatmul.mubr.bf16.gmra.mrb[0].mxu0 %v2108
        %v3413 = vpop.f32.mrb[0].mxu0
        %v3414 = vadd.f32 %v3253, %v3413
        %v3415 = vpop.f32.mrb[0].mxu0
        %v3416 = vpop.f32.mrb[0].mxu0
        %v3417 = vadd.f32 %v3256, %v3416
        %v3418 = vpop.f32.mrb[0].mxu0
        %3419 = vmatprep.mubr.bf16.mxu0 0
        %3420 = vmatmul.mubr.bf16.gmra.mrb[0].mxu0 %v2109
        %v3421 = vpop.f32.mrb[0].mxu0
        %v3422 = vadd.f32 %v3261, %v3421
        %v3423 = vpop.f32.mrb[0].mxu0
        %v3424 = vpop.f32.mrb[0].mxu0
        %v3425 = vadd.f32 %v3264, %v3424
        %v3426 = vpop.f32.mrb[0].mxu0
        %3427 = vmatprep.mubr.bf16.mxu0 0
        %3428 = vmatmul.mubr.bf16.gmra.mrb[0].mxu0 %v2110
        %v3429 = vpop.f32.mrb[0].mxu0
        %v3430 = vadd.f32 %v3269, %v3429
        %v3431 = vpop.f32.mrb[0].mxu0
        %v3432 = vpop.f32.mrb[0].mxu0
        %v3433 = vadd.f32 %v3272, %v3432
        %v3434 = vpop.f32.mrb[0].mxu0
        %3435 = vmatprep.mubr.bf16.mxu0 0
        %3436 = vmatmul.mubr.bf16.gmra.mrb[0].mxu0 %v2111
        %v3437 = vpop.f32.mrb[0].mxu0
        %v3438 = vadd.f32 %v3277, %v3437
        %v3439 = vpop.f32.mrb[0].mxu0
        %v3440 = vpop.f32.mrb[0].mxu0
        %v3441 = vadd.f32 %v3280, %v3440
        %v3442 = vpop.f32.mrb[0].mxu0
        %3443 = vmatprep.mubr.bf16.mxu0 0
        %3444 = vmatmul.mubr.bf16.gmra.mrb[0].mxu0 %v2112
        %v3445 = vpop.f32.mrb[0].mxu0
        %v3446 = vadd.f32 %v3285, %v3445
        %v3447 = vpop.f32.mrb[0].mxu0
        %v3448 = vpop.f32.mrb[0].mxu0
        %v3449 = vadd.f32 %v3288, %v3448
        %v3450 = vpop.f32.mrb[0].mxu0
        %3451 = vmatprep.mubr.bf16.mxu0 0
        %3452 = vmatmul.mubr.bf16.gmra.mrb[0].mxu0 %v2113
        %v3453 = vpop.f32.mrb[0].mxu0
        %v3454 = vadd.f32 %v3293, %v3453
        %v3455 = vpop.f32.mrb[0].mxu0
        %v3456 = vpop.f32.mrb[0].mxu0
        %v3457 = vadd.f32 %v3296, %v3456
        %v3458 = vpop.f32.mrb[0].mxu0
        %3459 = vmatprep.mubr.bf16.mxu0 0
        %3460 = vmatmul.mubr.bf16.gmra.mrb[0].mxu0 %v2114
        %v3461 = vpop.f32.mrb[0].mxu0
        %v3462 = vadd.f32 %v3301, %v3461
        %v3463 = vpop.f32.mrb[0].mxu0
        %v3464 = vpop.f32.mrb[0].mxu0
        %v3465 = vadd.f32 %v3304, %v3464
        %v3466 = vpop.f32.mrb[0].mxu0
        %3467 = vmatprep.mubr.bf16.mxu0 0
        %3468 = vmatmul.mubr.bf16.gmra.mrb[0].mxu0 %v2115
        %v3469 = vpop.f32.mrb[0].mxu0
        %v3470 = vadd.f32 %v3309, %v3469
        %v3471 = vpop.f32.mrb[0].mxu0
        %v3472 = vpop.f32.mrb[0].mxu0
        %v3473 = vadd.f32 %v3312, %v3472
        %v3474 = vpop.f32.mrb[0].mxu0
        %3475 = vmatprep.mubr.bf16.mxu0 0
        %3476 = vmatmul.mubr.bf16.gmra.mrb[0].mxu0 %v2116
        %v3477 = vpop.f32.mrb[0].mxu0
        %v3478 = vadd.f32 %v3317, %v3477
        %v3479 = vpop.f32.mrb[0].mxu0
        %v3480 = vpop.f32.mrb[0].mxu0
        %v3481 = vadd.f32 %v3320, %v3480
        %v3482 = vpop.f32.mrb[0].mxu0
        %3483 = vmatprep.mubr.bf16.mxu0 0
        %3484 = vmatmul.mubr.bf16.gmra.mrb[0].mxu0 %v2117
        %v3485 = vpop.f32.mrb[0].mxu0
        %v3486 = vadd.f32 %v3325, %v3485
        %v3487 = vpop.f32.mrb[0].mxu0
        %v3488 = vpop.f32.mrb[0].mxu0
        %v3489 = vadd.f32 %v3328, %v3488
        %v3490 = vpop.f32.mrb[0].mxu0
        %3491 = vmatprep.mubr.bf16.mxu0 0
        %3492 = vmatmul.mubr.bf16.gmra.mrb[0].mxu0 %v2118
        %v3493 = vpop.f32.mrb[0].mxu0
        %v3494 = vadd.f32 %v3333, %v3493
        %v3495 = vpop.f32.mrb[0].mxu0
        %v3496 = vpop.f32.mrb[0].mxu0
        %v3497 = vadd.f32 %v3336, %v3496
        %v3498 = vpop.f32.mrb[0].mxu0
        %3499 = vmatprep.mubr.bf16.mxu0 0
        %3500 = vmatmul.mubr.bf16.gmra.mrb[0].mxu0 %v2119
        %v3501 = vpop.f32.mrb[0].mxu0
        %v3502 = vadd.f32 %v3341, %v3501
        %v3503 = vpop.f32.mrb[0].mxu0
        %v3504 = vpop.f32.mrb[0].mxu0
        %v3505 = vadd.f32 %v3344, %v3504
        %v3506 = vpop.f32.mrb[0].mxu0
        %3507 = vdwg.mxu0
        %v3508 = vmax.f32 %v3382, 0.0
        %v3509 = vmax.f32 %v3385, 0.0
        %v3510 = vmax.f32 %v3390, 0.0
        %v3511 = vmax.f32 %v3393, 0.0
        %v3512 = vmax.f32 %v3398, 0.0
        %v3513 = vmax.f32 %v3401, 0.0
        %v3514 = vmax.f32 %v3406, 0.0
        %v3515 = vmax.f32 %v3409, 0.0
        %v3516 = vmax.f32 %v3414, 0.0
        %v3517 = vmax.f32 %v3417, 0.0
        %v3518 = vmax.f32 %v3422, 0.0
        %v3519 = vmax.f32 %v3425, 0.0
        %v3520 = vmax.f32 %v3430, 0.0
        %v3521 = vmax.f32 %v3433, 0.0
        %v3522 = vmax.f32 %v3438, 0.0
        %v3523 = vmax.f32 %v3441, 0.0
        %v3524 = vmax.f32 %v3446, 0.0
        %v3525 = vmax.f32 %v3449, 0.0
        %v3526 = vmax.f32 %v3454, 0.0
        %v3527 = vmax.f32 %v3457, 0.0
        %v3528 = vmax.f32 %v3462, 0.0
        %v3529 = vmax.f32 %v3465, 0.0
        %v3530 = vmax.f32 %v3470, 0.0
        %v3531 = vmax.f32 %v3473, 0.0
        %v3532 = vmax.f32 %v3478, 0.0
        %v3533 = vmax.f32 %v3481, 0.0
        %v3534 = vmax.f32 %v3486, 0.0
        %v3535 = vmax.f32 %v3489, 0.0
        %v3536 = vmax.f32 %v3494, 0.0
        %v3537 = vmax.f32 %v3497, 0.0
        %v3538 = vmax.f32 %v3502, 0.0
        %v3539 = vmax.f32 %v3505, 0.0
        %3540 = vst.msk [vmem:[%s217] sm:$0xff] %vm311, %v3508
        %3541 = vst.msk [vmem:[%s217 + $0x8] sm:$0xff] %vm311, %v3509
        %3542 = vst.msk [vmem:[%s217 + $0x10] sm:$0xff] %vm311, %v3510
        %3543 = vst.msk [vmem:[%s217 + $0x18] sm:$0xff] %vm311, %v3511
        %3544 = vst.msk [vmem:[%s217 + $0x20] sm:$0xff] %vm311, %v3512
        %3545 = vst.msk [vmem:[%s217 + $0x28] sm:$0xff] %vm311, %v3513
        %3546 = vst.msk [vmem:[%s217 + $0x30] sm:$0xff] %vm311, %v3514
        %3547 = vst.msk [vmem:[%s217 + $0x38] sm:$0xff] %vm311, %v3515
        %3548 = vst.msk [vmem:[%s217 + $0x40] sm:$0xff] %vm311, %v3516
        %3549 = vst.msk [vmem:[%s217 + $0x48] sm:$0xff] %vm311, %v3517
        %3550 = vst.msk [vmem:[%s217 + $0x50] sm:$0xff] %vm311, %v3518
        %3551 = vst.msk [vmem:[%s217 + $0x58] sm:$0xff] %vm311, %v3519
        %3552 = vst.msk [vmem:[%s217 + $0x60] sm:$0xff] %vm311, %v3520
        %3553 = vst.msk [vmem:[%s217 + $0x68] sm:$0xff] %vm311, %v3521
        %3554 = vst.msk [vmem:[%s217 + $0x70] sm:$0xff] %vm311, %v3522
        %3555 = vst.msk [vmem:[%s217 + $0x78] sm:$0xff] %vm311, %v3523
        %3556 = vst.msk [vmem:[%s217 + $0x80] sm:$0xff] %vm311, %v3524
        %3557 = vst.msk [vmem:[%s217 + $0x88] sm:$0xff] %vm311, %v3525
        %3558 = vst.msk [vmem:[%s217 + $0x90] sm:$0xff] %vm311, %v3526
        %3559 = vst.msk [vmem:[%s217 + $0x98] sm:$0xff] %vm311, %v3527
        %3560 = vst.msk [vmem:[%s217 + $0xa0] sm:$0xff] %vm311, %v3528
        %3561 = vst.msk [vmem:[%s217 + $0xa8] sm:$0xff] %vm311, %v3529
        %3562 = vst.msk [vmem:[%s217 + $0xb0] sm:$0xff] %vm311, %v3530
        %3563 = vst.msk [vmem:[%s217 + $0xb8] sm:$0xff] %vm311, %v3531
        %3564 = vst.msk [vmem:[%s217 + $0xc0] sm:$0xff] %vm311, %v3532
        %3565 = vst.msk [vmem:[%s217 + $0xc8] sm:$0xff] %vm311, %v3533
        %3566 = vst.msk [vmem:[%s217 + $0xd0] sm:$0xff] %vm311, %v3534
        %3567 = vst.msk [vmem:[%s217 + $0xd8] sm:$0xff] %vm311, %v3535
        %3568 = vst.msk [vmem:[%s217 + $0xe0] sm:$0xff] %vm311, %v3536
        %3569 = vst.msk [vmem:[%s217 + $0xe8] sm:$0xff] %vm311, %v3537
        %3570 = vst.msk [vmem:[%s217 + $0xf0] sm:$0xff] %vm311, %v3538
        %3571 = vst.msk [vmem:[%s217 + $0xf8] sm:$0xff] %vm311, %v3539
        %s3572 = sand.u32 %s137, 1
        %s3573 = scalar_lea.sflag [#allocation4], %s3572
        %s3574 = sand.u32 %s137, 1
        %s3575 = smul.addr %s3574, 256
        %s3576 = scalar_lea.vmem [#allocation3], %s3575
        // Predicated region
        $region41: #{tpu_custom_call.1} parent=39 // pred_check
          %p3577 = pneg %p147
        $region42: #{tpu_custom_call.1} parent=39 // pred_check_branch
          %3579 = sbr.rel (%p3577) target = $region44
        $region43: #{tpu_custom_call.1} parent=39 // pred_region
          %s3581 = ssub.s32 4096, 4096
          %3582 = vsyncadd %s3573, %s3581
          %s3583 = smul.addr %s19, 32
          %s3584 = smul.addr %s3583, 128
          %s3585 = scalar_lea.hbm %s5, %s3584
          %s3586 = sshll.u32 %s3576, 4
          %s3587 = int_to_ptr.vmem [resolvable:$true] %s3586
          %3592 = dma.vmem_to_hbm [thread:$0]  %s3587, 4096, %s3585, %s3573, 128, 128, 8
        $region44: #{tpu_custom_call.1} parent=39 // pred_fallthru
          _
      $region40: #{tpu_custom_call.1} parent=5 // pred_fallthru
        _
      %p3593 = scmp.le.s32.totalorder 2, %s14
      // Predicated region
      $region45: #{tpu_custom_call.1} parent=5 // pred_check
        %p3594 = pneg %p3593
      $region46: #{tpu_custom_call.1} parent=5 // pred_check_branch
        %3596 = sbr.rel (%p3594) target = $region48
      $region47: #{tpu_custom_call.1} parent=5 // pred_region
        %s3597 = ssub.s32 %s14, 2
        // Predicated region
        $region49: #{tpu_custom_call.1} parent=47 // pred_check
          %p3598 = pneg %p153
        $region50: #{tpu_custom_call.1} parent=47 // pred_check_branch
          %3600 = sbr.rel (%p3598) target = $region52
        $region51: #{tpu_custom_call.1} parent=47 // pred_region
          %s3601 = sand.u32 %s138, 1
          %s3602 = scalar_lea.sflag [#allocation4], %s3601
          %s3603 = sand.u32 %s138, 1
          %s3604 = smul.addr %s3603, 256
          %s3605 = scalar_lea.vmem [#allocation3], %s3604
          %3606 = dma.done %s3602, 4096
        $region52: #{tpu_custom_call.1} parent=47 // pred_fallthru
          _
      $region48: #{tpu_custom_call.1} parent=5 // pred_fallthru
        _
    $region6: #{tpu_custom_call.1} parent=1 // loop_footer
      %s18 = sadd.s32 1, %s14
    $region7: #{tpu_custom_call.1} parent=1 // loop_footer_branch
      %13 = sbr.rel target = $region3
    $region8: #{tpu_custom_call.1} parent=1 // loop_exit
      _
    %3607 = vsyncpa [#allocation4], 1
    %s3608 = scalar_lea.sflag [#allocation4], 1
    %3609 = vsyncpa %s3608, 1

</llo_original>
